<compile_context>
chip_gen: v7x
topology: tpu7x:2x2x1
jax: 0.10.0
libtpu: 0.0.40
codegen_flags: <defaults>
</compile_context>

<pallas_src>
import numpy as np
import jax
import jax.numpy as jnp
from jax.experimental import pallas as pl
from jax.experimental.pallas import tpu as pltpu


VOCAB_TILE = 512  # lane-dense vocab tile used for both the encoder K-tiling
                  # and the decoder N-tiling (multiple of 128).


def _round_up(x, m):
    return ((x + m - 1) // m) * m


def _vmem_budget_bytes():
    # Generation-aware scoped-VMEM budget: 3/4 of physical capacity
    # (v5e/v6e: 96 MiB, v7x: 48 MiB per core).  Falls back to a v7x-safe value.
    try:
        cap = int(pltpu.get_tpu_info().vmem_capacity_bytes)
    except Exception:
        cap = 64 * 1024 * 1024
    return (cap * 3) // 4


# ----------------------------------------------------------------------------
# Kernel 1: encoder for one (batch tile, vocab tile) grid point.
#   acc    += x[:, vtile] @ W1[vtile, :]            (K-tiled over vocab)
#   on last vocab tile:
#     h      = ReLU(acc + b1)
#     h      = ReLU(h @ W2 + b2)                    (Dropout p=0 -> identity)
#     long_z = tanh(h @ W3 + b3)
#     z      = tanh(long_z @ W4 + b4)
# Weights are bf16 (MXU inputs); accumulation & elementwise math are f32.
# ----------------------------------------------------------------------------
def smash_encoder_kernel(x_ref, w1_ref, b1_ref, w2_ref, b2_ref,
                         w3_ref, b3_ref, w4_ref, b4_ref,
                         long_z_ref, z_ref, acc_ref):
    v = pl.program_id(1)

    @pl.when(v == 0)
    def _():
        acc_ref[...] = jnp.zeros_like(acc_ref)

    acc_ref[...] += jnp.dot(x_ref[...], w1_ref[...],
                            preferred_element_type=jnp.float32)

    @pl.when(v == pl.num_programs(1) - 1)
    def _():
        h = jnp.maximum(acc_ref[...] + b1_ref[...], 0.0)
        h = jnp.dot(h.astype(jnp.bfloat16), w2_ref[...],
                    preferred_element_type=jnp.float32) + b2_ref[...]
        h = jnp.maximum(h, 0.0)
        long_z = jnp.tanh(
            jnp.dot(h.astype(jnp.bfloat16), w3_ref[...],
                    preferred_element_type=jnp.float32) + b3_ref[...])
        z = jnp.tanh(
            jnp.dot(long_z.astype(jnp.bfloat16), w4_ref[...],
                    preferred_element_type=jnp.float32) + b4_ref[...])
        long_z_ref[...] = long_z.astype(long_z_ref.dtype)
        z_ref[...] = z.astype(z_ref.dtype)


# ----------------------------------------------------------------------------
# Kernel 2: decoder + log-softmax with an online logsumexp over vocab tiles.
# Grid = (batch_tiles, 2, vocab_tiles):
#   phase p == 0: logits_v = z @ Wd[:, vtile] + bd[vtile]; update running
#                 max m and sum-exp l in (TB, 1) f32 scratch.
#   phase p == 1: recompute logits_v (K = 128, trivial) and write
#                 logp_v = logits_v - (m + log l).
# During phase 0 the output block index is parked at tile 0 and never written;
# every output block is fully written in phase 1 before it is flushed.
# ----------------------------------------------------------------------------
def smash_decoder_kernel(z_ref, wd_ref, bd_ref, logp_ref, m_ref, l_ref):
    p = pl.program_id(1)
    v = pl.program_id(2)

    logits = jnp.dot(z_ref[...].astype(jnp.bfloat16), wd_ref[...],
                     preferred_element_type=jnp.float32) + bd_ref[...]

    @pl.when((p == 0) & (v == 0))
    def _():
        m_ref[...] = jnp.full(m_ref.shape, -jnp.inf, dtype=m_ref.dtype)
        l_ref[...] = jnp.zeros(l_ref.shape, dtype=l_ref.dtype)

    @pl.when(p == 0)
    def _():
        m_prev = m_ref[...]
        m_new = jnp.maximum(m_prev, jnp.max(logits, axis=1, keepdims=True))
        l_ref[...] = (l_ref[...] * jnp.exp(m_prev - m_new)
                      + jnp.sum(jnp.exp(logits - m_new), axis=1, keepdims=True))
        m_ref[...] = m_new

    @pl.when(p == 1)
    def _():
        lse = m_ref[...] + jnp.log(l_ref[...])
        logp_ref[...] = (logits - lse).astype(logp_ref.dtype)


# ----------------------------------------------------------------------------
# Parameter construction (deterministic, matches nn.Linear shapes transposed)
# ----------------------------------------------------------------------------
def init_params(key, vocab_size, hidden_dim, long_bit_code, latent_dim):
    def linear(k, fan_in, fan_out):
        k1, k2 = jax.random.split(k)
        bound = 1.0 / np.sqrt(fan_in)
        w = jax.random.uniform(k1, (fan_in, fan_out), jnp.float32, -bound, bound)
        b = jax.random.uniform(k2, (1, fan_out), jnp.float32, -bound, bound)
        return w, b

    ks = jax.random.split(key, 5)
    w1, b1 = linear(ks[0], vocab_size, hidden_dim)      # encoder[0]
    w2, b2 = linear(ks[1], hidden_dim, hidden_dim)      # encoder[2]
    w3, b3 = linear(ks[2], hidden_dim, long_bit_code)   # encoder_long_bit_code
    w4, b4 = linear(ks[3], long_bit_code, latent_dim)   # longz_to_z
    wd, bd = linear(ks[4], latent_dim, vocab_size)      # decoder
    return (w1, b1, w2, b2, w3, b3, w4, b4, wd, bd)


def prep_params(params, vocab_tile=VOCAB_TILE):
    """Zero-pad hidden/long-bit/latent dims to multiples of 128 and vocab to a
    multiple of `vocab_tile` (lane-dense); cast weights to bf16 (MXU inputs),
    keep biases f32.  Padded decoder-bias entries are -1e30 so padded logits
    never win the max or contribute to the logsumexp; all other padding is
    zero so results are unchanged after slicing back."""
    (w1, b1, w2, b2, w3, b3, w4, b4, wd, bd) = params
    V, H = w1.shape
    LB, LAT = w3.shape[1], w4.shape[1]
    Vp = _round_up(V, vocab_tile)
    Hp, LBp, LATp = _round_up(H, 128), _round_up(LB, 128), _round_up(LAT, 128)

    def pad2(a, r, c, fill=0.0):
        return jnp.pad(a, ((0, r - a.shape[0]), (0, c - a.shape[1])),
                       constant_values=fill)

    bf16 = lambda a: a.astype(jnp.bfloat16)
    padded = (
        bf16(pad2(w1, Vp, Hp)),    pad2(b1, 1, Hp),
        bf16(pad2(w2, Hp, Hp)),    pad2(b2, 1, Hp),
        bf16(pad2(w3, Hp, LBp)),   pad2(b3, 1, LBp),
        bf16(pad2(w4, LBp, LATp)), pad2(b4, 1, LATp),
        bf16(pad2(wd, LATp, Vp)),  pad2(bd, 1, Vp, fill=-1e30),
    )
    dims = dict(vocab=V, vocab_p=Vp, hidden_p=Hp,
                long_bit=LB, long_bit_p=LBp,
                latent=LAT, latent_p=LATp, vocab_tile=vocab_tile)
    return padded, dims


# ----------------------------------------------------------------------------
# Two vocab-tiled pallas_calls over ALL rows (clean + noise fused by caller).
# VMEM usage is independent of the vocabulary size.
# ----------------------------------------------------------------------------
def run_smash_mlp(x, padded_params, dims, logp_dtype=jnp.float32):
    (w1, b1, w2, b2, w3, b3, w4, b4, wd, bd) = padded_params
    rows, vocab = x.shape
    assert vocab == dims["vocab"]
    Vp, Hp = dims["vocab_p"], dims["hidden_p"]
    LBp, LATp = dims["long_bit_p"], dims["latent_p"]
    TV = dims["vocab_tile"]
    NV = Vp // TV

    # Batch tile: 256 fills the 256-wide MXU M dimension on v6e/v7x and halves
    # the number of grid steps; small batches round up to a bf16-sublane
    # friendly multiple of 16.  With vocab tiling the per-step footprint is a
    # few MiB, so TB=256 is safe on all generations (v5e just runs 2 MXU
    # passes in M).
    if rows >= 256:
        TB = 256
    elif rows >= 128:
        TB = 128
    else:
        TB = _round_up(max(rows, 8), 16)
    rows_pad = _round_up(rows, TB)

    x = jnp.pad(x, ((0, rows_pad - rows), (0, Vp - vocab))).astype(jnp.bfloat16)

    vmem = _vmem_budget_bytes()
    const2 = lambda i, v: (0, 0)

    # ---- Pass 1: encoder (K-tiled over vocab; W2..W4 VMEM-resident) ---------
    # NOTE: the constant-index weights total ~2.5 MiB after vocab tiling, so
    # pipeline_mode=pl.Buffered(1) would save little and is omitted.
    long_z_p, z_p = pl.pallas_call(
        smash_encoder_kernel,
        out_shape=(
            jax.ShapeDtypeStruct((rows_pad, LBp), jnp.float32),    # long_z
            jax.ShapeDtypeStruct((rows_pad, LATp), jnp.float32),   # z
        ),
        grid=(rows_pad // TB, NV),
        in_specs=[
            pl.BlockSpec((TB, TV), lambda i, v: (i, v)),     # x tile
            pl.BlockSpec((TV, Hp), lambda i, v: (v, 0)),     # W1 tile (streamed)
            pl.BlockSpec((1, Hp), const2),                   # b1
            pl.BlockSpec((Hp, Hp), const2),                  # W2
            pl.BlockSpec((1, Hp), const2),                   # b2
            pl.BlockSpec((Hp, LBp), const2),                 # W3
            pl.BlockSpec((1, LBp), const2),                  # b3
            pl.BlockSpec((LBp, LATp), const2),               # W4
            pl.BlockSpec((1, LATp), const2),                 # b4
        ],
        out_specs=(
            pl.BlockSpec((TB, LBp), lambda i, v: (i, 0)),
            pl.BlockSpec((TB, LATp), lambda i, v: (i, 0)),
        ),
        scratch_shapes=[pltpu.VMEM((TB, Hp), jnp.float32)],
        compiler_params=pltpu.CompilerParams(
            dimension_semantics=("parallel", "arbitrary"),
            vmem_limit_bytes=vmem),
    )(x, w1, b1, w2, b2, w3, b3, w4, b4)

    # ---- Pass 2: decoder + online log-softmax (N-tiled over vocab) ----------
    logp_p = pl.pallas_call(
        smash_decoder_kernel,
        out_shape=jax.ShapeDtypeStruct((rows_pad, Vp), logp_dtype),
        grid=(rows_pad // TB, 2, NV),
        in_specs=[
            pl.BlockSpec((TB, LATp), lambda i, p, v: (i, 0)),  # z (resident)
            pl.BlockSpec((LATp, TV), lambda i, p, v: (0, v)),  # Wd tile
            pl.BlockSpec((1, TV), lambda i, p, v: (0, v)),     # bd tile
        ],
        # Phase 0 (stats) parks the output block at tile 0 and never writes it;
        # phase 1 writes every tile before it is flushed to HBM.
        out_specs=pl.BlockSpec((TB, TV), lambda i, p, v: (i, v * p)),
        scratch_shapes=[pltpu.VMEM((TB, 1), jnp.float32),      # running max
                        pltpu.VMEM((TB, 1), jnp.float32)],     # running sum-exp
        compiler_params=pltpu.CompilerParams(
            dimension_semantics=("parallel", "arbitrary", "arbitrary"),
            vmem_limit_bytes=vmem),
    )(z_p, wd, bd)

    # Slice padded rows/columns back to the logical shapes.
    long_z = long_z_p[:rows, :dims["long_bit"]]
    z = z_p[:rows, :dims["latent"]]
    logp = logp_p[:rows, :vocab].astype(jnp.float32)
    return long_z, z, logp


# ----------------------------------------------------------------------------
# add_noise (glue, plain JAX RNG -- deterministic with fixed key)
# TODO(synk): generate the Bernoulli noise inside a Pallas kernel with
# pltpu.prng_seed / pltpu.prng_random_bits to avoid materializing the
# (n_sample*B, vocab) noise matrix in HBM for large vocabularies.
# ----------------------------------------------------------------------------
def add_noise(key, doc_mat, sigma, n_sample):
    B, V = doc_mat.shape
    k1, k2 = jax.random.split(key)
    x = jnp.abs(jax.random.normal(k1, (n_sample, B, V)) * (1.0 - sigma))
    x = jnp.where(x > 1.0, 1.0, x)
    noise_matrix = jax.random.bernoulli(k2, p=x).astype(jnp.float32)
    return jnp.reshape(noise_matrix * doc_mat[None, :, :], (-1, V))


# ----------------------------------------------------------------------------
# Full SMASH forward (mirrors SMASH.forward)
# ----------------------------------------------------------------------------
def smash_forward(padded_params, dims, em, em_time_count,
                  document_mat, idxs, epoch, loss_change_term, time_max,
                  em_alpha, sigma, noise_key, n_sample=3):
    document_mat_noise = add_noise(noise_key, document_mat, sigma, n_sample)
    B = document_mat.shape[0]

    # Fused clean + noise batch: weights are loaded once per vocab sweep.
    x_all = jnp.concatenate([document_mat, document_mat_noise], axis=0)
    long_z_all, z_all, logp_all = run_smash_mlp(x_all, padded_params, dims)

    long_z_e, noise_long_z_e = long_z_all[:B], long_z_all[B:]
    z, z_noise = z_all[:B], z_all[B:]
    prob_w, noise_prob_w = logp_all[:B], logp_all[B:]

    # Exemplar memory bookkeeping (glue: data-dependent scatter; stays in plain
    # JAX outside the Pallas kernels).
    em_time_count = em_time_count - 1.0
    if epoch < 10:
        # ExemplarMemory_warm_up: em[idx] = sign(z); em_time_count[idx] = time_max
        em = em.at[idxs].set(jnp.sign(z))
        em_time_count = em_time_count.at[idxs].set(time_max)
    else:
        # ExemplarMemory: only the time counts are refreshed in forward
        em_time_count = em_time_count.at[idxs].set(time_max)

    # Device-side fixed-size compaction of em[em_time_count > threshold]:
    # no host sync on the forward path.  The first `n_valid` rows of
    # em_out_full are the selected exemplars; trailing rows are padding.
    threshold = (1.0 - loss_change_term) * (1.0 - em_alpha) * time_max
    mask = em_time_count > threshold
    sel = jnp.nonzero(mask, size=em.shape[0], fill_value=0)[0]
    em_out_full = em[sel]
    n_valid = jnp.sum(mask)

    return (prob_w, noise_prob_w, z, z_noise, long_z_e, noise_long_z_e,
            em_out_full, n_valid, em, em_time_count)


# ----------------------------------------------------------------------------
# Reference (pure jnp, f32) for sanity checking the kernels
# ----------------------------------------------------------------------------
def mlp_reference(x, params):
    (w1, b1, w2, b2, w3, b3, w4, b4, wd, bd) = params
    h = jnp.maximum(x @ w1 + b1, 0.0)
    h = jnp.maximum(h @ w2 + b2, 0.0)
    long_z = jnp.tanh(h @ w3 + b3)
    z = jnp.tanh(long_z @ w4 + b4)
    logits = z @ wd + bd
    logp = logits - jax.scipy.special.logsumexp(logits, axis=1, keepdims=True)
    return long_z, z, logp


if __name__ == "__main__":
    # Small, module-consistent shapes.
    vocab_size = 64        # vocabSize
    latent_dim = 16        # latentDim
    hidden_dim = 1000      # fixed in SMASH.__init__ (padded to 1024 internally)
    long_bit_code = 128    # fixed in SMASH.__init__
    em_length = 8
    time_max = 5.0
    em_alpha = 0.1
    sigma = 0.3
    batch = 2
    n_sample = 3

    key = jax.random.PRNGKey(0)
    k_params, k_doc, k_noise = jax.random.split(key, 3)

    params = init_params(k_params, vocab_size, hidden_dim, long_bit_code,
                         latent_dim)
    padded_params, dims = prep_params(params)

    # Synthetic bag-of-words-like document matrix.
    document_mat = jax.random.uniform(k_doc, (batch, vocab_size), jnp.float32)
    idxs = jnp.array([1, 4], dtype=jnp.int32)

    em = jnp.zeros((em_length, latent_dim), jnp.float32)
    em_time_count = jnp.ones((em_length,), jnp.float32) * time_max

    outs = smash_forward(padded_params, dims, em, em_time_count,
                         document_mat, idxs, epoch=1, loss_change_term=0.5,
                         time_max=time_max, em_alpha=em_alpha, sigma=sigma,
                         noise_key=k_noise, n_sample=n_sample)
    (prob_w, noise_prob_w, z, z_noise, long_z_e, noise_long_z_e,
     em_out_full, n_valid, em_new, em_tc_new) = outs
    jax.block_until_ready(outs)

    # Dynamic-shape exemplar selection (host-side only for verification).
    em_out = em_out_full[: int(n_valid)]

    # Shape checks (mirror PyTorch semantics).
    assert prob_w.shape == (batch, vocab_size)
    assert noise_prob_w.shape == (n_sample * batch, vocab_size)
    assert z.shape == (batch, latent_dim)
    assert z_noise.shape == (n_sample * batch, latent_dim)
    assert long_z_e.shape == (batch, long_bit_code)
    assert noise_long_z_e.shape == (n_sample * batch, long_bit_code)
    assert em_out.shape[1] == latent_dim

    # Numeric check of the Pallas MLP against a pure-JAX f32 reference.
    # (bf16 MXU inputs with f32 accumulation -> loosened tolerance.)
    ref_long_z, ref_z, ref_logp = mlp_reference(document_mat, params)
    np.testing.assert_allclose(np.asarray(long_z_e), np.asarray(ref_long_z),
                               rtol=5e-2, atol=5e-2)
    np.testing.assert_allclose(np.asarray(z), np.asarray(ref_z),
                               rtol=5e-2, atol=5e-2)
    np.testing.assert_allclose(np.asarray(prob_w), np.asarray(ref_logp),
                               rtol=5e-2, atol=5e-2)

    print("KERNEL_OK")
</pallas_src>

<mosaic_0001>
module attributes {stable_mosaic.version = 11 : i64} {
  func.func @smash_encoder_kernel(%arg0: i32, %arg1: i32, %arg2: memref<16x512xbf16, #tpu.memory_space<vmem>>, %arg3: memref<512x1024xbf16, #tpu.memory_space<vmem>>, %arg4: memref<1x1024xf32, #tpu.memory_space<vmem>>, %arg5: memref<1024x1024xbf16, #tpu.memory_space<vmem>>, %arg6: memref<1x1024xf32, #tpu.memory_space<vmem>>, %arg7: memref<1024x128xbf16, #tpu.memory_space<vmem>>, %arg8: memref<1x128xf32, #tpu.memory_space<vmem>>, %arg9: memref<128x128xbf16, #tpu.memory_space<vmem>>, %arg10: memref<1x128xf32, #tpu.memory_space<vmem>>, %arg11: memref<16x128xf32, #tpu.memory_space<vmem>>, %arg12: memref<16x128xf32, #tpu.memory_space<vmem>>, %arg13: memref<16x1024xf32, #tpu.memory_space<vmem>>) attributes {dimension_semantics = [#tpu.dimension_semantics<parallel>, #tpu.dimension_semantics<arbitrary>], iteration_bounds = array<i64: 1, 1>, scalar_prefetch = 0 : i64, scratch_operands = 1 : i64, tpu.core_type = #tpu.core_type<tc>, window_params = [{transform_indices = @transform_0, window_bounds = array<i64: 16, 512>}, {transform_indices = @transform_1, window_bounds = array<i64: 512, 1024>}, {pipeline_mode = #tpu.pipeline_mode<synchronous>, transform_indices = @transform_2, window_bounds = array<i64: 1, 1024>}, {pipeline_mode = #tpu.pipeline_mode<synchronous>, transform_indices = @transform_3, window_bounds = array<i64: 1024, 1024>}, {pipeline_mode = #tpu.pipeline_mode<synchronous>, transform_indices = @transform_4, window_bounds = array<i64: 1, 1024>}, {pipeline_mode = #tpu.pipeline_mode<synchronous>, transform_indices = @transform_5, window_bounds = array<i64: 1024, 128>}, {pipeline_mode = #tpu.pipeline_mode<synchronous>, transform_indices = @transform_6, window_bounds = array<i64: 1, 128>}, {pipeline_mode = #tpu.pipeline_mode<synchronous>, transform_indices = @transform_7, window_bounds = array<i64: 128, 128>}, {pipeline_mode = #tpu.pipeline_mode<synchronous>, transform_indices = @transform_8, window_bounds = array<i64: 1, 128>}, {transform_indices = @transform_9, window_bounds = array<i64: 16, 128>}, {transform_indices = @transform_10, window_bounds = array<i64: 16, 128>}]} {
    %c0_i32 = arith.constant 0 : i32
    %0 = arith.cmpi eq, %arg1, %c0_i32 : i32
    %1 = arith.extui %0 : i1 to i32
    %c0_i32_0 = arith.constant 0 : i32
    %2 = arith.cmpi ne, %1, %c0_i32_0 : i32
    scf.if %2 {
      %cst_10 = arith.constant 0.000000e+00 : f32
      %12 = vector.broadcast %cst_10 : f32 to vector<16x1024xf32>
      %c0_11 = arith.constant 0 : index
      %c0_12 = arith.constant 0 : index
      %13 = vector.load %arg13[%c0_11, %c0_12] : memref<16x1024xf32, #tpu.memory_space<vmem>>, vector<16x1024xf32>
      tpu.vector_store %arg13[%c0_11, %c0_12], %12 {strides = array<i32>} : memref<16x1024xf32, #tpu.memory_space<vmem>>, vector<16x1024xf32>,
    } else {
    }
    %c0 = arith.constant 0 : index
    %c0_1 = arith.constant 0 : index
    %3 = vector.load %arg13[%c0, %c0_1] : memref<16x1024xf32, #tpu.memory_space<vmem>>, vector<16x1024xf32>
    %c0_2 = arith.constant 0 : index
    %c0_3 = arith.constant 0 : index
    %4 = vector.load %arg2[%c0_2, %c0_3] : memref<16x512xbf16, #tpu.memory_space<vmem>>, vector<16x512xbf16>
    %c0_4 = arith.constant 0 : index
    %c0_5 = arith.constant 0 : index
    %5 = vector.load %arg3[%c0_4, %c0_5] : memref<512x1024xbf16, #tpu.memory_space<vmem>>, vector<512x1024xbf16>
    %cst = arith.constant dense<0.000000e+00> : vector<16x1024xf32>
    %6 = tpu.matmul %4, %5, %cst {dimension_numbers = #tpu.dot_dimension_numbers<[1], [0], [0], [1], [0, 0, 1, 1], [], []>} : vector<16x512xbf16>, vector<512x1024xbf16>, vector<16x1024xf32> -> vector<16x1024xf32>
    %7 = arith.addf %3, %6 : vector<16x1024xf32>
    %c0_6 = arith.constant 0 : index
    %c0_7 = arith.constant 0 : index
    %8 = vector.load %arg13[%c0_6, %c0_7] : memref<16x1024xf32, #tpu.memory_space<vmem>>, vector<16x1024xf32>
    tpu.vector_store %arg13[%c0_6, %c0_7], %7 {strides = array<i32>} : memref<16x1024xf32, #tpu.memory_space<vmem>>, vector<16x1024xf32>,
    %c0_i32_8 = arith.constant 0 : i32
    %9 = arith.cmpi eq, %arg1, %c0_i32_8 : i32
    %10 = arith.extui %9 : i1 to i32
    %c0_i32_9 = arith.constant 0 : i32
    %11 = arith.cmpi ne, %10, %c0_i32_9 : i32
    scf.if %11 {
      %c0_10 = arith.constant 0 : index
      %c0_11 = arith.constant 0 : index
      %12 = vector.load %arg13[%c0_10, %c0_11] : memref<16x1024xf32, #tpu.memory_space<vmem>>, vector<16x1024xf32>
      %c0_12 = arith.constant 0 : index
      %c0_13 = arith.constant 0 : index
      %13 = vector.load %arg4[%c0_12, %c0_13] : memref<1x1024xf32, #tpu.memory_space<vmem>>, vector<1x1024xf32>
      %14 = vector.broadcast %13 : vector<1x1024xf32> to vector<16x1024xf32>
      %15 = arith.addf %12, %14 : vector<16x1024xf32>
      %cst_14 = arith.constant 0.000000e+00 : f32
      %16 = vector.broadcast %cst_14 : f32 to vector<16x1024xf32>
      %17 = arith.maximumf %15, %16 : vector<16x1024xf32>
      %18 = arith.truncf %17 : vector<16x1024xf32> to vector<16x1024xbf16>
      %c0_15 = arith.constant 0 : index
      %c0_16 = arith.constant 0 : index
      %19 = vector.load %arg5[%c0_15, %c0_16] : memref<1024x1024xbf16, #tpu.memory_space<vmem>>, vector<1024x1024xbf16>
      %cst_17 = arith.constant dense<0.000000e+00> : vector<16x1024xf32>
      %20 = tpu.matmul %18, %19, %cst_17 {dimension_numbers = #tpu.dot_dimension_numbers<[1], [0], [0], [1], [0, 0, 1, 1], [], []>} : vector<16x1024xbf16>, vector<1024x1024xbf16>, vector<16x1024xf32> -> vector<16x1024xf32>
      %c0_18 = arith.constant 0 : index
      %c0_19 = arith.constant 0 : index
      %21 = vector.load %arg6[%c0_18, %c0_19] : memref<1x1024xf32, #tpu.memory_space<vmem>>, vector<1x1024xf32>
      %22 = vector.broadcast %21 : vector<1x1024xf32> to vector<16x1024xf32>
      %23 = arith.addf %20, %22 : vector<16x1024xf32>
      %cst_20 = arith.constant 0.000000e+00 : f32
      %24 = vector.broadcast %cst_20 : f32 to vector<16x1024xf32>
      %25 = arith.maximumf %23, %24 : vector<16x1024xf32>
      %26 = arith.truncf %25 : vector<16x1024xf32> to vector<16x1024xbf16>
      %c0_21 = arith.constant 0 : index
      %c0_22 = arith.constant 0 : index
      %27 = vector.load %arg7[%c0_21, %c0_22] : memref<1024x128xbf16, #tpu.memory_space<vmem>>, vector<1024x128xbf16>
      %cst_23 = arith.constant dense<0.000000e+00> : vector<16x128xf32>
      %28 = tpu.matmul %26, %27, %cst_23 {dimension_numbers = #tpu.dot_dimension_numbers<[1], [0], [0], [1], [0, 0, 1, 1], [], []>} : vector<16x1024xbf16>, vector<1024x128xbf16>, vector<16x128xf32> -> vector<16x128xf32>
      %c0_24 = arith.constant 0 : index
      %c0_25 = arith.constant 0 : index
      %29 = vector.load %arg8[%c0_24, %c0_25] : memref<1x128xf32, #tpu.memory_space<vmem>>, vector<1x128xf32>
      %30 = vector.broadcast %29 : vector<1x128xf32> to vector<16x128xf32>
      %31 = arith.addf %28, %30 : vector<16x128xf32>
      %32 = math.tanh %31 : vector<16x128xf32>
      %33 = arith.truncf %32 : vector<16x128xf32> to vector<16x128xbf16>
      %c0_26 = arith.constant 0 : index
      %c0_27 = arith.constant 0 : index
      %34 = vector.load %arg9[%c0_26, %c0_27] : memref<128x128xbf16, #tpu.memory_space<vmem>>, vector<128x128xbf16>
      %cst_28 = arith.constant dense<0.000000e+00> : vector<16x128xf32>
      %35 = tpu.matmul %33, %34, %cst_28 {dimension_numbers = #tpu.dot_dimension_numbers<[1], [0], [0], [1], [0, 0, 1, 1], [], []>} : vector<16x128xbf16>, vector<128x128xbf16>, vector<16x128xf32> -> vector<16x128xf32>
      %c0_29 = arith.constant 0 : index
      %c0_30 = arith.constant 0 : index
      %36 = vector.load %arg10[%c0_29, %c0_30] : memref<1x128xf32, #tpu.memory_space<vmem>>, vector<1x128xf32>
      %37 = vector.broadcast %36 : vector<1x128xf32> to vector<16x128xf32>
      %38 = arith.addf %35, %37 : vector<16x128xf32>
      %39 = math.tanh %38 : vector<16x128xf32>
      %c0_31 = arith.constant 0 : index
      %c0_32 = arith.constant 0 : index
      %40 = vector.load %arg11[%c0_31, %c0_32] : memref<16x128xf32, #tpu.memory_space<vmem>>, vector<16x128xf32>
      tpu.vector_store %arg11[%c0_31, %c0_32], %32 {strides = array<i32>} : memref<16x128xf32, #tpu.memory_space<vmem>>, vector<16x128xf32>,
      %c0_33 = arith.constant 0 : index
      %c0_34 = arith.constant 0 : index
      %41 = vector.load %arg12[%c0_33, %c0_34] : memref<16x128xf32, #tpu.memory_space<vmem>>, vector<16x128xf32>
      tpu.vector_store %arg12[%c0_33, %c0_34], %39 {strides = array<i32>} : memref<16x128xf32, #tpu.memory_space<vmem>>, vector<16x128xf32>,
    } else {
    }
    return
  }
  func.func @transform_0(%arg0: i32, %arg1: i32) -> (i32, i32) {
    %c0_i32 = arith.constant 0 : i32
    return %arg0, %arg1 : i32, i32
  }
  func.func @transform_1(%arg0: i32, %arg1: i32) -> (i32, i32) {
    %c0_i32 = arith.constant 0 : i32
    %c0_i32_0 = arith.constant 0 : i32
    return %arg1, %c0_i32 : i32, i32
  }
  func.func @transform_2(%arg0: i32, %arg1: i32) -> (i32, i32) {
    %c0_i32 = arith.constant 0 : i32
    %c0_i32_0 = arith.constant 0 : i32
    %c0_i32_1 = arith.constant 0 : i32
    return %c0_i32, %c0_i32_0 : i32, i32
  }
  func.func @transform_3(%arg0: i32, %arg1: i32) -> (i32, i32) {
    %c0_i32 = arith.constant 0 : i32
    %c0_i32_0 = arith.constant 0 : i32
    %c0_i32_1 = arith.constant 0 : i32
    return %c0_i32, %c0_i32_0 : i32, i32
  }
  func.func @transform_4(%arg0: i32, %arg1: i32) -> (i32, i32) {
    %c0_i32 = arith.constant 0 : i32
    %c0_i32_0 = arith.constant 0 : i32
    %c0_i32_1 = arith.constant 0 : i32
    return %c0_i32, %c0_i32_0 : i32, i32
  }
  func.func @transform_5(%arg0: i32, %arg1: i32) -> (i32, i32) {
    %c0_i32 = arith.constant 0 : i32
    %c0_i32_0 = arith.constant 0 : i32
    %c0_i32_1 = arith.constant 0 : i32
    return %c0_i32, %c0_i32_0 : i32, i32
  }
  func.func @transform_6(%arg0: i32, %arg1: i32) -> (i32, i32) {
    %c0_i32 = arith.constant 0 : i32
    %c0_i32_0 = arith.constant 0 : i32
    %c0_i32_1 = arith.constant 0 : i32
    return %c0_i32, %c0_i32_0 : i32, i32
  }
  func.func @transform_7(%arg0: i32, %arg1: i32) -> (i32, i32) {
    %c0_i32 = arith.constant 0 : i32
    %c0_i32_0 = arith.constant 0 : i32
    %c0_i32_1 = arith.constant 0 : i32
    return %c0_i32, %c0_i32_0 : i32, i32
  }
  func.func @transform_8(%arg0: i32, %arg1: i32) -> (i32, i32) {
    %c0_i32 = arith.constant 0 : i32
    %c0_i32_0 = arith.constant 0 : i32
    %c0_i32_1 = arith.constant 0 : i32
    return %c0_i32, %c0_i32_0 : i32, i32
  }
  func.func @transform_9(%arg0: i32, %arg1: i32) -> (i32, i32) {
    %c0_i32 = arith.constant 0 : i32
    %c0_i32_0 = arith.constant 0 : i32
    return %arg0, %c0_i32 : i32, i32
  }
  func.func @transform_10(%arg0: i32, %arg1: i32) -> (i32, i32) {
    %c0_i32 = arith.constant 0 : i32
    %c0_i32_0 = arith.constant 0 : i32
    return %arg0, %c0_i32 : i32, i32
  }
}

</mosaic_0001>

<llo_original>
// kernel: tpu_custom_call.1
$region0: #{tpu_custom_call.1}
  #allocation0 [shape = 'u32[]', space=smem, size = 0x4, offset = 0x4, fixed_abs, tag = 'smem constant byte address 0x4 - core index']
  #allocation1 [shape = 'u32[144,128]{1,0:T(1,128)}', space=vmem, size = 0x12000, scoped, tag = 'internal scratch']
  #allocation2 [shape = 'f32[16,1024]{1,0:T(8,128)}', space=vmem, size = 0x10000, scoped, tag = 'scratch operand']
  %s0 = inlined_call_operand.hbm [shape: bf16[16,512], index: 0, kind: input, shape index: {}]
  %s1 = inlined_call_operand.hbm [shape: bf16[512,1024], index: 1, kind: input, shape index: {}]
  %s2 = inlined_call_operand.hbm [shape: f32[1,1024], index: 2, kind: input, shape index: {}]
  %s3 = inlined_call_operand.hbm [shape: bf16[1024,1024], index: 3, kind: input, shape index: {}]
  %s4 = inlined_call_operand.hbm [shape: f32[1,1024], index: 4, kind: input, shape index: {}]
  %s5 = inlined_call_operand.hbm [shape: bf16[1024,128], index: 5, kind: input, shape index: {}]
  %s6 = inlined_call_operand.hbm [shape: f32[1,128], index: 6, kind: input, shape index: {}]
  %s7 = inlined_call_operand.hbm [shape: bf16[128,128], index: 7, kind: input, shape index: {}]
  %s8 = inlined_call_operand.hbm [shape: f32[1,128], index: 8, kind: input, shape index: {}]
  %s9 = inlined_call_operand.hbm [shape: f32[16,128], index: 9, kind: output, shape index: {0}]
  %s10 = inlined_call_operand.hbm [shape: f32[16,128], index: 10, kind: output, shape index: {1}]
  %11 = xla_tuple %s9, %s10
  %s12 = sld [smem:[#allocation0]]
  $region98: #{tpu_custom_call.1} parent=0
    _
  %s14 = ssub.s32 1, %s12
  %s15 = scalar_select 0, %s14, %s12
  $region1: #{tpu_custom_call.1} parent=0
    #allocation3 [shape = 'u8[16384]{0}', space=vmem, size = 0x4000, scoped, tag = 'input window, operand 0, single buffered']
    #allocation4 [shape = 's32[1]{0}', space=sflag, size = 0x4, scoped, tag = 'scoped memory for tpu_custom_call.1']
    #allocation5 [shape = 's32[1]{0}', space=sflag, size = 0x4, scoped, tag = 'scoped memory for tpu_custom_call.1']
    #allocation6 [shape = 'u8[1048576]{0}', space=vmem, size = 0x100000, scoped, tag = 'input window, operand 1, single buffered']
    #allocation7 [shape = 's32[1]{0}', space=sflag, size = 0x4, scoped, tag = 'scoped memory for tpu_custom_call.1']
    #allocation8 [shape = 'u8[4096]{0}', space=vmem, size = 0x1000, scoped, tag = 'input window, operand 2, single buffered']
    #allocation9 [shape = 'u8[2097152]{0}', space=vmem, size = 0x200000, scoped, tag = 'input window, operand 3, single buffered']
    #allocation10 [shape = 's32[1]{0}', space=sflag, size = 0x4, scoped, tag = 'scoped memory for tpu_custom_call.1']
    #allocation11 [shape = 'u8[4096]{0}', space=vmem, size = 0x1000, scoped, tag = 'input window, operand 4, single buffered']
    #allocation12 [shape = 'u8[262144]{0}', space=vmem, size = 0x40000, scoped, tag = 'input window, operand 5, single buffered']
    #allocation13 [shape = 's32[1]{0}', space=sflag, size = 0x4, scoped, tag = 'scoped memory for tpu_custom_call.1']
    #allocation14 [shape = 'u8[512]{0}', space=vmem, size = 0x400, scoped, tag = 'input window, operand 6, single buffered']
    #allocation15 [shape = 'u8[32768]{0}', space=vmem, size = 0x8000, scoped, tag = 'input window, operand 7, single buffered']
    #allocation16 [shape = 's32[1]{0}', space=sflag, size = 0x4, scoped, tag = 'scoped memory for tpu_custom_call.1']
    #allocation17 [shape = 'u8[512]{0}', space=vmem, size = 0x400, scoped, tag = 'input window, operand 8, single buffered']
    #allocation18 [shape = 'u8[8192]{0}', space=vmem, size = 0x2000, scoped, tag = 'output window, operand 0, single buffered']
    #allocation19 [shape = 'u8[8192]{0}', space=vmem, size = 0x2000, scoped, tag = 'output window, operand 1, single buffered']
    #allocation20 [shape = 's32[1]{0}', space=sflag, size = 0x4, scoped, tag = 'scoped memory for tpu_custom_call.1']
    %16 = vsyncpa [#allocation4], 0
    %17 = vsyncpa [#allocation7], 0
    %18 = vsyncpa [#allocation10], 0
    %19 = vsyncpa [#allocation13], 0
    %20 = vsyncpa [#allocation16], 0
    %21 = vsyncpa [#allocation5], 0
    %22 = vsyncpa [#allocation20], 0
    // Predicated region
    $region2: #{tpu_custom_call.1} parent=1 // pred_check
      _
    $region3: #{tpu_custom_call.1} parent=1 // pred_check_branch
      %24 = sbr.rel (0) target = $region5
    $region4: #{tpu_custom_call.1} parent=1 // pred_region
      %s26 = ssub.s32 512, 512
      %27 = vsyncadd [#allocation4], %s26
      %s28 = sshll.u32 [#allocation3], 4
      %s29 = int_to_ptr.vmem [resolvable:$true] %s28
      %34 = dma.hbm_to_vmem [thread:$0]  %s0, 512, %s29, [#allocation4], 256, 256, 16
    $region5: #{tpu_custom_call.1} parent=1 // pred_fallthru
      _
    // Predicated region
    $region6: #{tpu_custom_call.1} parent=1 // pred_check
      _
    $region7: #{tpu_custom_call.1} parent=1 // pred_check_branch
      %36 = sbr.rel (0) target = $region9
    $region8: #{tpu_custom_call.1} parent=1 // pred_region
      %s38 = ssub.s32 32768, 32768
      %39 = vsyncadd [#allocation7], %s38
      %s40 = sshll.u32 [#allocation6], 4
      %s41 = int_to_ptr.vmem [resolvable:$true] %s40
      %46 = dma.hbm_to_vmem [thread:$0]  %s1, 32768, %s41, [#allocation7], 512, 512, 32
    $region9: #{tpu_custom_call.1} parent=1 // pred_fallthru
      _
    // Predicated region
    $region10: #{tpu_custom_call.1} parent=1 // pred_check
      _
    $region11: #{tpu_custom_call.1} parent=1 // pred_check_branch
      %48 = sbr.rel (0) target = $region13
    $region12: #{tpu_custom_call.1} parent=1 // pred_region
      %s50 = ssub.s32 128, 128
      %51 = vsyncadd [#allocation7], %s50
      %s53 = sshll.u32 [#allocation8], 4
      %s54 = int_to_ptr.vmem [resolvable:$true] %s53
      %56 = dma.hbm_to_vmem [thread:$0]  %s2, 128, %s54, [#allocation7]
    $region13: #{tpu_custom_call.1} parent=1 // pred_fallthru
      _
    // Predicated region
    $region14: #{tpu_custom_call.1} parent=1 // pred_check
      _
    $region15: #{tpu_custom_call.1} parent=1 // pred_check_branch
      %58 = sbr.rel (0) target = $region17
    $region16: #{tpu_custom_call.1} parent=1 // pred_region
      %s60 = ssub.s32 65536, 65536
      %61 = vsyncadd [#allocation10], %s60
      %s62 = sshll.u32 [#allocation9], 4
      %s63 = int_to_ptr.vmem [resolvable:$true] %s62
      %68 = dma.hbm_to_vmem [thread:$0]  %s3, 65536, %s63, [#allocation10], 512, 512, 32
    $region17: #{tpu_custom_call.1} parent=1 // pred_fallthru
      _
    // Predicated region
    $region18: #{tpu_custom_call.1} parent=1 // pred_check
      _
    $region19: #{tpu_custom_call.1} parent=1 // pred_check_branch
      %70 = sbr.rel (0) target = $region21
    $region20: #{tpu_custom_call.1} parent=1 // pred_region
      %s72 = ssub.s32 128, 128
      %73 = vsyncadd [#allocation10], %s72
      %s75 = sshll.u32 [#allocation11], 4
      %s76 = int_to_ptr.vmem [resolvable:$true] %s75
      %78 = dma.hbm_to_vmem [thread:$0]  %s4, 128, %s76, [#allocation10]
    $region21: #{tpu_custom_call.1} parent=1 // pred_fallthru
      _
    // Predicated region
    $region22: #{tpu_custom_call.1} parent=1 // pred_check
      _
    $region23: #{tpu_custom_call.1} parent=1 // pred_check_branch
      %80 = sbr.rel (0) target = $region25
    $region24: #{tpu_custom_call.1} parent=1 // pred_region
      %s82 = ssub.s32 8192, 8192
      %83 = vsyncadd [#allocation13], %s82
      %s84 = sshll.u32 [#allocation12], 4
      %s85 = int_to_ptr.vmem [resolvable:$true] %s84
      %90 = dma.hbm_to_vmem [thread:$0]  %s5, 8192, %s85, [#allocation13], 64, 64, 4
    $region25: #{tpu_custom_call.1} parent=1 // pred_fallthru
      _
    // Predicated region
    $region26: #{tpu_custom_call.1} parent=1 // pred_check
      _
    $region27: #{tpu_custom_call.1} parent=1 // pred_check_branch
      %92 = sbr.rel (0) target = $region29
    $region28: #{tpu_custom_call.1} parent=1 // pred_region
      %s94 = ssub.s32 16, 16
      %95 = vsyncadd [#allocation13], %s94
      %s97 = sshll.u32 [#allocation14], 4
      %s98 = int_to_ptr.vmem [resolvable:$true] %s97
      %100 = dma.hbm_to_vmem [thread:$0]  %s6, 16, %s98, [#allocation13]
    $region29: #{tpu_custom_call.1} parent=1 // pred_fallthru
      _
    // Predicated region
    $region30: #{tpu_custom_call.1} parent=1 // pred_check
      _
    $region31: #{tpu_custom_call.1} parent=1 // pred_check_branch
      %102 = sbr.rel (0) target = $region33
    $region32: #{tpu_custom_call.1} parent=1 // pred_region
      %s104 = ssub.s32 1024, 1024
      %105 = vsyncadd [#allocation16], %s104
      %s106 = sshll.u32 [#allocation15], 4
      %s107 = int_to_ptr.vmem [resolvable:$true] %s106
      %112 = dma.hbm_to_vmem [thread:$0]  %s7, 1024, %s107, [#allocation16], 64, 64, 4
    $region33: #{tpu_custom_call.1} parent=1 // pred_fallthru
      _
    // Predicated region
    $region34: #{tpu_custom_call.1} parent=1 // pred_check
      _
    $region35: #{tpu_custom_call.1} parent=1 // pred_check_branch
      %114 = sbr.rel (0) target = $region37
    $region36: #{tpu_custom_call.1} parent=1 // pred_region
      %s116 = ssub.s32 16, 16
      %117 = vsyncadd [#allocation16], %s116
      %s119 = sshll.u32 [#allocation17], 4
      %s120 = int_to_ptr.vmem [resolvable:$true] %s119
      %122 = dma.hbm_to_vmem [thread:$0]  %s8, 16, %s120, [#allocation16]
    $region37: #{tpu_custom_call.1} parent=1 // pred_fallthru
      _
    // Predicated region
    $region38: #{tpu_custom_call.1} parent=1 // pred_check
      _
    $region39: #{tpu_custom_call.1} parent=1 // pred_check_branch
      %124 = sbr.rel (0) target = $region41
    $region40: #{tpu_custom_call.1} parent=1 // pred_region
      %125 = dma.done [#allocation4], 512
    $region41: #{tpu_custom_call.1} parent=1 // pred_fallthru
      _
    // Predicated region
    $region42: #{tpu_custom_call.1} parent=1 // pred_check
      _
    $region43: #{tpu_custom_call.1} parent=1 // pred_check_branch
      %127 = sbr.rel (0) target = $region45
    $region44: #{tpu_custom_call.1} parent=1 // pred_region
      %128 = dma.done [#allocation7], 32768
    $region45: #{tpu_custom_call.1} parent=1 // pred_fallthru
      _
    // Predicated region
    $region46: #{tpu_custom_call.1} parent=1 // pred_check
      _
    $region47: #{tpu_custom_call.1} parent=1 // pred_check_branch
      %130 = sbr.rel (0) target = $region49
    $region48: #{tpu_custom_call.1} parent=1 // pred_region
      %131 = dma.done [#allocation7], 128
    $region49: #{tpu_custom_call.1} parent=1 // pred_fallthru
      _
    // Predicated region
    $region50: #{tpu_custom_call.1} parent=1 // pred_check
      _
    $region51: #{tpu_custom_call.1} parent=1 // pred_check_branch
      %133 = sbr.rel (0) target = $region53
    $region52: #{tpu_custom_call.1} parent=1 // pred_region
      %134 = dma.done [#allocation10], 65536
    $region53: #{tpu_custom_call.1} parent=1 // pred_fallthru
      _
    // Predicated region
    $region54: #{tpu_custom_call.1} parent=1 // pred_check
      _
    $region55: #{tpu_custom_call.1} parent=1 // pred_check_branch
      %136 = sbr.rel (0) target = $region57
    $region56: #{tpu_custom_call.1} parent=1 // pred_region
      %137 = dma.done [#allocation10], 128
    $region57: #{tpu_custom_call.1} parent=1 // pred_fallthru
      _
    // Predicated region
    $region58: #{tpu_custom_call.1} parent=1 // pred_check
      _
    $region59: #{tpu_custom_call.1} parent=1 // pred_check_branch
      %139 = sbr.rel (0) target = $region61
    $region60: #{tpu_custom_call.1} parent=1 // pred_region
      %140 = dma.done [#allocation13], 8192
    $region61: #{tpu_custom_call.1} parent=1 // pred_fallthru
      _
    // Predicated region
    $region62: #{tpu_custom_call.1} parent=1 // pred_check
      _
    $region63: #{tpu_custom_call.1} parent=1 // pred_check_branch
      %142 = sbr.rel (0) target = $region65
    $region64: #{tpu_custom_call.1} parent=1 // pred_region
      %143 = dma.done [#allocation13], 16
    $region65: #{tpu_custom_call.1} parent=1 // pred_fallthru
      _
    // Predicated region
    $region66: #{tpu_custom_call.1} parent=1 // pred_check
      _
    $region67: #{tpu_custom_call.1} parent=1 // pred_check_branch
      %145 = sbr.rel (0) target = $region69
    $region68: #{tpu_custom_call.1} parent=1 // pred_region
      %146 = dma.done [#allocation16], 1024
    $region69: #{tpu_custom_call.1} parent=1 // pred_fallthru
      _
    // Predicated region
    $region70: #{tpu_custom_call.1} parent=1 // pred_check
      _
    $region71: #{tpu_custom_call.1} parent=1 // pred_check_branch
      %148 = sbr.rel (0) target = $region73
    $region72: #{tpu_custom_call.1} parent=1 // pred_region
      %149 = dma.done [#allocation16], 16
    $region73: #{tpu_custom_call.1} parent=1 // pred_fallthru
      _
    %p151 = scmp.eq.s32.totalorder 0, 0
    // Predicated region
    $region74: #{tpu_custom_call.1} parent=1 // pred_check
      %p152 = pneg %p151
    $region75: #{tpu_custom_call.1} parent=1 // pred_check_branch
      %154 = sbr.rel (%p152) target = $region77
    $region76: #{tpu_custom_call.1} parent=1 // pred_region
      %155 = vst [vmem:[#allocation2] sm:$0xff] 0.0
      %156 = vst [vmem:[#allocation2 + $0x8] sm:$0xff] 0.0
      %157 = vst [vmem:[#allocation2 + $0x10] sm:$0xff] 0.0
      %158 = vst [vmem:[#allocation2 + $0x18] sm:$0xff] 0.0
      %159 = vst [vmem:[#allocation2 + $0x20] sm:$0xff] 0.0
      %160 = vst [vmem:[#allocation2 + $0x28] sm:$0xff] 0.0
      %161 = vst [vmem:[#allocation2 + $0x30] sm:$0xff] 0.0
      %162 = vst [vmem:[#allocation2 + $0x38] sm:$0xff] 0.0
      %163 = vst [vmem:[#allocation2 + $0x40] sm:$0xff] 0.0
      %164 = vst [vmem:[#allocation2 + $0x48] sm:$0xff] 0.0
      %165 = vst [vmem:[#allocation2 + $0x50] sm:$0xff] 0.0
      %166 = vst [vmem:[#allocation2 + $0x58] sm:$0xff] 0.0
      %167 = vst [vmem:[#allocation2 + $0x60] sm:$0xff] 0.0
      %168 = vst [vmem:[#allocation2 + $0x68] sm:$0xff] 0.0
      %169 = vst [vmem:[#allocation2 + $0x70] sm:$0xff] 0.0
      %170 = vst [vmem:[#allocation2 + $0x78] sm:$0xff] 0.0
    $region77: #{tpu_custom_call.1} parent=1 // pred_fallthru
      _
    %v171 = vld [vmem:[#allocation2] sm:$0xff]
    %v172 = vld [vmem:[#allocation2 + $0x8] sm:$0xff]
    %v173 = vld [vmem:[#allocation2 + $0x10] sm:$0xff]
    %v174 = vld [vmem:[#allocation2 + $0x18] sm:$0xff]
    %v175 = vld [vmem:[#allocation2 + $0x20] sm:$0xff]
    %v176 = vld [vmem:[#allocation2 + $0x28] sm:$0xff]
    %v177 = vld [vmem:[#allocation2 + $0x30] sm:$0xff]
    %v178 = vld [vmem:[#allocation2 + $0x38] sm:$0xff]
    %v179 = vld [vmem:[#allocation2 + $0x40] sm:$0xff]
    %v180 = vld [vmem:[#allocation2 + $0x48] sm:$0xff]
    %v181 = vld [vmem:[#allocation2 + $0x50] sm:$0xff]
    %v182 = vld [vmem:[#allocation2 + $0x58] sm:$0xff]
    %v183 = vld [vmem:[#allocation2 + $0x60] sm:$0xff]
    %v184 = vld [vmem:[#allocation2 + $0x68] sm:$0xff]
    %v185 = vld [vmem:[#allocation2 + $0x70] sm:$0xff]
    %v186 = vld [vmem:[#allocation2 + $0x78] sm:$0xff]
    %v187 = vld [vmem:[#allocation3] sm:$0xff]
    %v188 = vld [vmem:[#allocation3 + $0x8] sm:$0xff]
    %v189 = vld [vmem:[#allocation3 + $0x10] sm:$0xff]
    %v190 = vld [vmem:[#allocation3 + $0x18] sm:$0xff]
    %v191 = vld [vmem:[#allocation6] sm:$0xff]
    %v192 = vld [vmem:[#allocation6 + $0x8] sm:$0xff]
    %v193 = vld [vmem:[#allocation6 + $0x10] sm:$0xff]
    %v194 = vld [vmem:[#allocation6 + $0x18] sm:$0xff]
    %v195 = vld [vmem:[#allocation6 + $0x20] sm:$0xff]
    %v196 = vld [vmem:[#allocation6 + $0x28] sm:$0xff]
    %v197 = vld [vmem:[#allocation6 + $0x30] sm:$0xff]
    %v198 = vld [vmem:[#allocation6 + $0x38] sm:$0xff]
    %v199 = vld [vmem:[#allocation6 + $0x40] sm:$0xff]
    %v200 = vld [vmem:[#allocation6 + $0x48] sm:$0xff]
    %v201 = vld [vmem:[#allocation6 + $0x50] sm:$0xff]
    %v202 = vld [vmem:[#allocation6 + $0x58] sm:$0xff]
    %v203 = vld [vmem:[#allocation6 + $0x60] sm:$0xff]
    %v204 = vld [vmem:[#allocation6 + $0x68] sm:$0xff]
    %v205 = vld [vmem:[#allocation6 + $0x70] sm:$0xff]
    %v206 = vld [vmem:[#allocation6 + $0x78] sm:$0xff]
    %v207 = vld [vmem:[#allocation6 + $0x80] sm:$0xff]
    %v208 = vld [vmem:[#allocation6 + $0x88] sm:$0xff]
    %v209 = vld [vmem:[#allocation6 + $0x90] sm:$0xff]
    %v210 = vld [vmem:[#allocation6 + $0x98] sm:$0xff]
    %v211 = vld [vmem:[#allocation6 + $0xa0] sm:$0xff]
    %v212 = vld [vmem:[#allocation6 + $0xa8] sm:$0xff]
    %v213 = vld [vmem:[#allocation6 + $0xb0] sm:$0xff]
    %v214 = vld [vmem:[#allocation6 + $0xb8] sm:$0xff]
    %v215 = vld [vmem:[#allocation6 + $0xc0] sm:$0xff]
    %v216 = vld [vmem:[#allocation6 + $0xc8] sm:$0xff]
    %v217 = vld [vmem:[#allocation6 + $0xd0] sm:$0xff]
    %v218 = vld [vmem:[#allocation6 + $0xd8] sm:$0xff]
    %v219 = vld [vmem:[#allocation6 + $0xe0] sm:$0xff]
    %v220 = vld [vmem:[#allocation6 + $0xe8] sm:$0xff]
    %v221 = vld [vmem:[#allocation6 + $0xf0] sm:$0xff]
    %v222 = vld [vmem:[#allocation6 + $0xf8] sm:$0xff]
    %v223 = vld [vmem:[#allocation6 + $0x100] sm:$0xff]
    %v224 = vld [vmem:[#allocation6 + $0x108] sm:$0xff]
    %v225 = vld [vmem:[#allocation6 + $0x110] sm:$0xff]
    %v226 = vld [vmem:[#allocation6 + $0x118] sm:$0xff]
    %v227 = vld [vmem:[#allocation6 + $0x120] sm:$0xff]
    %v228 = vld [vmem:[#allocation6 + $0x128] sm:$0xff]
    %v229 = vld [vmem:[#allocation6 + $0x130] sm:$0xff]
    %v230 = vld [vmem:[#allocation6 + $0x138] sm:$0xff]
    %v231 = vld [vmem:[#allocation6 + $0x140] sm:$0xff]
    %v232 = vld [vmem:[#allocation6 + $0x148] sm:$0xff]
    %v233 = vld [vmem:[#allocation6 + $0x150] sm:$0xff]
    %v234 = vld [vmem:[#allocation6 + $0x158] sm:$0xff]
    %v235 = vld [vmem:[#allocation6 + $0x160] sm:$0xff]
    %v236 = vld [vmem:[#allocation6 + $0x168] sm:$0xff]
    %v237 = vld [vmem:[#allocation6 + $0x170] sm:$0xff]
    %v238 = vld [vmem:[#allocation6 + $0x178] sm:$0xff]
    %v239 = vld [vmem:[#allocation6 + $0x180] sm:$0xff]
    %v240 = vld [vmem:[#allocation6 + $0x188] sm:$0xff]
    %v241 = vld [vmem:[#allocation6 + $0x190] sm:$0xff]
    %v242 = vld [vmem:[#allocation6 + $0x198] sm:$0xff]
    %v243 = vld [vmem:[#allocation6 + $0x1a0] sm:$0xff]
    %v244 = vld [vmem:[#allocation6 + $0x1a8] sm:$0xff]
    %v245 = vld [vmem:[#allocation6 + $0x1b0] sm:$0xff]
    %v246 = vld [vmem:[#allocation6 + $0x1b8] sm:$0xff]
    %v247 = vld [vmem:[#allocation6 + $0x1c0] sm:$0xff]
    %v248 = vld [vmem:[#allocation6 + $0x1c8] sm:$0xff]
    %v249 = vld [vmem:[#allocation6 + $0x1d0] sm:$0xff]
    %v250 = vld [vmem:[#allocation6 + $0x1d8] sm:$0xff]
    %v251 = vld [vmem:[#allocation6 + $0x1e0] sm:$0xff]
    %v252 = vld [vmem:[#allocation6 + $0x1e8] sm:$0xff]
    %v253 = vld [vmem:[#allocation6 + $0x1f0] sm:$0xff]
    %v254 = vld [vmem:[#allocation6 + $0x1f8] sm:$0xff]
    %v255 = vld [vmem:[#allocation6 + $0x200] sm:$0xff]
    %v256 = vld [vmem:[#allocation6 + $0x208] sm:$0xff]
    %v257 = vld [vmem:[#allocation6 + $0x210] sm:$0xff]
    %v258 = vld [vmem:[#allocation6 + $0x218] sm:$0xff]
    %v259 = vld [vmem:[#allocation6 + $0x220] sm:$0xff]
    %v260 = vld [vmem:[#allocation6 + $0x228] sm:$0xff]
    %v261 = vld [vmem:[#allocation6 + $0x230] sm:$0xff]
    %v262 = vld [vmem:[#allocation6 + $0x238] sm:$0xff]
    %v263 = vld [vmem:[#allocation6 + $0x240] sm:$0xff]
    %v264 = vld [vmem:[#allocation6 + $0x248] sm:$0xff]
    %v265 = vld [vmem:[#allocation6 + $0x250] sm:$0xff]
    %v266 = vld [vmem:[#allocation6 + $0x258] sm:$0xff]
    %v267 = vld [vmem:[#allocation6 + $0x260] sm:$0xff]
    %v268 = vld [vmem:[#allocation6 + $0x268] sm:$0xff]
    %v269 = vld [vmem:[#allocation6 + $0x270] sm:$0xff]
    %v270 = vld [vmem:[#allocation6 + $0x278] sm:$0xff]
    %v271 = vld [vmem:[#allocation6 + $0x280] sm:$0xff]
    %v272 = vld [vmem:[#allocation6 + $0x288] sm:$0xff]
    %v273 = vld [vmem:[#allocation6 + $0x290] sm:$0xff]
    %v274 = vld [vmem:[#allocation6 + $0x298] sm:$0xff]
    %v275 = vld [vmem:[#allocation6 + $0x2a0] sm:$0xff]
    %v276 = vld [vmem:[#allocation6 + $0x2a8] sm:$0xff]
    %v277 = vld [vmem:[#allocation6 + $0x2b0] sm:$0xff]
    %v278 = vld [vmem:[#allocation6 + $0x2b8] sm:$0xff]
    %v279 = vld [vmem:[#allocation6 + $0x2c0] sm:$0xff]
    %v280 = vld [vmem:[#allocation6 + $0x2c8] sm:$0xff]
    %v281 = vld [vmem:[#allocation6 + $0x2d0] sm:$0xff]
    %v282 = vld [vmem:[#allocation6 + $0x2d8] sm:$0xff]
    %v283 = vld [vmem:[#allocation6 + $0x2e0] sm:$0xff]
    %v284 = vld [vmem:[#allocation6 + $0x2e8] sm:$0xff]
    %v285 = vld [vmem:[#allocation6 + $0x2f0] sm:$0xff]
    %v286 = vld [vmem:[#allocation6 + $0x2f8] sm:$0xff]
    %v287 = vld [vmem:[#allocation6 + $0x300] sm:$0xff]
    %v288 = vld [vmem:[#allocation6 + $0x308] sm:$0xff]
    %v289 = vld [vmem:[#allocation6 + $0x310] sm:$0xff]
    %v290 = vld [vmem:[#allocation6 + $0x318] sm:$0xff]
    %v291 = vld [vmem:[#allocation6 + $0x320] sm:$0xff]
    %v292 = vld [vmem:[#allocation6 + $0x328] sm:$0xff]
    %v293 = vld [vmem:[#allocation6 + $0x330] sm:$0xff]
    %v294 = vld [vmem:[#allocation6 + $0x338] sm:$0xff]
    %v295 = vld [vmem:[#allocation6 + $0x340] sm:$0xff]
    %v296 = vld [vmem:[#allocation6 + $0x348] sm:$0xff]
    %v297 = vld [vmem:[#allocation6 + $0x350] sm:$0xff]
    %v298 = vld [vmem:[#allocation6 + $0x358] sm:$0xff]
    %v299 = vld [vmem:[#allocation6 + $0x360] sm:$0xff]
    %v300 = vld [vmem:[#allocation6 + $0x368] sm:$0xff]
    %v301 = vld [vmem:[#allocation6 + $0x370] sm:$0xff]
    %v302 = vld [vmem:[#allocation6 + $0x378] sm:$0xff]
    %v303 = vld [vmem:[#allocation6 + $0x380] sm:$0xff]
    %v304 = vld [vmem:[#allocation6 + $0x388] sm:$0xff]
    %v305 = vld [vmem:[#allocation6 + $0x390] sm:$0xff]
    %v306 = vld [vmem:[#allocation6 + $0x398] sm:$0xff]
    %v307 = vld [vmem:[#allocation6 + $0x3a0] sm:$0xff]
    %v308 = vld [vmem:[#allocation6 + $0x3a8] sm:$0xff]
    %v309 = vld [vmem:[#allocation6 + $0x3b0] sm:$0xff]
    %v310 = vld [vmem:[#allocation6 + $0x3b8] sm:$0xff]
    %v311 = vld [vmem:[#allocation6 + $0x3c0] sm:$0xff]
    %v312 = vld [vmem:[#allocation6 + $0x3c8] sm:$0xff]
    %v313 = vld [vmem:[#allocation6 + $0x3d0] sm:$0xff]
    %v314 = vld [vmem:[#allocation6 + $0x3d8] sm:$0xff]
    %v315 = vld [vmem:[#allocation6 + $0x3e0] sm:$0xff]
    %v316 = vld [vmem:[#allocation6 + $0x3e8] sm:$0xff]
    %v317 = vld [vmem:[#allocation6 + $0x3f0] sm:$0xff]
    %v318 = vld [vmem:[#allocation6 + $0x3f8] sm:$0xff]
    %v319 = vld [vmem:[#allocation6 + $0x400] sm:$0xff]
    %v320 = vld [vmem:[#allocation6 + $0x408] sm:$0xff]
    %v321 = vld [vmem:[#allocation6 + $0x410] sm:$0xff]
    %v322 = vld [vmem:[#allocation6 + $0x418] sm:$0xff]
    %v323 = vld [vmem:[#allocation6 + $0x420] sm:$0xff]
    %v324 = vld [vmem:[#allocation6 + $0x428] sm:$0xff]
    %v325 = vld [vmem:[#allocation6 + $0x430] sm:$0xff]
    %v326 = vld [vmem:[#allocation6 + $0x438] sm:$0xff]
    %v327 = vld [vmem:[#allocation6 + $0x440] sm:$0xff]
    %v328 = vld [vmem:[#allocation6 + $0x448] sm:$0xff]
    %v329 = vld [vmem:[#allocation6 + $0x450] sm:$0xff]
    %v330 = vld [vmem:[#allocation6 + $0x458] sm:$0xff]
    %v331 = vld [vmem:[#allocation6 + $0x460] sm:$0xff]
    %v332 = vld [vmem:[#allocation6 + $0x468] sm:$0xff]
    %v333 = vld [vmem:[#allocation6 + $0x470] sm:$0xff]
    %v334 = vld [vmem:[#allocation6 + $0x478] sm:$0xff]
    %v335 = vld [vmem:[#allocation6 + $0x480] sm:$0xff]
    %v336 = vld [vmem:[#allocation6 + $0x488] sm:$0xff]
    %v337 = vld [vmem:[#allocation6 + $0x490] sm:$0xff]
    %v338 = vld [vmem:[#allocation6 + $0x498] sm:$0xff]
    %v339 = vld [vmem:[#allocation6 + $0x4a0] sm:$0xff]
    %v340 = vld [vmem:[#allocation6 + $0x4a8] sm:$0xff]
    %v341 = vld [vmem:[#allocation6 + $0x4b0] sm:$0xff]
    %v342 = vld [vmem:[#allocation6 + $0x4b8] sm:$0xff]
    %v343 = vld [vmem:[#allocation6 + $0x4c0] sm:$0xff]
    %v344 = vld [vmem:[#allocation6 + $0x4c8] sm:$0xff]
    %v345 = vld [vmem:[#allocation6 + $0x4d0] sm:$0xff]
    %v346 = vld [vmem:[#allocation6 + $0x4d8] sm:$0xff]
    %v347 = vld [vmem:[#allocation6 + $0x4e0] sm:$0xff]
    %v348 = vld [vmem:[#allocation6 + $0x4e8] sm:$0xff]
    %v349 = vld [vmem:[#allocation6 + $0x4f0] sm:$0xff]
    %v350 = vld [vmem:[#allocation6 + $0x4f8] sm:$0xff]
    %v351 = vld [vmem:[#allocation6 + $0x500] sm:$0xff]
    %v352 = vld [vmem:[#allocation6 + $0x508] sm:$0xff]
    %v353 = vld [vmem:[#allocation6 + $0x510] sm:$0xff]
    %v354 = vld [vmem:[#allocation6 + $0x518] sm:$0xff]
    %v355 = vld [vmem:[#allocation6 + $0x520] sm:$0xff]
    %v356 = vld [vmem:[#allocation6 + $0x528] sm:$0xff]
    %v357 = vld [vmem:[#allocation6 + $0x530] sm:$0xff]
    %v358 = vld [vmem:[#allocation6 + $0x538] sm:$0xff]
    %v359 = vld [vmem:[#allocation6 + $0x540] sm:$0xff]
    %v360 = vld [vmem:[#allocation6 + $0x548] sm:$0xff]
    %v361 = vld [vmem:[#allocation6 + $0x550] sm:$0xff]
    %v362 = vld [vmem:[#allocation6 + $0x558] sm:$0xff]
    %v363 = vld [vmem:[#allocation6 + $0x560] sm:$0xff]
    %v364 = vld [vmem:[#allocation6 + $0x568] sm:$0xff]
    %v365 = vld [vmem:[#allocation6 + $0x570] sm:$0xff]
    %v366 = vld [vmem:[#allocation6 + $0x578] sm:$0xff]
    %v367 = vld [vmem:[#allocation6 + $0x580] sm:$0xff]
    %v368 = vld [vmem:[#allocation6 + $0x588] sm:$0xff]
    %v369 = vld [vmem:[#allocation6 + $0x590] sm:$0xff]
    %v370 = vld [vmem:[#allocation6 + $0x598] sm:$0xff]
    %v371 = vld [vmem:[#allocation6 + $0x5a0] sm:$0xff]
    %v372 = vld [vmem:[#allocation6 + $0x5a8] sm:$0xff]
    %v373 = vld [vmem:[#allocation6 + $0x5b0] sm:$0xff]
    %v374 = vld [vmem:[#allocation6 + $0x5b8] sm:$0xff]
    %v375 = vld [vmem:[#allocation6 + $0x5c0] sm:$0xff]
    %v376 = vld [vmem:[#allocation6 + $0x5c8] sm:$0xff]
    %v377 = vld [vmem:[#allocation6 + $0x5d0] sm:$0xff]
    %v378 = vld [vmem:[#allocation6 + $0x5d8] sm:$0xff]
    %v379 = vld [vmem:[#allocation6 + $0x5e0] sm:$0xff]
    %v380 = vld [vmem:[#allocation6 + $0x5e8] sm:$0xff]
    %v381 = vld [vmem:[#allocation6 + $0x5f0] sm:$0xff]
    %v382 = vld [vmem:[#allocation6 + $0x5f8] sm:$0xff]
    %v383 = vld [vmem:[#allocation6 + $0x600] sm:$0xff]
    %v384 = vld [vmem:[#allocation6 + $0x608] sm:$0xff]
    %v385 = vld [vmem:[#allocation6 + $0x610] sm:$0xff]
    %v386 = vld [vmem:[#allocation6 + $0x618] sm:$0xff]
    %v387 = vld [vmem:[#allocation6 + $0x620] sm:$0xff]
    %v388 = vld [vmem:[#allocation6 + $0x628] sm:$0xff]
    %v389 = vld [vmem:[#allocation6 + $0x630] sm:$0xff]
    %v390 = vld [vmem:[#allocation6 + $0x638] sm:$0xff]
    %v391 = vld [vmem:[#allocation6 + $0x640] sm:$0xff]
    %v392 = vld [vmem:[#allocation6 + $0x648] sm:$0xff]
    %v393 = vld [vmem:[#allocation6 + $0x650] sm:$0xff]
    %v394 = vld [vmem:[#allocation6 + $0x658] sm:$0xff]
    %v395 = vld [vmem:[#allocation6 + $0x660] sm:$0xff]
    %v396 = vld [vmem:[#allocation6 + $0x668] sm:$0xff]
    %v397 = vld [vmem:[#allocation6 + $0x670] sm:$0xff]
    %v398 = vld [vmem:[#allocation6 + $0x678] sm:$0xff]
    %v399 = vld [vmem:[#allocation6 + $0x680] sm:$0xff]
    %v400 = vld [vmem:[#allocation6 + $0x688] sm:$0xff]
    %v401 = vld [vmem:[#allocation6 + $0x690] sm:$0xff]
    %v402 = vld [vmem:[#allocation6 + $0x698] sm:$0xff]
    %v403 = vld [vmem:[#allocation6 + $0x6a0] sm:$0xff]
    %v404 = vld [vmem:[#allocation6 + $0x6a8] sm:$0xff]
    %v405 = vld [vmem:[#allocation6 + $0x6b0] sm:$0xff]
    %v406 = vld [vmem:[#allocation6 + $0x6b8] sm:$0xff]
    %v407 = vld [vmem:[#allocation6 + $0x6c0] sm:$0xff]
    %v408 = vld [vmem:[#allocation6 + $0x6c8] sm:$0xff]
    %v409 = vld [vmem:[#allocation6 + $0x6d0] sm:$0xff]
    %v410 = vld [vmem:[#allocation6 + $0x6d8] sm:$0xff]
    %v411 = vld [vmem:[#allocation6 + $0x6e0] sm:$0xff]
    %v412 = vld [vmem:[#allocation6 + $0x6e8] sm:$0xff]
    %v413 = vld [vmem:[#allocation6 + $0x6f0] sm:$0xff]
    %v414 = vld [vmem:[#allocation6 + $0x6f8] sm:$0xff]
    %v415 = vld [vmem:[#allocation6 + $0x700] sm:$0xff]
    %v416 = vld [vmem:[#allocation6 + $0x708] sm:$0xff]
    %v417 = vld [vmem:[#allocation6 + $0x710] sm:$0xff]
    %v418 = vld [vmem:[#allocation6 + $0x718] sm:$0xff]
    %v419 = vld [vmem:[#allocation6 + $0x720] sm:$0xff]
    %v420 = vld [vmem:[#allocation6 + $0x728] sm:$0xff]
    %v421 = vld [vmem:[#allocation6 + $0x730] sm:$0xff]
    %v422 = vld [vmem:[#allocation6 + $0x738] sm:$0xff]
    %v423 = vld [vmem:[#allocation6 + $0x740] sm:$0xff]
    %v424 = vld [vmem:[#allocation6 + $0x748] sm:$0xff]
    %v425 = vld [vmem:[#allocation6 + $0x750] sm:$0xff]
    %v426 = vld [vmem:[#allocation6 + $0x758] sm:$0xff]
    %v427 = vld [vmem:[#allocation6 + $0x760] sm:$0xff]
    %v428 = vld [vmem:[#allocation6 + $0x768] sm:$0xff]
    %v429 = vld [vmem:[#allocation6 + $0x770] sm:$0xff]
    %v430 = vld [vmem:[#allocation6 + $0x778] sm:$0xff]
    %v431 = vld [vmem:[#allocation6 + $0x780] sm:$0xff]
    %v432 = vld [vmem:[#allocation6 + $0x788] sm:$0xff]
    %v433 = vld [vmem:[#allocation6 + $0x790] sm:$0xff]
    %v434 = vld [vmem:[#allocation6 + $0x798] sm:$0xff]
    %v435 = vld [vmem:[#allocation6 + $0x7a0] sm:$0xff]
    %v436 = vld [vmem:[#allocation6 + $0x7a8] sm:$0xff]
    %v437 = vld [vmem:[#allocation6 + $0x7b0] sm:$0xff]
    %v438 = vld [vmem:[#allocation6 + $0x7b8] sm:$0xff]
    %v439 = vld [vmem:[#allocation6 + $0x7c0] sm:$0xff]
    %v440 = vld [vmem:[#allocation6 + $0x7c8] sm:$0xff]
    %v441 = vld [vmem:[#allocation6 + $0x7d0] sm:$0xff]
    %v442 = vld [vmem:[#allocation6 + $0x7d8] sm:$0xff]
    %v443 = vld [vmem:[#allocation6 + $0x7e0] sm:$0xff]
    %v444 = vld [vmem:[#allocation6 + $0x7e8] sm:$0xff]
    %v445 = vld [vmem:[#allocation6 + $0x7f0] sm:$0xff]
    %v446 = vld [vmem:[#allocation6 + $0x7f8] sm:$0xff]
    %v451 = vunpack.c.l.b16 %v187
    %v452 = vunpack.c.h.b16 %v187
    %v453 = vunpack.c.l.b16 %v188
    %v454 = vunpack.c.h.b16 %v188
    %v455 = vunpack.c.l.b16 %v189
    %v456 = vunpack.c.h.b16 %v189
    %v457 = vunpack.c.l.b16 %v190
    %v458 = vunpack.c.h.b16 %v190
    %v459 = vpack.c.b16 %v455, %v451
    %v460 = vpack.c.b16 %v456, %v452
    %v461 = vpack.c.b16 %v457, %v453
    %v462 = vpack.c.b16 %v458, %v454
    %v723 = vunpack.c.l.b16 %v191
    %v724 = vunpack.c.h.b16 %v191
    %v725 = vunpack.c.l.b16 %v192
    %v726 = vunpack.c.h.b16 %v192
    %v727 = vunpack.c.l.b16 %v193
    %v728 = vunpack.c.h.b16 %v193
    %v729 = vunpack.c.l.b16 %v194
    %v730 = vunpack.c.h.b16 %v194
    %v731 = vunpack.c.l.b16 %v195
    %v732 = vunpack.c.h.b16 %v195
    %v733 = vunpack.c.l.b16 %v196
    %v734 = vunpack.c.h.b16 %v196
    %v735 = vunpack.c.l.b16 %v197
    %v736 = vunpack.c.h.b16 %v197
    %v737 = vunpack.c.l.b16 %v198
    %v738 = vunpack.c.h.b16 %v198
    %v739 = vunpack.c.l.b16 %v199
    %v740 = vunpack.c.h.b16 %v199
    %v741 = vunpack.c.l.b16 %v200
    %v742 = vunpack.c.h.b16 %v200
    %v743 = vunpack.c.l.b16 %v201
    %v744 = vunpack.c.h.b16 %v201
    %v745 = vunpack.c.l.b16 %v202
    %v746 = vunpack.c.h.b16 %v202
    %v747 = vunpack.c.l.b16 %v203
    %v748 = vunpack.c.h.b16 %v203
    %v749 = vunpack.c.l.b16 %v204
    %v750 = vunpack.c.h.b16 %v204
    %v751 = vunpack.c.l.b16 %v205
    %v752 = vunpack.c.h.b16 %v205
    %v753 = vunpack.c.l.b16 %v206
    %v754 = vunpack.c.h.b16 %v206
    %v755 = vunpack.c.l.b16 %v207
    %v756 = vunpack.c.h.b16 %v207
    %v757 = vunpack.c.l.b16 %v208
    %v758 = vunpack.c.h.b16 %v208
    %v759 = vunpack.c.l.b16 %v209
    %v760 = vunpack.c.h.b16 %v209
    %v761 = vunpack.c.l.b16 %v210
    %v762 = vunpack.c.h.b16 %v210
    %v763 = vunpack.c.l.b16 %v211
    %v764 = vunpack.c.h.b16 %v211
    %v765 = vunpack.c.l.b16 %v212
    %v766 = vunpack.c.h.b16 %v212
    %v767 = vunpack.c.l.b16 %v213
    %v768 = vunpack.c.h.b16 %v213
    %v769 = vunpack.c.l.b16 %v214
    %v770 = vunpack.c.h.b16 %v214
    %v771 = vunpack.c.l.b16 %v215
    %v772 = vunpack.c.h.b16 %v215
    %v773 = vunpack.c.l.b16 %v216
    %v774 = vunpack.c.h.b16 %v216
    %v775 = vunpack.c.l.b16 %v217
    %v776 = vunpack.c.h.b16 %v217
    %v777 = vunpack.c.l.b16 %v218
    %v778 = vunpack.c.h.b16 %v218
    %v779 = vunpack.c.l.b16 %v219
    %v780 = vunpack.c.h.b16 %v219
    %v781 = vunpack.c.l.b16 %v220
    %v782 = vunpack.c.h.b16 %v220
    %v783 = vunpack.c.l.b16 %v221
    %v784 = vunpack.c.h.b16 %v221
    %v785 = vunpack.c.l.b16 %v222
    %v786 = vunpack.c.h.b16 %v222
    %v787 = vunpack.c.l.b16 %v223
    %v788 = vunpack.c.h.b16 %v223
    %v789 = vunpack.c.l.b16 %v224
    %v790 = vunpack.c.h.b16 %v224
    %v791 = vunpack.c.l.b16 %v225
    %v792 = vunpack.c.h.b16 %v225
    %v793 = vunpack.c.l.b16 %v226
    %v794 = vunpack.c.h.b16 %v226
    %v795 = vunpack.c.l.b16 %v227
    %v796 = vunpack.c.h.b16 %v227
    %v797 = vunpack.c.l.b16 %v228
    %v798 = vunpack.c.h.b16 %v228
    %v799 = vunpack.c.l.b16 %v229
    %v800 = vunpack.c.h.b16 %v229
    %v801 = vunpack.c.l.b16 %v230
    %v802 = vunpack.c.h.b16 %v230
    %v803 = vunpack.c.l.b16 %v231
    %v804 = vunpack.c.h.b16 %v231
    %v805 = vunpack.c.l.b16 %v232
    %v806 = vunpack.c.h.b16 %v232
    %v807 = vunpack.c.l.b16 %v233
    %v808 = vunpack.c.h.b16 %v233
    %v809 = vunpack.c.l.b16 %v234
    %v810 = vunpack.c.h.b16 %v234
    %v811 = vunpack.c.l.b16 %v235
    %v812 = vunpack.c.h.b16 %v235
    %v813 = vunpack.c.l.b16 %v236
    %v814 = vunpack.c.h.b16 %v236
    %v815 = vunpack.c.l.b16 %v237
    %v816 = vunpack.c.h.b16 %v237
    %v817 = vunpack.c.l.b16 %v238
    %v818 = vunpack.c.h.b16 %v238
    %v819 = vunpack.c.l.b16 %v239
    %v820 = vunpack.c.h.b16 %v239
    %v821 = vunpack.c.l.b16 %v240
    %v822 = vunpack.c.h.b16 %v240
    %v823 = vunpack.c.l.b16 %v241
    %v824 = vunpack.c.h.b16 %v241
    %v825 = vunpack.c.l.b16 %v242
    %v826 = vunpack.c.h.b16 %v242
    %v827 = vunpack.c.l.b16 %v243
    %v828 = vunpack.c.h.b16 %v243
    %v829 = vunpack.c.l.b16 %v244
    %v830 = vunpack.c.h.b16 %v244
    %v831 = vunpack.c.l.b16 %v245
    %v832 = vunpack.c.h.b16 %v245
    %v833 = vunpack.c.l.b16 %v246
    %v834 = vunpack.c.h.b16 %v246
    %v835 = vunpack.c.l.b16 %v247
    %v836 = vunpack.c.h.b16 %v247
    %v837 = vunpack.c.l.b16 %v248
    %v838 = vunpack.c.h.b16 %v248
    %v839 = vunpack.c.l.b16 %v249
    %v840 = vunpack.c.h.b16 %v249
    %v841 = vunpack.c.l.b16 %v250
    %v842 = vunpack.c.h.b16 %v250
    %v843 = vunpack.c.l.b16 %v251
    %v844 = vunpack.c.h.b16 %v251
    %v845 = vunpack.c.l.b16 %v252
    %v846 = vunpack.c.h.b16 %v252
    %v847 = vunpack.c.l.b16 %v253
    %v848 = vunpack.c.h.b16 %v253
    %v849 = vunpack.c.l.b16 %v254
    %v850 = vunpack.c.h.b16 %v254
    %v851 = vunpack.c.l.b16 %v255
    %v852 = vunpack.c.h.b16 %v255
    %v853 = vunpack.c.l.b16 %v256
    %v854 = vunpack.c.h.b16 %v256
    %v855 = vunpack.c.l.b16 %v257
    %v856 = vunpack.c.h.b16 %v257
    %v857 = vunpack.c.l.b16 %v258
    %v858 = vunpack.c.h.b16 %v258
    %v859 = vunpack.c.l.b16 %v259
    %v860 = vunpack.c.h.b16 %v259
    %v861 = vunpack.c.l.b16 %v260
    %v862 = vunpack.c.h.b16 %v260
    %v863 = vunpack.c.l.b16 %v261
    %v864 = vunpack.c.h.b16 %v261
    %v865 = vunpack.c.l.b16 %v262
    %v866 = vunpack.c.h.b16 %v262
    %v867 = vunpack.c.l.b16 %v263
    %v868 = vunpack.c.h.b16 %v263
    %v869 = vunpack.c.l.b16 %v264
    %v870 = vunpack.c.h.b16 %v264
    %v871 = vunpack.c.l.b16 %v265
    %v872 = vunpack.c.h.b16 %v265
    %v873 = vunpack.c.l.b16 %v266
    %v874 = vunpack.c.h.b16 %v266
    %v875 = vunpack.c.l.b16 %v267
    %v876 = vunpack.c.h.b16 %v267
    %v877 = vunpack.c.l.b16 %v268
    %v878 = vunpack.c.h.b16 %v268
    %v879 = vunpack.c.l.b16 %v269
    %v880 = vunpack.c.h.b16 %v269
    %v881 = vunpack.c.l.b16 %v270
    %v882 = vunpack.c.h.b16 %v270
    %v883 = vunpack.c.l.b16 %v271
    %v884 = vunpack.c.h.b16 %v271
    %v885 = vunpack.c.l.b16 %v272
    %v886 = vunpack.c.h.b16 %v272
    %v887 = vunpack.c.l.b16 %v273
    %v888 = vunpack.c.h.b16 %v273
    %v889 = vunpack.c.l.b16 %v274
    %v890 = vunpack.c.h.b16 %v274
    %v891 = vunpack.c.l.b16 %v275
    %v892 = vunpack.c.h.b16 %v275
    %v893 = vunpack.c.l.b16 %v276
    %v894 = vunpack.c.h.b16 %v276
    %v895 = vunpack.c.l.b16 %v277
    %v896 = vunpack.c.h.b16 %v277
    %v897 = vunpack.c.l.b16 %v278
    %v898 = vunpack.c.h.b16 %v278
    %v899 = vunpack.c.l.b16 %v279
    %v900 = vunpack.c.h.b16 %v279
    %v901 = vunpack.c.l.b16 %v280
    %v902 = vunpack.c.h.b16 %v280
    %v903 = vunpack.c.l.b16 %v281
    %v904 = vunpack.c.h.b16 %v281
    %v905 = vunpack.c.l.b16 %v282
    %v906 = vunpack.c.h.b16 %v282
    %v907 = vunpack.c.l.b16 %v283
    %v908 = vunpack.c.h.b16 %v283
    %v909 = vunpack.c.l.b16 %v284
    %v910 = vunpack.c.h.b16 %v284
    %v911 = vunpack.c.l.b16 %v285
    %v912 = vunpack.c.h.b16 %v285
    %v913 = vunpack.c.l.b16 %v286
    %v914 = vunpack.c.h.b16 %v286
    %v915 = vunpack.c.l.b16 %v287
    %v916 = vunpack.c.h.b16 %v287
    %v917 = vunpack.c.l.b16 %v288
    %v918 = vunpack.c.h.b16 %v288
    %v919 = vunpack.c.l.b16 %v289
    %v920 = vunpack.c.h.b16 %v289
    %v921 = vunpack.c.l.b16 %v290
    %v922 = vunpack.c.h.b16 %v290
    %v923 = vunpack.c.l.b16 %v291
    %v924 = vunpack.c.h.b16 %v291
    %v925 = vunpack.c.l.b16 %v292
    %v926 = vunpack.c.h.b16 %v292
    %v927 = vunpack.c.l.b16 %v293
    %v928 = vunpack.c.h.b16 %v293
    %v929 = vunpack.c.l.b16 %v294
    %v930 = vunpack.c.h.b16 %v294
    %v931 = vunpack.c.l.b16 %v295
    %v932 = vunpack.c.h.b16 %v295
    %v933 = vunpack.c.l.b16 %v296
    %v934 = vunpack.c.h.b16 %v296
    %v935 = vunpack.c.l.b16 %v297
    %v936 = vunpack.c.h.b16 %v297
    %v937 = vunpack.c.l.b16 %v298
    %v938 = vunpack.c.h.b16 %v298
    %v939 = vunpack.c.l.b16 %v299
    %v940 = vunpack.c.h.b16 %v299
    %v941 = vunpack.c.l.b16 %v300
    %v942 = vunpack.c.h.b16 %v300
    %v943 = vunpack.c.l.b16 %v301
    %v944 = vunpack.c.h.b16 %v301
    %v945 = vunpack.c.l.b16 %v302
    %v946 = vunpack.c.h.b16 %v302
    %v947 = vunpack.c.l.b16 %v303
    %v948 = vunpack.c.h.b16 %v303
    %v949 = vunpack.c.l.b16 %v304
    %v950 = vunpack.c.h.b16 %v304
    %v951 = vunpack.c.l.b16 %v305
    %v952 = vunpack.c.h.b16 %v305
    %v953 = vunpack.c.l.b16 %v306
    %v954 = vunpack.c.h.b16 %v306
    %v955 = vunpack.c.l.b16 %v307
    %v956 = vunpack.c.h.b16 %v307
    %v957 = vunpack.c.l.b16 %v308
    %v958 = vunpack.c.h.b16 %v308
    %v959 = vunpack.c.l.b16 %v309
    %v960 = vunpack.c.h.b16 %v309
    %v961 = vunpack.c.l.b16 %v310
    %v962 = vunpack.c.h.b16 %v310
    %v963 = vunpack.c.l.b16 %v311
    %v964 = vunpack.c.h.b16 %v311
    %v965 = vunpack.c.l.b16 %v312
    %v966 = vunpack.c.h.b16 %v312
    %v967 = vunpack.c.l.b16 %v313
    %v968 = vunpack.c.h.b16 %v313
    %v969 = vunpack.c.l.b16 %v314
    %v970 = vunpack.c.h.b16 %v314
    %v971 = vunpack.c.l.b16 %v315
    %v972 = vunpack.c.h.b16 %v315
    %v973 = vunpack.c.l.b16 %v316
    %v974 = vunpack.c.h.b16 %v316
    %v975 = vunpack.c.l.b16 %v317
    %v976 = vunpack.c.h.b16 %v317
    %v977 = vunpack.c.l.b16 %v318
    %v978 = vunpack.c.h.b16 %v318
    %v979 = vunpack.c.l.b16 %v319
    %v980 = vunpack.c.h.b16 %v319
    %v981 = vunpack.c.l.b16 %v320
    %v982 = vunpack.c.h.b16 %v320
    %v983 = vunpack.c.l.b16 %v321
    %v984 = vunpack.c.h.b16 %v321
    %v985 = vunpack.c.l.b16 %v322
    %v986 = vunpack.c.h.b16 %v322
    %v987 = vunpack.c.l.b16 %v323
    %v988 = vunpack.c.h.b16 %v323
    %v989 = vunpack.c.l.b16 %v324
    %v990 = vunpack.c.h.b16 %v324
    %v991 = vunpack.c.l.b16 %v325
    %v992 = vunpack.c.h.b16 %v325
    %v993 = vunpack.c.l.b16 %v326
    %v994 = vunpack.c.h.b16 %v326
    %v995 = vunpack.c.l.b16 %v327
    %v996 = vunpack.c.h.b16 %v327
    %v997 = vunpack.c.l.b16 %v328
    %v998 = vunpack.c.h.b16 %v328
    %v999 = vunpack.c.l.b16 %v329
    %v1000 = vunpack.c.h.b16 %v329
    %v1001 = vunpack.c.l.b16 %v330
    %v1002 = vunpack.c.h.b16 %v330
    %v1003 = vunpack.c.l.b16 %v331
    %v1004 = vunpack.c.h.b16 %v331
    %v1005 = vunpack.c.l.b16 %v332
    %v1006 = vunpack.c.h.b16 %v332
    %v1007 = vunpack.c.l.b16 %v333
    %v1008 = vunpack.c.h.b16 %v333
    %v1009 = vunpack.c.l.b16 %v334
    %v1010 = vunpack.c.h.b16 %v334
    %v1011 = vunpack.c.l.b16 %v335
    %v1012 = vunpack.c.h.b16 %v335
    %v1013 = vunpack.c.l.b16 %v336
    %v1014 = vunpack.c.h.b16 %v336
    %v1015 = vunpack.c.l.b16 %v337
    %v1016 = vunpack.c.h.b16 %v337
    %v1017 = vunpack.c.l.b16 %v338
    %v1018 = vunpack.c.h.b16 %v338
    %v1019 = vunpack.c.l.b16 %v339
    %v1020 = vunpack.c.h.b16 %v339
    %v1021 = vunpack.c.l.b16 %v340
    %v1022 = vunpack.c.h.b16 %v340
    %v1023 = vunpack.c.l.b16 %v341
    %v1024 = vunpack.c.h.b16 %v341
    %v1025 = vunpack.c.l.b16 %v342
    %v1026 = vunpack.c.h.b16 %v342
    %v1027 = vunpack.c.l.b16 %v343
    %v1028 = vunpack.c.h.b16 %v343
    %v1029 = vunpack.c.l.b16 %v344
    %v1030 = vunpack.c.h.b16 %v344
    %v1031 = vunpack.c.l.b16 %v345
    %v1032 = vunpack.c.h.b16 %v345
    %v1033 = vunpack.c.l.b16 %v346
    %v1034 = vunpack.c.h.b16 %v346
    %v1035 = vunpack.c.l.b16 %v347
    %v1036 = vunpack.c.h.b16 %v347
    %v1037 = vunpack.c.l.b16 %v348
    %v1038 = vunpack.c.h.b16 %v348
    %v1039 = vunpack.c.l.b16 %v349
    %v1040 = vunpack.c.h.b16 %v349
    %v1041 = vunpack.c.l.b16 %v350
    %v1042 = vunpack.c.h.b16 %v350
    %v1043 = vunpack.c.l.b16 %v351
    %v1044 = vunpack.c.h.b16 %v351
    %v1045 = vunpack.c.l.b16 %v352
    %v1046 = vunpack.c.h.b16 %v352
    %v1047 = vunpack.c.l.b16 %v353
    %v1048 = vunpack.c.h.b16 %v353
    %v1049 = vunpack.c.l.b16 %v354
    %v1050 = vunpack.c.h.b16 %v354
    %v1051 = vunpack.c.l.b16 %v355
    %v1052 = vunpack.c.h.b16 %v355
    %v1053 = vunpack.c.l.b16 %v356
    %v1054 = vunpack.c.h.b16 %v356
    %v1055 = vunpack.c.l.b16 %v357
    %v1056 = vunpack.c.h.b16 %v357
    %v1057 = vunpack.c.l.b16 %v358
    %v1058 = vunpack.c.h.b16 %v358
    %v1059 = vunpack.c.l.b16 %v359
    %v1060 = vunpack.c.h.b16 %v359
    %v1061 = vunpack.c.l.b16 %v360
    %v1062 = vunpack.c.h.b16 %v360
    %v1063 = vunpack.c.l.b16 %v361
    %v1064 = vunpack.c.h.b16 %v361
    %v1065 = vunpack.c.l.b16 %v362
    %v1066 = vunpack.c.h.b16 %v362
    %v1067 = vunpack.c.l.b16 %v363
    %v1068 = vunpack.c.h.b16 %v363
    %v1069 = vunpack.c.l.b16 %v364
    %v1070 = vunpack.c.h.b16 %v364
    %v1071 = vunpack.c.l.b16 %v365
    %v1072 = vunpack.c.h.b16 %v365
    %v1073 = vunpack.c.l.b16 %v366
    %v1074 = vunpack.c.h.b16 %v366
    %v1075 = vunpack.c.l.b16 %v367
    %v1076 = vunpack.c.h.b16 %v367
    %v1077 = vunpack.c.l.b16 %v368
    %v1078 = vunpack.c.h.b16 %v368
    %v1079 = vunpack.c.l.b16 %v369
    %v1080 = vunpack.c.h.b16 %v369
    %v1081 = vunpack.c.l.b16 %v370
    %v1082 = vunpack.c.h.b16 %v370
    %v1083 = vunpack.c.l.b16 %v371
    %v1084 = vunpack.c.h.b16 %v371
    %v1085 = vunpack.c.l.b16 %v372
    %v1086 = vunpack.c.h.b16 %v372
    %v1087 = vunpack.c.l.b16 %v373
    %v1088 = vunpack.c.h.b16 %v373
    %v1089 = vunpack.c.l.b16 %v374
    %v1090 = vunpack.c.h.b16 %v374
    %v1091 = vunpack.c.l.b16 %v375
    %v1092 = vunpack.c.h.b16 %v375
    %v1093 = vunpack.c.l.b16 %v376
    %v1094 = vunpack.c.h.b16 %v376
    %v1095 = vunpack.c.l.b16 %v377
    %v1096 = vunpack.c.h.b16 %v377
    %v1097 = vunpack.c.l.b16 %v378
    %v1098 = vunpack.c.h.b16 %v378
    %v1099 = vunpack.c.l.b16 %v379
    %v1100 = vunpack.c.h.b16 %v379
    %v1101 = vunpack.c.l.b16 %v380
    %v1102 = vunpack.c.h.b16 %v380
    %v1103 = vunpack.c.l.b16 %v381
    %v1104 = vunpack.c.h.b16 %v381
    %v1105 = vunpack.c.l.b16 %v382
    %v1106 = vunpack.c.h.b16 %v382
    %v1107 = vunpack.c.l.b16 %v383
    %v1108 = vunpack.c.h.b16 %v383
    %v1109 = vunpack.c.l.b16 %v384
    %v1110 = vunpack.c.h.b16 %v384
    %v1111 = vunpack.c.l.b16 %v385
    %v1112 = vunpack.c.h.b16 %v385
    %v1113 = vunpack.c.l.b16 %v386
    %v1114 = vunpack.c.h.b16 %v386
    %v1115 = vunpack.c.l.b16 %v387
    %v1116 = vunpack.c.h.b16 %v387
    %v1117 = vunpack.c.l.b16 %v388
    %v1118 = vunpack.c.h.b16 %v388
    %v1119 = vunpack.c.l.b16 %v389
    %v1120 = vunpack.c.h.b16 %v389
    %v1121 = vunpack.c.l.b16 %v390
    %v1122 = vunpack.c.h.b16 %v390
    %v1123 = vunpack.c.l.b16 %v391
    %v1124 = vunpack.c.h.b16 %v391
    %v1125 = vunpack.c.l.b16 %v392
    %v1126 = vunpack.c.h.b16 %v392
    %v1127 = vunpack.c.l.b16 %v393
    %v1128 = vunpack.c.h.b16 %v393
    %v1129 = vunpack.c.l.b16 %v394
    %v1130 = vunpack.c.h.b16 %v394
    %v1131 = vunpack.c.l.b16 %v395
    %v1132 = vunpack.c.h.b16 %v395
    %v1133 = vunpack.c.l.b16 %v396
    %v1134 = vunpack.c.h.b16 %v396
    %v1135 = vunpack.c.l.b16 %v397
    %v1136 = vunpack.c.h.b16 %v397
    %v1137 = vunpack.c.l.b16 %v398
    %v1138 = vunpack.c.h.b16 %v398
    %v1139 = vunpack.c.l.b16 %v399
    %v1140 = vunpack.c.h.b16 %v399
    %v1141 = vunpack.c.l.b16 %v400
    %v1142 = vunpack.c.h.b16 %v400
    %v1143 = vunpack.c.l.b16 %v401
    %v1144 = vunpack.c.h.b16 %v401
    %v1145 = vunpack.c.l.b16 %v402
    %v1146 = vunpack.c.h.b16 %v402
    %v1147 = vunpack.c.l.b16 %v403
    %v1148 = vunpack.c.h.b16 %v403
    %v1149 = vunpack.c.l.b16 %v404
    %v1150 = vunpack.c.h.b16 %v404
    %v1151 = vunpack.c.l.b16 %v405
    %v1152 = vunpack.c.h.b16 %v405
    %v1153 = vunpack.c.l.b16 %v406
    %v1154 = vunpack.c.h.b16 %v406
    %v1155 = vunpack.c.l.b16 %v407
    %v1156 = vunpack.c.h.b16 %v407
    %v1157 = vunpack.c.l.b16 %v408
    %v1158 = vunpack.c.h.b16 %v408
    %v1159 = vunpack.c.l.b16 %v409
    %v1160 = vunpack.c.h.b16 %v409
    %v1161 = vunpack.c.l.b16 %v410
    %v1162 = vunpack.c.h.b16 %v410
    %v1163 = vunpack.c.l.b16 %v411
    %v1164 = vunpack.c.h.b16 %v411
    %v1165 = vunpack.c.l.b16 %v412
    %v1166 = vunpack.c.h.b16 %v412
    %v1167 = vunpack.c.l.b16 %v413
    %v1168 = vunpack.c.h.b16 %v413
    %v1169 = vunpack.c.l.b16 %v414
    %v1170 = vunpack.c.h.b16 %v414
    %v1171 = vunpack.c.l.b16 %v415
    %v1172 = vunpack.c.h.b16 %v415
    %v1173 = vunpack.c.l.b16 %v416
    %v1174 = vunpack.c.h.b16 %v416
    %v1175 = vunpack.c.l.b16 %v417
    %v1176 = vunpack.c.h.b16 %v417
    %v1177 = vunpack.c.l.b16 %v418
    %v1178 = vunpack.c.h.b16 %v418
    %v1179 = vunpack.c.l.b16 %v419
    %v1180 = vunpack.c.h.b16 %v419
    %v1181 = vunpack.c.l.b16 %v420
    %v1182 = vunpack.c.h.b16 %v420
    %v1183 = vunpack.c.l.b16 %v421
    %v1184 = vunpack.c.h.b16 %v421
    %v1185 = vunpack.c.l.b16 %v422
    %v1186 = vunpack.c.h.b16 %v422
    %v1187 = vunpack.c.l.b16 %v423
    %v1188 = vunpack.c.h.b16 %v423
    %v1189 = vunpack.c.l.b16 %v424
    %v1190 = vunpack.c.h.b16 %v424
    %v1191 = vunpack.c.l.b16 %v425
    %v1192 = vunpack.c.h.b16 %v425
    %v1193 = vunpack.c.l.b16 %v426
    %v1194 = vunpack.c.h.b16 %v426
    %v1195 = vunpack.c.l.b16 %v427
    %v1196 = vunpack.c.h.b16 %v427
    %v1197 = vunpack.c.l.b16 %v428
    %v1198 = vunpack.c.h.b16 %v428
    %v1199 = vunpack.c.l.b16 %v429
    %v1200 = vunpack.c.h.b16 %v429
    %v1201 = vunpack.c.l.b16 %v430
    %v1202 = vunpack.c.h.b16 %v430
    %v1203 = vunpack.c.l.b16 %v431
    %v1204 = vunpack.c.h.b16 %v431
    %v1205 = vunpack.c.l.b16 %v432
    %v1206 = vunpack.c.h.b16 %v432
    %v1207 = vunpack.c.l.b16 %v433
    %v1208 = vunpack.c.h.b16 %v433
    %v1209 = vunpack.c.l.b16 %v434
    %v1210 = vunpack.c.h.b16 %v434
    %v1211 = vunpack.c.l.b16 %v435
    %v1212 = vunpack.c.h.b16 %v435
    %v1213 = vunpack.c.l.b16 %v436
    %v1214 = vunpack.c.h.b16 %v436
    %v1215 = vunpack.c.l.b16 %v437
    %v1216 = vunpack.c.h.b16 %v437
    %v1217 = vunpack.c.l.b16 %v438
    %v1218 = vunpack.c.h.b16 %v438
    %v1219 = vunpack.c.l.b16 %v439
    %v1220 = vunpack.c.h.b16 %v439
    %v1221 = vunpack.c.l.b16 %v440
    %v1222 = vunpack.c.h.b16 %v440
    %v1223 = vunpack.c.l.b16 %v441
    %v1224 = vunpack.c.h.b16 %v441
    %v1225 = vunpack.c.l.b16 %v442
    %v1226 = vunpack.c.h.b16 %v442
    %v1227 = vunpack.c.l.b16 %v443
    %v1228 = vunpack.c.h.b16 %v443
    %v1229 = vunpack.c.l.b16 %v444
    %v1230 = vunpack.c.h.b16 %v444
    %v1231 = vunpack.c.l.b16 %v445
    %v1232 = vunpack.c.h.b16 %v445
    %v1233 = vunpack.c.l.b16 %v446
    %v1234 = vunpack.c.h.b16 %v446
    %v1235 = vpack.c.b16 %v731, %v723
    %v1236 = vpack.c.b16 %v732, %v724
    %v1237 = vpack.c.b16 %v733, %v725
    %v1238 = vpack.c.b16 %v734, %v726
    %v1239 = vpack.c.b16 %v735, %v727
    %v1240 = vpack.c.b16 %v736, %v728
    %v1241 = vpack.c.b16 %v737, %v729
    %v1242 = vpack.c.b16 %v738, %v730
    %v1243 = vpack.c.b16 %v747, %v739
    %v1244 = vpack.c.b16 %v748, %v740
    %v1245 = vpack.c.b16 %v749, %v741
    %v1246 = vpack.c.b16 %v750, %v742
    %v1247 = vpack.c.b16 %v751, %v743
    %v1248 = vpack.c.b16 %v752, %v744
    %v1249 = vpack.c.b16 %v753, %v745
    %v1250 = vpack.c.b16 %v754, %v746
    %v1251 = vpack.c.b16 %v763, %v755
    %v1252 = vpack.c.b16 %v764, %v756
    %v1253 = vpack.c.b16 %v765, %v757
    %v1254 = vpack.c.b16 %v766, %v758
    %v1255 = vpack.c.b16 %v767, %v759
    %v1256 = vpack.c.b16 %v768, %v760
    %v1257 = vpack.c.b16 %v769, %v761
    %v1258 = vpack.c.b16 %v770, %v762
    %v1259 = vpack.c.b16 %v779, %v771
    %v1260 = vpack.c.b16 %v780, %v772
    %v1261 = vpack.c.b16 %v781, %v773
    %v1262 = vpack.c.b16 %v782, %v774
    %v1263 = vpack.c.b16 %v783, %v775
    %v1264 = vpack.c.b16 %v784, %v776
    %v1265 = vpack.c.b16 %v785, %v777
    %v1266 = vpack.c.b16 %v786, %v778
    %v1267 = vpack.c.b16 %v795, %v787
    %v1268 = vpack.c.b16 %v796, %v788
    %v1269 = vpack.c.b16 %v797, %v789
    %v1270 = vpack.c.b16 %v798, %v790
    %v1271 = vpack.c.b16 %v799, %v791
    %v1272 = vpack.c.b16 %v800, %v792
    %v1273 = vpack.c.b16 %v801, %v793
    %v1274 = vpack.c.b16 %v802, %v794
    %v1275 = vpack.c.b16 %v811, %v803
    %v1276 = vpack.c.b16 %v812, %v804
    %v1277 = vpack.c.b16 %v813, %v805
    %v1278 = vpack.c.b16 %v814, %v806
    %v1279 = vpack.c.b16 %v815, %v807
    %v1280 = vpack.c.b16 %v816, %v808
    %v1281 = vpack.c.b16 %v817, %v809
    %v1282 = vpack.c.b16 %v818, %v810
    %v1283 = vpack.c.b16 %v827, %v819
    %v1284 = vpack.c.b16 %v828, %v820
    %v1285 = vpack.c.b16 %v829, %v821
    %v1286 = vpack.c.b16 %v830, %v822
    %v1287 = vpack.c.b16 %v831, %v823
    %v1288 = vpack.c.b16 %v832, %v824
    %v1289 = vpack.c.b16 %v833, %v825
    %v1290 = vpack.c.b16 %v834, %v826
    %v1291 = vpack.c.b16 %v843, %v835
    %v1292 = vpack.c.b16 %v844, %v836
    %v1293 = vpack.c.b16 %v845, %v837
    %v1294 = vpack.c.b16 %v846, %v838
    %v1295 = vpack.c.b16 %v847, %v839
    %v1296 = vpack.c.b16 %v848, %v840
    %v1297 = vpack.c.b16 %v849, %v841
    %v1298 = vpack.c.b16 %v850, %v842
    %v1299 = vpack.c.b16 %v859, %v851
    %v1300 = vpack.c.b16 %v860, %v852
    %v1301 = vpack.c.b16 %v861, %v853
    %v1302 = vpack.c.b16 %v862, %v854
    %v1303 = vpack.c.b16 %v863, %v855
    %v1304 = vpack.c.b16 %v864, %v856
    %v1305 = vpack.c.b16 %v865, %v857
    %v1306 = vpack.c.b16 %v866, %v858
    %v1307 = vpack.c.b16 %v875, %v867
    %v1308 = vpack.c.b16 %v876, %v868
    %v1309 = vpack.c.b16 %v877, %v869
    %v1310 = vpack.c.b16 %v878, %v870
    %v1311 = vpack.c.b16 %v879, %v871
    %v1312 = vpack.c.b16 %v880, %v872
    %v1313 = vpack.c.b16 %v881, %v873
    %v1314 = vpack.c.b16 %v882, %v874
    %v1315 = vpack.c.b16 %v891, %v883
    %v1316 = vpack.c.b16 %v892, %v884
    %v1317 = vpack.c.b16 %v893, %v885
    %v1318 = vpack.c.b16 %v894, %v886
    %v1319 = vpack.c.b16 %v895, %v887
    %v1320 = vpack.c.b16 %v896, %v888
    %v1321 = vpack.c.b16 %v897, %v889
    %v1322 = vpack.c.b16 %v898, %v890
    %v1323 = vpack.c.b16 %v907, %v899
    %v1324 = vpack.c.b16 %v908, %v900
    %v1325 = vpack.c.b16 %v909, %v901
    %v1326 = vpack.c.b16 %v910, %v902
    %v1327 = vpack.c.b16 %v911, %v903
    %v1328 = vpack.c.b16 %v912, %v904
    %v1329 = vpack.c.b16 %v913, %v905
    %v1330 = vpack.c.b16 %v914, %v906
    %v1331 = vpack.c.b16 %v923, %v915
    %v1332 = vpack.c.b16 %v924, %v916
    %v1333 = vpack.c.b16 %v925, %v917
    %v1334 = vpack.c.b16 %v926, %v918
    %v1335 = vpack.c.b16 %v927, %v919
    %v1336 = vpack.c.b16 %v928, %v920
    %v1337 = vpack.c.b16 %v929, %v921
    %v1338 = vpack.c.b16 %v930, %v922
    %v1339 = vpack.c.b16 %v939, %v931
    %v1340 = vpack.c.b16 %v940, %v932
    %v1341 = vpack.c.b16 %v941, %v933
    %v1342 = vpack.c.b16 %v942, %v934
    %v1343 = vpack.c.b16 %v943, %v935
    %v1344 = vpack.c.b16 %v944, %v936
    %v1345 = vpack.c.b16 %v945, %v937
    %v1346 = vpack.c.b16 %v946, %v938
    %v1347 = vpack.c.b16 %v955, %v947
    %v1348 = vpack.c.b16 %v956, %v948
    %v1349 = vpack.c.b16 %v957, %v949
    %v1350 = vpack.c.b16 %v958, %v950
    %v1351 = vpack.c.b16 %v959, %v951
    %v1352 = vpack.c.b16 %v960, %v952
    %v1353 = vpack.c.b16 %v961, %v953
    %v1354 = vpack.c.b16 %v962, %v954
    %v1355 = vpack.c.b16 %v971, %v963
    %v1356 = vpack.c.b16 %v972, %v964
    %v1357 = vpack.c.b16 %v973, %v965
    %v1358 = vpack.c.b16 %v974, %v966
    %v1359 = vpack.c.b16 %v975, %v967
    %v1360 = vpack.c.b16 %v976, %v968
    %v1361 = vpack.c.b16 %v977, %v969
    %v1362 = vpack.c.b16 %v978, %v970
    %v1363 = vpack.c.b16 %v987, %v979
    %v1364 = vpack.c.b16 %v988, %v980
    %v1365 = vpack.c.b16 %v989, %v981
    %v1366 = vpack.c.b16 %v990, %v982
    %v1367 = vpack.c.b16 %v991, %v983
    %v1368 = vpack.c.b16 %v992, %v984
    %v1369 = vpack.c.b16 %v993, %v985
    %v1370 = vpack.c.b16 %v994, %v986
    %v1371 = vpack.c.b16 %v1003, %v995
    %v1372 = vpack.c.b16 %v1004, %v996
    %v1373 = vpack.c.b16 %v1005, %v997
    %v1374 = vpack.c.b16 %v1006, %v998
    %v1375 = vpack.c.b16 %v1007, %v999
    %v1376 = vpack.c.b16 %v1008, %v1000
    %v1377 = vpack.c.b16 %v1009, %v1001
    %v1378 = vpack.c.b16 %v1010, %v1002
    %v1379 = vpack.c.b16 %v1019, %v1011
    %v1380 = vpack.c.b16 %v1020, %v1012
    %v1381 = vpack.c.b16 %v1021, %v1013
    %v1382 = vpack.c.b16 %v1022, %v1014
    %v1383 = vpack.c.b16 %v1023, %v1015
    %v1384 = vpack.c.b16 %v1024, %v1016
    %v1385 = vpack.c.b16 %v1025, %v1017
    %v1386 = vpack.c.b16 %v1026, %v1018
    %v1387 = vpack.c.b16 %v1035, %v1027
    %v1388 = vpack.c.b16 %v1036, %v1028
    %v1389 = vpack.c.b16 %v1037, %v1029
    %v1390 = vpack.c.b16 %v1038, %v1030
    %v1391 = vpack.c.b16 %v1039, %v1031
    %v1392 = vpack.c.b16 %v1040, %v1032
    %v1393 = vpack.c.b16 %v1041, %v1033
    %v1394 = vpack.c.b16 %v1042, %v1034
    %v1395 = vpack.c.b16 %v1051, %v1043
    %v1396 = vpack.c.b16 %v1052, %v1044
    %v1397 = vpack.c.b16 %v1053, %v1045
    %v1398 = vpack.c.b16 %v1054, %v1046
    %v1399 = vpack.c.b16 %v1055, %v1047
    %v1400 = vpack.c.b16 %v1056, %v1048
    %v1401 = vpack.c.b16 %v1057, %v1049
    %v1402 = vpack.c.b16 %v1058, %v1050
    %v1403 = vpack.c.b16 %v1067, %v1059
    %v1404 = vpack.c.b16 %v1068, %v1060
    %v1405 = vpack.c.b16 %v1069, %v1061
    %v1406 = vpack.c.b16 %v1070, %v1062
    %v1407 = vpack.c.b16 %v1071, %v1063
    %v1408 = vpack.c.b16 %v1072, %v1064
    %v1409 = vpack.c.b16 %v1073, %v1065
    %v1410 = vpack.c.b16 %v1074, %v1066
    %v1411 = vpack.c.b16 %v1083, %v1075
    %v1412 = vpack.c.b16 %v1084, %v1076
    %v1413 = vpack.c.b16 %v1085, %v1077
    %v1414 = vpack.c.b16 %v1086, %v1078
    %v1415 = vpack.c.b16 %v1087, %v1079
    %v1416 = vpack.c.b16 %v1088, %v1080
    %v1417 = vpack.c.b16 %v1089, %v1081
    %v1418 = vpack.c.b16 %v1090, %v1082
    %v1419 = vpack.c.b16 %v1099, %v1091
    %v1420 = vpack.c.b16 %v1100, %v1092
    %v1421 = vpack.c.b16 %v1101, %v1093
    %v1422 = vpack.c.b16 %v1102, %v1094
    %v1423 = vpack.c.b16 %v1103, %v1095
    %v1424 = vpack.c.b16 %v1104, %v1096
    %v1425 = vpack.c.b16 %v1105, %v1097
    %v1426 = vpack.c.b16 %v1106, %v1098
    %v1427 = vpack.c.b16 %v1115, %v1107
    %v1428 = vpack.c.b16 %v1116, %v1108
    %v1429 = vpack.c.b16 %v1117, %v1109
    %v1430 = vpack.c.b16 %v1118, %v1110
    %v1431 = vpack.c.b16 %v1119, %v1111
    %v1432 = vpack.c.b16 %v1120, %v1112
    %v1433 = vpack.c.b16 %v1121, %v1113
    %v1434 = vpack.c.b16 %v1122, %v1114
    %v1435 = vpack.c.b16 %v1131, %v1123
    %v1436 = vpack.c.b16 %v1132, %v1124
    %v1437 = vpack.c.b16 %v1133, %v1125
    %v1438 = vpack.c.b16 %v1134, %v1126
    %v1439 = vpack.c.b16 %v1135, %v1127
    %v1440 = vpack.c.b16 %v1136, %v1128
    %v1441 = vpack.c.b16 %v1137, %v1129
    %v1442 = vpack.c.b16 %v1138, %v1130
    %v1443 = vpack.c.b16 %v1147, %v1139
    %v1444 = vpack.c.b16 %v1148, %v1140
    %v1445 = vpack.c.b16 %v1149, %v1141
    %v1446 = vpack.c.b16 %v1150, %v1142
    %v1447 = vpack.c.b16 %v1151, %v1143
    %v1448 = vpack.c.b16 %v1152, %v1144
    %v1449 = vpack.c.b16 %v1153, %v1145
    %v1450 = vpack.c.b16 %v1154, %v1146
    %v1451 = vpack.c.b16 %v1163, %v1155
    %v1452 = vpack.c.b16 %v1164, %v1156
    %v1453 = vpack.c.b16 %v1165, %v1157
    %v1454 = vpack.c.b16 %v1166, %v1158
    %v1455 = vpack.c.b16 %v1167, %v1159
    %v1456 = vpack.c.b16 %v1168, %v1160
    %v1457 = vpack.c.b16 %v1169, %v1161
    %v1458 = vpack.c.b16 %v1170, %v1162
    %v1459 = vpack.c.b16 %v1179, %v1171
    %v1460 = vpack.c.b16 %v1180, %v1172
    %v1461 = vpack.c.b16 %v1181, %v1173
    %v1462 = vpack.c.b16 %v1182, %v1174
    %v1463 = vpack.c.b16 %v1183, %v1175
    %v1464 = vpack.c.b16 %v1184, %v1176
    %v1465 = vpack.c.b16 %v1185, %v1177
    %v1466 = vpack.c.b16 %v1186, %v1178
    %v1467 = vpack.c.b16 %v1195, %v1187
    %v1468 = vpack.c.b16 %v1196, %v1188
    %v1469 = vpack.c.b16 %v1197, %v1189
    %v1470 = vpack.c.b16 %v1198, %v1190
    %v1471 = vpack.c.b16 %v1199, %v1191
    %v1472 = vpack.c.b16 %v1200, %v1192
    %v1473 = vpack.c.b16 %v1201, %v1193
    %v1474 = vpack.c.b16 %v1202, %v1194
    %v1475 = vpack.c.b16 %v1211, %v1203
    %v1476 = vpack.c.b16 %v1212, %v1204
    %v1477 = vpack.c.b16 %v1213, %v1205
    %v1478 = vpack.c.b16 %v1214, %v1206
    %v1479 = vpack.c.b16 %v1215, %v1207
    %v1480 = vpack.c.b16 %v1216, %v1208
    %v1481 = vpack.c.b16 %v1217, %v1209
    %v1482 = vpack.c.b16 %v1218, %v1210
    %v1483 = vpack.c.b16 %v1227, %v1219
    %v1484 = vpack.c.b16 %v1228, %v1220
    %v1485 = vpack.c.b16 %v1229, %v1221
    %v1486 = vpack.c.b16 %v1230, %v1222
    %v1487 = vpack.c.b16 %v1231, %v1223
    %v1488 = vpack.c.b16 %v1232, %v1224
    %v1489 = vpack.c.b16 %v1233, %v1225
    %v1490 = vpack.c.b16 %v1234, %v1226
    %1747 = vmatprep.subr.bf16.mxu0 %v1236
    %1748 = vmatpush1.bf16.msra.mxu0 %v1235
    %1749 = vmatprep.subr.bf16.mxu0 %v1244
    %1750 = vmatpush1.bf16.msra.mxu0 %v1243
    %1751 = vmatprep.subr.bf16.mxu0 %v1252
    %1752 = vmatpush1.bf16.msra.mxu0 %v1251
    %1753 = vmatprep.subr.bf16.mxu0 %v1260
    %1754 = vmatpush1.bf16.msra.mxu0 %v1259
    %1755 = vmatprep.subr.bf16.mxu0 %v1268
    %1756 = vmatpush1.bf16.msra.mxu0 %v1267
    %1757 = vmatprep.subr.bf16.mxu0 %v1276
    %1758 = vmatpush1.bf16.msra.mxu0 %v1275
    %1759 = vmatprep.subr.bf16.mxu0 %v1284
    %1760 = vmatpush1.bf16.msra.mxu0 %v1283
    %1761 = vmatprep.subr.bf16.mxu0 %v1292
    %1762 = vmatpush1.bf16.msra.mxu0 %v1291
    %1763 = vmatprep.subr.bf16.mxu0 %v1300
    %1764 = vmatpush1.bf16.msra.mxu0 %v1299
    %1765 = vmatprep.subr.bf16.mxu0 %v1308
    %1766 = vmatpush1.bf16.msra.mxu0 %v1307
    %1767 = vmatprep.subr.bf16.mxu0 %v1316
    %1768 = vmatpush1.bf16.msra.mxu0 %v1315
    %1769 = vmatprep.subr.bf16.mxu0 %v1324
    %1770 = vmatpush1.bf16.msra.mxu0 %v1323
    %1771 = vmatprep.subr.bf16.mxu0 %v1332
    %1772 = vmatpush1.bf16.msra.mxu0 %v1331
    %1773 = vmatprep.subr.bf16.mxu0 %v1340
    %1774 = vmatpush1.bf16.msra.mxu0 %v1339
    %1775 = vmatprep.subr.bf16.mxu0 %v1348
    %1776 = vmatpush1.bf16.msra.mxu0 %v1347
    %1777 = vmatprep.subr.bf16.mxu0 %v1356
    %1778 = vmatpush1.bf16.msra.mxu0 %v1355
    %1779 = vmatprep.mubr.bf16.mxu0 %v460
    %1780 = vmatmul.mubr.bf16.gmra.mrb[0].mxu0 %v459
    %v1781 = vpop.f32.mrb[0].mxu0
    %v1782 = vadd.f32 0.0, %v1781
    %v1783 = vpop.f32.mrb[0].mxu0
    %v1784 = vadd.f32 0.0, %v1783
    %v1785 = vpop.f32.mrb[0].mxu0
    %v1786 = vadd.f32 0.0, %v1785
    %v1787 = vpop.f32.mrb[0].mxu0
    %v1788 = vadd.f32 0.0, %v1787
    %1789 = vdwg.mxu0
    %1790 = vmatprep.subr.bf16.mxu0 %v1364
    %1791 = vmatpush1.bf16.msra.mxu0 %v1363
    %1792 = vmatprep.subr.bf16.mxu0 %v1372
    %1793 = vmatpush1.bf16.msra.mxu0 %v1371
    %1794 = vmatprep.subr.bf16.mxu0 %v1380
    %1795 = vmatpush1.bf16.msra.mxu0 %v1379
    %1796 = vmatprep.subr.bf16.mxu0 %v1388
    %1797 = vmatpush1.bf16.msra.mxu0 %v1387
    %1798 = vmatprep.subr.bf16.mxu0 %v1396
    %1799 = vmatpush1.bf16.msra.mxu0 %v1395
    %1800 = vmatprep.subr.bf16.mxu0 %v1404
    %1801 = vmatpush1.bf16.msra.mxu0 %v1403
    %1802 = vmatprep.subr.bf16.mxu0 %v1412
    %1803 = vmatpush1.bf16.msra.mxu0 %v1411
    %1804 = vmatprep.subr.bf16.mxu0 %v1420
    %1805 = vmatpush1.bf16.msra.mxu0 %v1419
    %1806 = vmatprep.subr.bf16.mxu0 %v1428
    %1807 = vmatpush1.bf16.msra.mxu0 %v1427
    %1808 = vmatprep.subr.bf16.mxu0 %v1436
    %1809 = vmatpush1.bf16.msra.mxu0 %v1435
    %1810 = vmatprep.subr.bf16.mxu0 %v1444
    %1811 = vmatpush1.bf16.msra.mxu0 %v1443
    %1812 = vmatprep.subr.bf16.mxu0 %v1452
    %1813 = vmatpush1.bf16.msra.mxu0 %v1451
    %1814 = vmatprep.subr.bf16.mxu0 %v1460
    %1815 = vmatpush1.bf16.msra.mxu0 %v1459
    %1816 = vmatprep.subr.bf16.mxu0 %v1468
    %1817 = vmatpush1.bf16.msra.mxu0 %v1467
    %1818 = vmatprep.subr.bf16.mxu0 %v1476
    %1819 = vmatpush1.bf16.msra.mxu0 %v1475
    %1820 = vmatprep.subr.bf16.mxu0 %v1484
    %1821 = vmatpush1.bf16.msra.mxu0 %v1483
    %1822 = vmatprep.mubr.bf16.mxu0 %v462
    %1823 = vmatmul.mubr.bf16.gmra.mrb[0].mxu0 %v461
    %v1824 = vpop.f32.mrb[0].mxu0
    %v1825 = vadd.f32 %v1782, %v1824
    %v1826 = vpop.f32.mrb[0].mxu0
    %v1827 = vadd.f32 %v1784, %v1826
    %v1828 = vpop.f32.mrb[0].mxu0
    %v1829 = vadd.f32 %v1786, %v1828
    %v1830 = vpop.f32.mrb[0].mxu0
    %v1831 = vadd.f32 %v1788, %v1830
    %1832 = vdwg.mxu0
    %1833 = vmatprep.subr.bf16.mxu0 %v1238
    %1834 = vmatpush1.bf16.msra.mxu0 %v1237
    %1835 = vmatprep.subr.bf16.mxu0 %v1246
    %1836 = vmatpush1.bf16.msra.mxu0 %v1245
    %1837 = vmatprep.subr.bf16.mxu0 %v1254
    %1838 = vmatpush1.bf16.msra.mxu0 %v1253
    %1839 = vmatprep.subr.bf16.mxu0 %v1262
    %1840 = vmatpush1.bf16.msra.mxu0 %v1261
    %1841 = vmatprep.subr.bf16.mxu0 %v1270
    %1842 = vmatpush1.bf16.msra.mxu0 %v1269
    %1843 = vmatprep.subr.bf16.mxu0 %v1278
    %1844 = vmatpush1.bf16.msra.mxu0 %v1277
    %1845 = vmatprep.subr.bf16.mxu0 %v1286
    %1846 = vmatpush1.bf16.msra.mxu0 %v1285
    %1847 = vmatprep.subr.bf16.mxu0 %v1294
    %1848 = vmatpush1.bf16.msra.mxu0 %v1293
    %1849 = vmatprep.subr.bf16.mxu0 %v1302
    %1850 = vmatpush1.bf16.msra.mxu0 %v1301
    %1851 = vmatprep.subr.bf16.mxu0 %v1310
    %1852 = vmatpush1.bf16.msra.mxu0 %v1309
    %1853 = vmatprep.subr.bf16.mxu0 %v1318
    %1854 = vmatpush1.bf16.msra.mxu0 %v1317
    %1855 = vmatprep.subr.bf16.mxu0 %v1326
    %1856 = vmatpush1.bf16.msra.mxu0 %v1325
    %1857 = vmatprep.subr.bf16.mxu0 %v1334
    %1858 = vmatpush1.bf16.msra.mxu0 %v1333
    %1859 = vmatprep.subr.bf16.mxu0 %v1342
    %1860 = vmatpush1.bf16.msra.mxu0 %v1341
    %1861 = vmatprep.subr.bf16.mxu0 %v1350
    %1862 = vmatpush1.bf16.msra.mxu0 %v1349
    %1863 = vmatprep.subr.bf16.mxu0 %v1358
    %1864 = vmatpush1.bf16.msra.mxu0 %v1357
    %1865 = vmatprep.mubr.bf16.mxu0 %v460
    %1866 = vmatmul.mubr.bf16.gmra.mrb[0].mxu0 %v459
    %v1867 = vpop.f32.mrb[0].mxu0
    %v1868 = vadd.f32 0.0, %v1867
    %v1869 = vpop.f32.mrb[0].mxu0
    %v1870 = vadd.f32 0.0, %v1869
    %v1871 = vpop.f32.mrb[0].mxu0
    %v1872 = vadd.f32 0.0, %v1871
    %v1873 = vpop.f32.mrb[0].mxu0
    %v1874 = vadd.f32 0.0, %v1873
    %1875 = vdwg.mxu0
    %1876 = vmatprep.subr.bf16.mxu0 %v1366
    %1877 = vmatpush1.bf16.msra.mxu0 %v1365
    %1878 = vmatprep.subr.bf16.mxu0 %v1374
    %1879 = vmatpush1.bf16.msra.mxu0 %v1373
    %1880 = vmatprep.subr.bf16.mxu0 %v1382
    %1881 = vmatpush1.bf16.msra.mxu0 %v1381
    %1882 = vmatprep.subr.bf16.mxu0 %v1390
    %1883 = vmatpush1.bf16.msra.mxu0 %v1389
    %1884 = vmatprep.subr.bf16.mxu0 %v1398
    %1885 = vmatpush1.bf16.msra.mxu0 %v1397
    %1886 = vmatprep.subr.bf16.mxu0 %v1406
    %1887 = vmatpush1.bf16.msra.mxu0 %v1405
    %1888 = vmatprep.subr.bf16.mxu0 %v1414
    %1889 = vmatpush1.bf16.msra.mxu0 %v1413
    %1890 = vmatprep.subr.bf16.mxu0 %v1422
    %1891 = vmatpush1.bf16.msra.mxu0 %v1421
    %1892 = vmatprep.subr.bf16.mxu0 %v1430
    %1893 = vmatpush1.bf16.msra.mxu0 %v1429
    %1894 = vmatprep.subr.bf16.mxu0 %v1438
    %1895 = vmatpush1.bf16.msra.mxu0 %v1437
    %1896 = vmatprep.subr.bf16.mxu0 %v1446
    %1897 = vmatpush1.bf16.msra.mxu0 %v1445
    %1898 = vmatprep.subr.bf16.mxu0 %v1454
    %1899 = vmatpush1.bf16.msra.mxu0 %v1453
    %1900 = vmatprep.subr.bf16.mxu0 %v1462
    %1901 = vmatpush1.bf16.msra.mxu0 %v1461
    %1902 = vmatprep.subr.bf16.mxu0 %v1470
    %1903 = vmatpush1.bf16.msra.mxu0 %v1469
    %1904 = vmatprep.subr.bf16.mxu0 %v1478
    %1905 = vmatpush1.bf16.msra.mxu0 %v1477
    %1906 = vmatprep.subr.bf16.mxu0 %v1486
    %1907 = vmatpush1.bf16.msra.mxu0 %v1485
    %1908 = vmatprep.mubr.bf16.mxu0 %v462
    %1909 = vmatmul.mubr.bf16.gmra.mrb[0].mxu0 %v461
    %v1910 = vpop.f32.mrb[0].mxu0
    %v1911 = vadd.f32 %v1868, %v1910
    %v1912 = vpop.f32.mrb[0].mxu0
    %v1913 = vadd.f32 %v1870, %v1912
    %v1914 = vpop.f32.mrb[0].mxu0
    %v1915 = vadd.f32 %v1872, %v1914
    %v1916 = vpop.f32.mrb[0].mxu0
    %v1917 = vadd.f32 %v1874, %v1916
    %1918 = vdwg.mxu0
    %1919 = vmatprep.subr.bf16.mxu0 %v1240
    %1920 = vmatpush1.bf16.msra.mxu0 %v1239
    %1921 = vmatprep.subr.bf16.mxu0 %v1248
    %1922 = vmatpush1.bf16.msra.mxu0 %v1247
    %1923 = vmatprep.subr.bf16.mxu0 %v1256
    %1924 = vmatpush1.bf16.msra.mxu0 %v1255
    %1925 = vmatprep.subr.bf16.mxu0 %v1264
    %1926 = vmatpush1.bf16.msra.mxu0 %v1263
    %1927 = vmatprep.subr.bf16.mxu0 %v1272
    %1928 = vmatpush1.bf16.msra.mxu0 %v1271
    %1929 = vmatprep.subr.bf16.mxu0 %v1280
    %1930 = vmatpush1.bf16.msra.mxu0 %v1279
    %1931 = vmatprep.subr.bf16.mxu0 %v1288
    %1932 = vmatpush1.bf16.msra.mxu0 %v1287
    %1933 = vmatprep.subr.bf16.mxu0 %v1296
    %1934 = vmatpush1.bf16.msra.mxu0 %v1295
    %1935 = vmatprep.subr.bf16.mxu0 %v1304
    %1936 = vmatpush1.bf16.msra.mxu0 %v1303
    %1937 = vmatprep.subr.bf16.mxu0 %v1312
    %1938 = vmatpush1.bf16.msra.mxu0 %v1311
    %1939 = vmatprep.subr.bf16.mxu0 %v1320
    %1940 = vmatpush1.bf16.msra.mxu0 %v1319
    %1941 = vmatprep.subr.bf16.mxu0 %v1328
    %1942 = vmatpush1.bf16.msra.mxu0 %v1327
    %1943 = vmatprep.subr.bf16.mxu0 %v1336
    %1944 = vmatpush1.bf16.msra.mxu0 %v1335
    %1945 = vmatprep.subr.bf16.mxu0 %v1344
    %1946 = vmatpush1.bf16.msra.mxu0 %v1343
    %1947 = vmatprep.subr.bf16.mxu0 %v1352
    %1948 = vmatpush1.bf16.msra.mxu0 %v1351
    %1949 = vmatprep.subr.bf16.mxu0 %v1360
    %1950 = vmatpush1.bf16.msra.mxu0 %v1359
    %1951 = vmatprep.mubr.bf16.mxu0 %v460
    %1952 = vmatmul.mubr.bf16.gmra.mrb[0].mxu0 %v459
    %v1953 = vpop.f32.mrb[0].mxu0
    %v1954 = vadd.f32 0.0, %v1953
    %v1955 = vpop.f32.mrb[0].mxu0
    %v1956 = vadd.f32 0.0, %v1955
    %v1957 = vpop.f32.mrb[0].mxu0
    %v1958 = vadd.f32 0.0, %v1957
    %v1959 = vpop.f32.mrb[0].mxu0
    %v1960 = vadd.f32 0.0, %v1959
    %1961 = vdwg.mxu0
    %1962 = vmatprep.subr.bf16.mxu0 %v1368
    %1963 = vmatpush1.bf16.msra.mxu0 %v1367
    %1964 = vmatprep.subr.bf16.mxu0 %v1376
    %1965 = vmatpush1.bf16.msra.mxu0 %v1375
    %1966 = vmatprep.subr.bf16.mxu0 %v1384
    %1967 = vmatpush1.bf16.msra.mxu0 %v1383
    %1968 = vmatprep.subr.bf16.mxu0 %v1392
    %1969 = vmatpush1.bf16.msra.mxu0 %v1391
    %1970 = vmatprep.subr.bf16.mxu0 %v1400
    %1971 = vmatpush1.bf16.msra.mxu0 %v1399
    %1972 = vmatprep.subr.bf16.mxu0 %v1408
    %1973 = vmatpush1.bf16.msra.mxu0 %v1407
    %1974 = vmatprep.subr.bf16.mxu0 %v1416
    %1975 = vmatpush1.bf16.msra.mxu0 %v1415
    %1976 = vmatprep.subr.bf16.mxu0 %v1424
    %1977 = vmatpush1.bf16.msra.mxu0 %v1423
    %1978 = vmatprep.subr.bf16.mxu0 %v1432
    %1979 = vmatpush1.bf16.msra.mxu0 %v1431
    %1980 = vmatprep.subr.bf16.mxu0 %v1440
    %1981 = vmatpush1.bf16.msra.mxu0 %v1439
    %1982 = vmatprep.subr.bf16.mxu0 %v1448
    %1983 = vmatpush1.bf16.msra.mxu0 %v1447
    %1984 = vmatprep.subr.bf16.mxu0 %v1456
    %1985 = vmatpush1.bf16.msra.mxu0 %v1455
    %1986 = vmatprep.subr.bf16.mxu0 %v1464
    %1987 = vmatpush1.bf16.msra.mxu0 %v1463
    %1988 = vmatprep.subr.bf16.mxu0 %v1472
    %1989 = vmatpush1.bf16.msra.mxu0 %v1471
    %1990 = vmatprep.subr.bf16.mxu0 %v1480
    %1991 = vmatpush1.bf16.msra.mxu0 %v1479
    %1992 = vmatprep.subr.bf16.mxu0 %v1488
    %1993 = vmatpush1.bf16.msra.mxu0 %v1487
    %1994 = vmatprep.mubr.bf16.mxu0 %v462
    %1995 = vmatmul.mubr.bf16.gmra.mrb[0].mxu0 %v461
    %v1996 = vpop.f32.mrb[0].mxu0
    %v1997 = vadd.f32 %v1954, %v1996
    %v1998 = vpop.f32.mrb[0].mxu0
    %v1999 = vadd.f32 %v1956, %v1998
    %v2000 = vpop.f32.mrb[0].mxu0
    %v2001 = vadd.f32 %v1958, %v2000
    %v2002 = vpop.f32.mrb[0].mxu0
    %v2003 = vadd.f32 %v1960, %v2002
    %2004 = vdwg.mxu0
    %2005 = vmatprep.subr.bf16.mxu0 %v1242
    %2006 = vmatpush1.bf16.msra.mxu0 %v1241
    %2007 = vmatprep.subr.bf16.mxu0 %v1250
    %2008 = vmatpush1.bf16.msra.mxu0 %v1249
    %2009 = vmatprep.subr.bf16.mxu0 %v1258
    %2010 = vmatpush1.bf16.msra.mxu0 %v1257
    %2011 = vmatprep.subr.bf16.mxu0 %v1266
    %2012 = vmatpush1.bf16.msra.mxu0 %v1265
    %2013 = vmatprep.subr.bf16.mxu0 %v1274
    %2014 = vmatpush1.bf16.msra.mxu0 %v1273
    %2015 = vmatprep.subr.bf16.mxu0 %v1282
    %2016 = vmatpush1.bf16.msra.mxu0 %v1281
    %2017 = vmatprep.subr.bf16.mxu0 %v1290
    %2018 = vmatpush1.bf16.msra.mxu0 %v1289
    %2019 = vmatprep.subr.bf16.mxu0 %v1298
    %2020 = vmatpush1.bf16.msra.mxu0 %v1297
    %2021 = vmatprep.subr.bf16.mxu0 %v1306
    %2022 = vmatpush1.bf16.msra.mxu0 %v1305
    %2023 = vmatprep.subr.bf16.mxu0 %v1314
    %2024 = vmatpush1.bf16.msra.mxu0 %v1313
    %2025 = vmatprep.subr.bf16.mxu0 %v1322
    %2026 = vmatpush1.bf16.msra.mxu0 %v1321
    %2027 = vmatprep.subr.bf16.mxu0 %v1330
    %2028 = vmatpush1.bf16.msra.mxu0 %v1329
    %2029 = vmatprep.subr.bf16.mxu0 %v1338
    %2030 = vmatpush1.bf16.msra.mxu0 %v1337
    %2031 = vmatprep.subr.bf16.mxu0 %v1346
    %2032 = vmatpush1.bf16.msra.mxu0 %v1345
    %2033 = vmatprep.subr.bf16.mxu0 %v1354
    %2034 = vmatpush1.bf16.msra.mxu0 %v1353
    %2035 = vmatprep.subr.bf16.mxu0 %v1362
    %2036 = vmatpush1.bf16.msra.mxu0 %v1361
    %2037 = vmatprep.mubr.bf16.mxu0 %v460
    %2038 = vmatmul.mubr.bf16.gmra.mrb[0].mxu0 %v459
    %v2039 = vpop.f32.mrb[0].mxu0
    %v2040 = vadd.f32 0.0, %v2039
    %v2041 = vpop.f32.mrb[0].mxu0
    %v2042 = vadd.f32 0.0, %v2041
    %v2043 = vpop.f32.mrb[0].mxu0
    %v2044 = vadd.f32 0.0, %v2043
    %v2045 = vpop.f32.mrb[0].mxu0
    %v2046 = vadd.f32 0.0, %v2045
    %2047 = vdwg.mxu0
    %2048 = vmatprep.subr.bf16.mxu0 %v1370
    %2049 = vmatpush1.bf16.msra.mxu0 %v1369
    %2050 = vmatprep.subr.bf16.mxu0 %v1378
    %2051 = vmatpush1.bf16.msra.mxu0 %v1377
    %2052 = vmatprep.subr.bf16.mxu0 %v1386
    %2053 = vmatpush1.bf16.msra.mxu0 %v1385
    %2054 = vmatprep.subr.bf16.mxu0 %v1394
    %2055 = vmatpush1.bf16.msra.mxu0 %v1393
    %2056 = vmatprep.subr.bf16.mxu0 %v1402
    %2057 = vmatpush1.bf16.msra.mxu0 %v1401
    %2058 = vmatprep.subr.bf16.mxu0 %v1410
    %2059 = vmatpush1.bf16.msra.mxu0 %v1409
    %2060 = vmatprep.subr.bf16.mxu0 %v1418
    %2061 = vmatpush1.bf16.msra.mxu0 %v1417
    %2062 = vmatprep.subr.bf16.mxu0 %v1426
    %2063 = vmatpush1.bf16.msra.mxu0 %v1425
    %2064 = vmatprep.subr.bf16.mxu0 %v1434
    %2065 = vmatpush1.bf16.msra.mxu0 %v1433
    %2066 = vmatprep.subr.bf16.mxu0 %v1442
    %2067 = vmatpush1.bf16.msra.mxu0 %v1441
    %2068 = vmatprep.subr.bf16.mxu0 %v1450
    %2069 = vmatpush1.bf16.msra.mxu0 %v1449
    %2070 = vmatprep.subr.bf16.mxu0 %v1458
    %2071 = vmatpush1.bf16.msra.mxu0 %v1457
    %2072 = vmatprep.subr.bf16.mxu0 %v1466
    %2073 = vmatpush1.bf16.msra.mxu0 %v1465
    %2074 = vmatprep.subr.bf16.mxu0 %v1474
    %2075 = vmatpush1.bf16.msra.mxu0 %v1473
    %2076 = vmatprep.subr.bf16.mxu0 %v1482
    %2077 = vmatpush1.bf16.msra.mxu0 %v1481
    %2078 = vmatprep.subr.bf16.mxu0 %v1490
    %2079 = vmatpush1.bf16.msra.mxu0 %v1489
    %2080 = vmatprep.mubr.bf16.mxu0 %v462
    %2081 = vmatmul.mubr.bf16.gmra.mrb[0].mxu0 %v461
    %v2082 = vpop.f32.mrb[0].mxu0
    %v2083 = vadd.f32 %v2040, %v2082
    %v2084 = vpop.f32.mrb[0].mxu0
    %v2085 = vadd.f32 %v2042, %v2084
    %v2086 = vpop.f32.mrb[0].mxu0
    %v2087 = vadd.f32 %v2044, %v2086
    %v2088 = vpop.f32.mrb[0].mxu0
    %v2089 = vadd.f32 %v2046, %v2088
    %2090 = vdwg.mxu0
    %v2091 = vadd.f32 %v171, %v1825
    %v2092 = vadd.f32 %v172, %v1827
    %v2093 = vadd.f32 %v173, %v1911
    %v2094 = vadd.f32 %v174, %v1913
    %v2095 = vadd.f32 %v175, %v1997
    %v2096 = vadd.f32 %v176, %v1999
    %v2097 = vadd.f32 %v177, %v2083
    %v2098 = vadd.f32 %v178, %v2085
    %v2099 = vadd.f32 %v179, %v1829
    %v2100 = vadd.f32 %v180, %v1831
    %v2101 = vadd.f32 %v181, %v1915
    %v2102 = vadd.f32 %v182, %v1917
    %v2103 = vadd.f32 %v183, %v2001
    %v2104 = vadd.f32 %v184, %v2003
    %v2105 = vadd.f32 %v185, %v2087
    %v2106 = vadd.f32 %v186, %v2089
    %2107 = vst [vmem:[#allocation2] sm:$0xff] %v2091
    %2108 = vst [vmem:[#allocation2 + $0x8] sm:$0xff] %v2092
    %2109 = vst [vmem:[#allocation2 + $0x10] sm:$0xff] %v2093
    %2110 = vst [vmem:[#allocation2 + $0x18] sm:$0xff] %v2094
    %2111 = vst [vmem:[#allocation2 + $0x20] sm:$0xff] %v2095
    %2112 = vst [vmem:[#allocation2 + $0x28] sm:$0xff] %v2096
    %2113 = vst [vmem:[#allocation2 + $0x30] sm:$0xff] %v2097
    %2114 = vst [vmem:[#allocation2 + $0x38] sm:$0xff] %v2098
    %2115 = vst [vmem:[#allocation2 + $0x40] sm:$0xff] %v2099
    %2116 = vst [vmem:[#allocation2 + $0x48] sm:$0xff] %v2100
    %2117 = vst [vmem:[#allocation2 + $0x50] sm:$0xff] %v2101
    %2118 = vst [vmem:[#allocation2 + $0x58] sm:$0xff] %v2102
    %2119 = vst [vmem:[#allocation2 + $0x60] sm:$0xff] %v2103
    %2120 = vst [vmem:[#allocation2 + $0x68] sm:$0xff] %v2104
    %2121 = vst [vmem:[#allocation2 + $0x70] sm:$0xff] %v2105
    %2122 = vst [vmem:[#allocation2 + $0x78] sm:$0xff] %v2106
    // Predicated region
    $region78: #{tpu_custom_call.1} parent=1 // pred_check
      %p2123 = pneg %p151
    $region79: #{tpu_custom_call.1} parent=1 // pred_check_branch
      %2125 = sbr.rel (%p2123) target = $region81
    $region80: #{tpu_custom_call.1} parent=1 // pred_region
      %v2126 = vld [vmem:[#allocation2] sm:$0xff]
      %v2127 = vld [vmem:[#allocation2 + $0x8] sm:$0xff]
      %v2128 = vld [vmem:[#allocation2 + $0x10] sm:$0xff]
      %v2129 = vld [vmem:[#allocation2 + $0x18] sm:$0xff]
      %v2130 = vld [vmem:[#allocation2 + $0x20] sm:$0xff]
      %v2131 = vld [vmem:[#allocation2 + $0x28] sm:$0xff]
      %v2132 = vld [vmem:[#allocation2 + $0x30] sm:$0xff]
      %v2133 = vld [vmem:[#allocation2 + $0x38] sm:$0xff]
      %v2134 = vld [vmem:[#allocation2 + $0x40] sm:$0xff]
      %v2135 = vld [vmem:[#allocation2 + $0x48] sm:$0xff]
      %v2136 = vld [vmem:[#allocation2 + $0x50] sm:$0xff]
      %v2137 = vld [vmem:[#allocation2 + $0x58] sm:$0xff]
      %v2138 = vld [vmem:[#allocation2 + $0x60] sm:$0xff]
      %v2139 = vld [vmem:[#allocation2 + $0x68] sm:$0xff]
      %v2140 = vld [vmem:[#allocation2 + $0x70] sm:$0xff]
      %v2141 = vld [vmem:[#allocation2 + $0x78] sm:$0xff]
      %v2142 = vld [vmem:[#allocation8] sm:$0xff]
      %v2144 = vlaneseq
      %v2145 = vshrl.u32 %v2144, 7
      %v2146 = vsub.s32 0, %v2145
      %v2147 = vrot.slane %v2142, %v2146
      %v2148 = vlaneseq
      %v2149 = vshrl.u32 %v2148, 7
      %v2150 = vsub.s32 1, %v2149
      %v2151 = vrot.slane %v2142, %v2150
      %v2152 = vlaneseq
      %v2153 = vshrl.u32 %v2152, 7
      %v2154 = vsub.s32 2, %v2153
      %v2155 = vrot.slane %v2142, %v2154
      %v2156 = vlaneseq
      %v2157 = vshrl.u32 %v2156, 7
      %v2158 = vsub.s32 3, %v2157
      %v2159 = vrot.slane %v2142, %v2158
      %v2160 = vlaneseq
      %v2161 = vshrl.u32 %v2160, 7
      %v2162 = vsub.s32 4, %v2161
      %v2163 = vrot.slane %v2142, %v2162
      %v2164 = vlaneseq
      %v2165 = vshrl.u32 %v2164, 7
      %v2166 = vsub.s32 5, %v2165
      %v2167 = vrot.slane %v2142, %v2166
      %v2168 = vlaneseq
      %v2169 = vshrl.u32 %v2168, 7
      %v2170 = vsub.s32 6, %v2169
      %v2171 = vrot.slane %v2142, %v2170
      %v2172 = vlaneseq
      %v2173 = vshrl.u32 %v2172, 7
      %v2174 = vsub.s32 7, %v2173
      %v2175 = vrot.slane %v2142, %v2174
      %v2184 = vadd.f32 %v2126, %v2147
      %v2185 = vadd.f32 %v2127, %v2151
      %v2186 = vadd.f32 %v2128, %v2155
      %v2187 = vadd.f32 %v2129, %v2159
      %v2188 = vadd.f32 %v2130, %v2163
      %v2189 = vadd.f32 %v2131, %v2167
      %v2190 = vadd.f32 %v2132, %v2171
      %v2191 = vadd.f32 %v2133, %v2175
      %v2192 = vadd.f32 %v2134, %v2147
      %v2193 = vadd.f32 %v2135, %v2151
      %v2194 = vadd.f32 %v2136, %v2155
      %v2195 = vadd.f32 %v2137, %v2159
      %v2196 = vadd.f32 %v2138, %v2163
      %v2197 = vadd.f32 %v2139, %v2167
      %v2198 = vadd.f32 %v2140, %v2171
      %v2199 = vadd.f32 %v2141, %v2175
      %v2200 = vmax.f32 %v2184, 0.0
      %v2201 = vmax.f32 %v2185, 0.0
      %v2202 = vmax.f32 %v2186, 0.0
      %v2203 = vmax.f32 %v2187, 0.0
      %v2204 = vmax.f32 %v2188, 0.0
      %v2205 = vmax.f32 %v2189, 0.0
      %v2206 = vmax.f32 %v2190, 0.0
      %v2207 = vmax.f32 %v2191, 0.0
      %v2208 = vmax.f32 %v2192, 0.0
      %v2209 = vmax.f32 %v2193, 0.0
      %v2210 = vmax.f32 %v2194, 0.0
      %v2211 = vmax.f32 %v2195, 0.0
      %v2212 = vmax.f32 %v2196, 0.0
      %v2213 = vmax.f32 %v2197, 0.0
      %v2214 = vmax.f32 %v2198, 0.0
      %v2215 = vmax.f32 %v2199, 0.0
      %v2216 = vpack.c.bf16 %v2208, %v2200
      %v2217 = vpack.c.bf16 %v2209, %v2201
      %v2218 = vpack.c.bf16 %v2210, %v2202
      %v2219 = vpack.c.bf16 %v2211, %v2203
      %v2220 = vpack.c.bf16 %v2212, %v2204
      %v2221 = vpack.c.bf16 %v2213, %v2205
      %v2222 = vpack.c.bf16 %v2214, %v2206
      %v2223 = vpack.c.bf16 %v2215, %v2207
      %v2224 = vld [vmem:[#allocation9] sm:$0xff]
      %v2225 = vld [vmem:[#allocation9 + $0x8] sm:$0xff]
      %v2226 = vld [vmem:[#allocation9 + $0x10] sm:$0xff]
      %v2227 = vld [vmem:[#allocation9 + $0x18] sm:$0xff]
      %v2228 = vld [vmem:[#allocation9 + $0x20] sm:$0xff]
      %v2229 = vld [vmem:[#allocation9 + $0x28] sm:$0xff]
      %v2230 = vld [vmem:[#allocation9 + $0x30] sm:$0xff]
      %v2231 = vld [vmem:[#allocation9 + $0x38] sm:$0xff]
      %v2232 = vld [vmem:[#allocation9 + $0x40] sm:$0xff]
      %v2233 = vld [vmem:[#allocation9 + $0x48] sm:$0xff]
      %v2234 = vld [vmem:[#allocation9 + $0x50] sm:$0xff]
      %v2235 = vld [vmem:[#allocation9 + $0x58] sm:$0xff]
      %v2236 = vld [vmem:[#allocation9 + $0x60] sm:$0xff]
      %v2237 = vld [vmem:[#allocation9 + $0x68] sm:$0xff]
      %v2238 = vld [vmem:[#allocation9 + $0x70] sm:$0xff]
      %v2239 = vld [vmem:[#allocation9 + $0x78] sm:$0xff]
      %v2240 = vld [vmem:[#allocation9 + $0x80] sm:$0xff]
      %v2241 = vld [vmem:[#allocation9 + $0x88] sm:$0xff]
      %v2242 = vld [vmem:[#allocation9 + $0x90] sm:$0xff]
      %v2243 = vld [vmem:[#allocation9 + $0x98] sm:$0xff]
      %v2244 = vld [vmem:[#allocation9 + $0xa0] sm:$0xff]
      %v2245 = vld [vmem:[#allocation9 + $0xa8] sm:$0xff]
      %v2246 = vld [vmem:[#allocation9 + $0xb0] sm:$0xff]
      %v2247 = vld [vmem:[#allocation9 + $0xb8] sm:$0xff]
      %v2248 = vld [vmem:[#allocation9 + $0xc0] sm:$0xff]
      %v2249 = vld [vmem:[#allocation9 + $0xc8] sm:$0xff]
      %v2250 = vld [vmem:[#allocation9 + $0xd0] sm:$0xff]
      %v2251 = vld [vmem:[#allocation9 + $0xd8] sm:$0xff]
      %v2252 = vld [vmem:[#allocation9 + $0xe0] sm:$0xff]
      %v2253 = vld [vmem:[#allocation9 + $0xe8] sm:$0xff]
      %v2254 = vld [vmem:[#allocation9 + $0xf0] sm:$0xff]
      %v2255 = vld [vmem:[#allocation9 + $0xf8] sm:$0xff]
      %v2256 = vld [vmem:[#allocation9 + $0x100] sm:$0xff]
      %v2257 = vld [vmem:[#allocation9 + $0x108] sm:$0xff]
      %v2258 = vld [vmem:[#allocation9 + $0x110] sm:$0xff]
      %v2259 = vld [vmem:[#allocation9 + $0x118] sm:$0xff]
      %v2260 = vld [vmem:[#allocation9 + $0x120] sm:$0xff]
      %v2261 = vld [vmem:[#allocation9 + $0x128] sm:$0xff]
      %v2262 = vld [vmem:[#allocation9 + $0x130] sm:$0xff]
      %v2263 = vld [vmem:[#allocation9 + $0x138] sm:$0xff]
      %v2264 = vld [vmem:[#allocation9 + $0x140] sm:$0xff]
      %v2265 = vld [vmem:[#allocation9 + $0x148] sm:$0xff]
      %v2266 = vld [vmem:[#allocation9 + $0x150] sm:$0xff]
      %v2267 = vld [vmem:[#allocation9 + $0x158] sm:$0xff]
      %v2268 = vld [vmem:[#allocation9 + $0x160] sm:$0xff]
      %v2269 = vld [vmem:[#allocation9 + $0x168] sm:$0xff]
      %v2270 = vld [vmem:[#allocation9 + $0x170] sm:$0xff]
      %v2271 = vld [vmem:[#allocation9 + $0x178] sm:$0xff]
      %v2272 = vld [vmem:[#allocation9 + $0x180] sm:$0xff]
      %v2273 = vld [vmem:[#allocation9 + $0x188] sm:$0xff]
      %v2274 = vld [vmem:[#allocation9 + $0x190] sm:$0xff]
      %v2275 = vld [vmem:[#allocation9 + $0x198] sm:$0xff]
      %v2276 = vld [vmem:[#allocation9 + $0x1a0] sm:$0xff]
      %v2277 = vld [vmem:[#allocation9 + $0x1a8] sm:$0xff]
      %v2278 = vld [vmem:[#allocation9 + $0x1b0] sm:$0xff]
      %v2279 = vld [vmem:[#allocation9 + $0x1b8] sm:$0xff]
      %v2280 = vld [vmem:[#allocation9 + $0x1c0] sm:$0xff]
      %v2281 = vld [vmem:[#allocation9 + $0x1c8] sm:$0xff]
      %v2282 = vld [vmem:[#allocation9 + $0x1d0] sm:$0xff]
      %v2283 = vld [vmem:[#allocation9 + $0x1d8] sm:$0xff]
      %v2284 = vld [vmem:[#allocation9 + $0x1e0] sm:$0xff]
      %v2285 = vld [vmem:[#allocation9 + $0x1e8] sm:$0xff]
      %v2286 = vld [vmem:[#allocation9 + $0x1f0] sm:$0xff]
      %v2287 = vld [vmem:[#allocation9 + $0x1f8] sm:$0xff]
      %v2288 = vld [vmem:[#allocation9 + $0x200] sm:$0xff]
      %v2289 = vld [vmem:[#allocation9 + $0x208] sm:$0xff]
      %v2290 = vld [vmem:[#allocation9 + $0x210] sm:$0xff]
      %v2291 = vld [vmem:[#allocation9 + $0x218] sm:$0xff]
      %v2292 = vld [vmem:[#allocation9 + $0x220] sm:$0xff]
      %v2293 = vld [vmem:[#allocation9 + $0x228] sm:$0xff]
      %v2294 = vld [vmem:[#allocation9 + $0x230] sm:$0xff]
      %v2295 = vld [vmem:[#allocation9 + $0x238] sm:$0xff]
      %v2296 = vld [vmem:[#allocation9 + $0x240] sm:$0xff]
      %v2297 = vld [vmem:[#allocation9 + $0x248] sm:$0xff]
      %v2298 = vld [vmem:[#allocation9 + $0x250] sm:$0xff]
      %v2299 = vld [vmem:[#allocation9 + $0x258] sm:$0xff]
      %v2300 = vld [vmem:[#allocation9 + $0x260] sm:$0xff]
      %v2301 = vld [vmem:[#allocation9 + $0x268] sm:$0xff]
      %v2302 = vld [vmem:[#allocation9 + $0x270] sm:$0xff]
      %v2303 = vld [vmem:[#allocation9 + $0x278] sm:$0xff]
      %v2304 = vld [vmem:[#allocation9 + $0x280] sm:$0xff]
      %v2305 = vld [vmem:[#allocation9 + $0x288] sm:$0xff]
      %v2306 = vld [vmem:[#allocation9 + $0x290] sm:$0xff]
      %v2307 = vld [vmem:[#allocation9 + $0x298] sm:$0xff]
      %v2308 = vld [vmem:[#allocation9 + $0x2a0] sm:$0xff]
      %v2309 = vld [vmem:[#allocation9 + $0x2a8] sm:$0xff]
      %v2310 = vld [vmem:[#allocation9 + $0x2b0] sm:$0xff]
      %v2311 = vld [vmem:[#allocation9 + $0x2b8] sm:$0xff]
      %v2312 = vld [vmem:[#allocation9 + $0x2c0] sm:$0xff]
      %v2313 = vld [vmem:[#allocation9 + $0x2c8] sm:$0xff]
      %v2314 = vld [vmem:[#allocation9 + $0x2d0] sm:$0xff]
      %v2315 = vld [vmem:[#allocation9 + $0x2d8] sm:$0xff]
      %v2316 = vld [vmem:[#allocation9 + $0x2e0] sm:$0xff]
      %v2317 = vld [vmem:[#allocation9 + $0x2e8] sm:$0xff]
      %v2318 = vld [vmem:[#allocation9 + $0x2f0] sm:$0xff]
      %v2319 = vld [vmem:[#allocation9 + $0x2f8] sm:$0xff]
      %v2320 = vld [vmem:[#allocation9 + $0x300] sm:$0xff]
      %v2321 = vld [vmem:[#allocation9 + $0x308] sm:$0xff]
      %v2322 = vld [vmem:[#allocation9 + $0x310] sm:$0xff]
      %v2323 = vld [vmem:[#allocation9 + $0x318] sm:$0xff]
      %v2324 = vld [vmem:[#allocation9 + $0x320] sm:$0xff]
      %v2325 = vld [vmem:[#allocation9 + $0x328] sm:$0xff]
      %v2326 = vld [vmem:[#allocation9 + $0x330] sm:$0xff]
      %v2327 = vld [vmem:[#allocation9 + $0x338] sm:$0xff]
      %v2328 = vld [vmem:[#allocation9 + $0x340] sm:$0xff]
      %v2329 = vld [vmem:[#allocation9 + $0x348] sm:$0xff]
      %v2330 = vld [vmem:[#allocation9 + $0x350] sm:$0xff]
      %v2331 = vld [vmem:[#allocation9 + $0x358] sm:$0xff]
      %v2332 = vld [vmem:[#allocation9 + $0x360] sm:$0xff]
      %v2333 = vld [vmem:[#allocation9 + $0x368] sm:$0xff]
      %v2334 = vld [vmem:[#allocation9 + $0x370] sm:$0xff]
      %v2335 = vld [vmem:[#allocation9 + $0x378] sm:$0xff]
      %v2336 = vld [vmem:[#allocation9 + $0x380] sm:$0xff]
      %v2337 = vld [vmem:[#allocation9 + $0x388] sm:$0xff]
      %v2338 = vld [vmem:[#allocation9 + $0x390] sm:$0xff]
      %v2339 = vld [vmem:[#allocation9 + $0x398] sm:$0xff]
      %v2340 = vld [vmem:[#allocation9 + $0x3a0] sm:$0xff]
      %v2341 = vld [vmem:[#allocation9 + $0x3a8] sm:$0xff]
      %v2342 = vld [vmem:[#allocation9 + $0x3b0] sm:$0xff]
      %v2343 = vld [vmem:[#allocation9 + $0x3b8] sm:$0xff]
      %v2344 = vld [vmem:[#allocation9 + $0x3c0] sm:$0xff]
      %v2345 = vld [vmem:[#allocation9 + $0x3c8] sm:$0xff]
      %v2346 = vld [vmem:[#allocation9 + $0x3d0] sm:$0xff]
      %v2347 = vld [vmem:[#allocation9 + $0x3d8] sm:$0xff]
      %v2348 = vld [vmem:[#allocation9 + $0x3e0] sm:$0xff]
      %v2349 = vld [vmem:[#allocation9 + $0x3e8] sm:$0xff]
      %v2350 = vld [vmem:[#allocation9 + $0x3f0] sm:$0xff]
      %v2351 = vld [vmem:[#allocation9 + $0x3f8] sm:$0xff]
      %v2352 = vld [vmem:[#allocation9 + $0x400] sm:$0xff]
      %v2353 = vld [vmem:[#allocation9 + $0x408] sm:$0xff]
      %v2354 = vld [vmem:[#allocation9 + $0x410] sm:$0xff]
      %v2355 = vld [vmem:[#allocation9 + $0x418] sm:$0xff]
      %v2356 = vld [vmem:[#allocation9 + $0x420] sm:$0xff]
      %v2357 = vld [vmem:[#allocation9 + $0x428] sm:$0xff]
      %v2358 = vld [vmem:[#allocation9 + $0x430] sm:$0xff]
      %v2359 = vld [vmem:[#allocation9 + $0x438] sm:$0xff]
      %v2360 = vld [vmem:[#allocation9 + $0x440] sm:$0xff]
      %v2361 = vld [vmem:[#allocation9 + $0x448] sm:$0xff]
      %v2362 = vld [vmem:[#allocation9 + $0x450] sm:$0xff]
      %v2363 = vld [vmem:[#allocation9 + $0x458] sm:$0xff]
      %v2364 = vld [vmem:[#allocation9 + $0x460] sm:$0xff]
      %v2365 = vld [vmem:[#allocation9 + $0x468] sm:$0xff]
      %v2366 = vld [vmem:[#allocation9 + $0x470] sm:$0xff]
      %v2367 = vld [vmem:[#allocation9 + $0x478] sm:$0xff]
      %v2368 = vld [vmem:[#allocation9 + $0x480] sm:$0xff]
      %v2369 = vld [vmem:[#allocation9 + $0x488] sm:$0xff]
      %v2370 = vld [vmem:[#allocation9 + $0x490] sm:$0xff]
      %v2371 = vld [vmem:[#allocation9 + $0x498] sm:$0xff]
      %v2372 = vld [vmem:[#allocation9 + $0x4a0] sm:$0xff]
      %v2373 = vld [vmem:[#allocation9 + $0x4a8] sm:$0xff]
      %v2374 = vld [vmem:[#allocation9 + $0x4b0] sm:$0xff]
      %v2375 = vld [vmem:[#allocation9 + $0x4b8] sm:$0xff]
      %v2376 = vld [vmem:[#allocation9 + $0x4c0] sm:$0xff]
      %v2377 = vld [vmem:[#allocation9 + $0x4c8] sm:$0xff]
      %v2378 = vld [vmem:[#allocation9 + $0x4d0] sm:$0xff]
      %v2379 = vld [vmem:[#allocation9 + $0x4d8] sm:$0xff]
      %v2380 = vld [vmem:[#allocation9 + $0x4e0] sm:$0xff]
      %v2381 = vld [vmem:[#allocation9 + $0x4e8] sm:$0xff]
      %v2382 = vld [vmem:[#allocation9 + $0x4f0] sm:$0xff]
      %v2383 = vld [vmem:[#allocation9 + $0x4f8] sm:$0xff]
      %v2384 = vld [vmem:[#allocation9 + $0x500] sm:$0xff]
      %v2385 = vld [vmem:[#allocation9 + $0x508] sm:$0xff]
      %v2386 = vld [vmem:[#allocation9 + $0x510] sm:$0xff]
      %v2387 = vld [vmem:[#allocation9 + $0x518] sm:$0xff]
      %v2388 = vld [vmem:[#allocation9 + $0x520] sm:$0xff]
      %v2389 = vld [vmem:[#allocation9 + $0x528] sm:$0xff]
      %v2390 = vld [vmem:[#allocation9 + $0x530] sm:$0xff]
      %v2391 = vld [vmem:[#allocation9 + $0x538] sm:$0xff]
      %v2392 = vld [vmem:[#allocation9 + $0x540] sm:$0xff]
      %v2393 = vld [vmem:[#allocation9 + $0x548] sm:$0xff]
      %v2394 = vld [vmem:[#allocation9 + $0x550] sm:$0xff]
      %v2395 = vld [vmem:[#allocation9 + $0x558] sm:$0xff]
      %v2396 = vld [vmem:[#allocation9 + $0x560] sm:$0xff]
      %v2397 = vld [vmem:[#allocation9 + $0x568] sm:$0xff]
      %v2398 = vld [vmem:[#allocation9 + $0x570] sm:$0xff]
      %v2399 = vld [vmem:[#allocation9 + $0x578] sm:$0xff]
      %v2400 = vld [vmem:[#allocation9 + $0x580] sm:$0xff]
      %v2401 = vld [vmem:[#allocation9 + $0x588] sm:$0xff]
      %v2402 = vld [vmem:[#allocation9 + $0x590] sm:$0xff]
      %v2403 = vld [vmem:[#allocation9 + $0x598] sm:$0xff]
      %v2404 = vld [vmem:[#allocation9 + $0x5a0] sm:$0xff]
      %v2405 = vld [vmem:[#allocation9 + $0x5a8] sm:$0xff]
      %v2406 = vld [vmem:[#allocation9 + $0x5b0] sm:$0xff]
      %v2407 = vld [vmem:[#allocation9 + $0x5b8] sm:$0xff]
      %v2408 = vld [vmem:[#allocation9 + $0x5c0] sm:$0xff]
      %v2409 = vld [vmem:[#allocation9 + $0x5c8] sm:$0xff]
      %v2410 = vld [vmem:[#allocation9 + $0x5d0] sm:$0xff]
      %v2411 = vld [vmem:[#allocation9 + $0x5d8] sm:$0xff]
      %v2412 = vld [vmem:[#allocation9 + $0x5e0] sm:$0xff]
      %v2413 = vld [vmem:[#allocation9 + $0x5e8] sm:$0xff]
      %v2414 = vld [vmem:[#allocation9 + $0x5f0] sm:$0xff]
      %v2415 = vld [vmem:[#allocation9 + $0x5f8] sm:$0xff]
      %v2416 = vld [vmem:[#allocation9 + $0x600] sm:$0xff]
      %v2417 = vld [vmem:[#allocation9 + $0x608] sm:$0xff]
      %v2418 = vld [vmem:[#allocation9 + $0x610] sm:$0xff]
      %v2419 = vld [vmem:[#allocation9 + $0x618] sm:$0xff]
      %v2420 = vld [vmem:[#allocation9 + $0x620] sm:$0xff]
      %v2421 = vld [vmem:[#allocation9 + $0x628] sm:$0xff]
      %v2422 = vld [vmem:[#allocation9 + $0x630] sm:$0xff]
      %v2423 = vld [vmem:[#allocation9 + $0x638] sm:$0xff]
      %v2424 = vld [vmem:[#allocation9 + $0x640] sm:$0xff]
      %v2425 = vld [vmem:[#allocation9 + $0x648] sm:$0xff]
      %v2426 = vld [vmem:[#allocation9 + $0x650] sm:$0xff]
      %v2427 = vld [vmem:[#allocation9 + $0x658] sm:$0xff]
      %v2428 = vld [vmem:[#allocation9 + $0x660] sm:$0xff]
      %v2429 = vld [vmem:[#allocation9 + $0x668] sm:$0xff]
      %v2430 = vld [vmem:[#allocation9 + $0x670] sm:$0xff]
      %v2431 = vld [vmem:[#allocation9 + $0x678] sm:$0xff]
      %v2432 = vld [vmem:[#allocation9 + $0x680] sm:$0xff]
      %v2433 = vld [vmem:[#allocation9 + $0x688] sm:$0xff]
      %v2434 = vld [vmem:[#allocation9 + $0x690] sm:$0xff]
      %v2435 = vld [vmem:[#allocation9 + $0x698] sm:$0xff]
      %v2436 = vld [vmem:[#allocation9 + $0x6a0] sm:$0xff]
      %v2437 = vld [vmem:[#allocation9 + $0x6a8] sm:$0xff]
      %v2438 = vld [vmem:[#allocation9 + $0x6b0] sm:$0xff]
      %v2439 = vld [vmem:[#allocation9 + $0x6b8] sm:$0xff]
      %v2440 = vld [vmem:[#allocation9 + $0x6c0] sm:$0xff]
      %v2441 = vld [vmem:[#allocation9 + $0x6c8] sm:$0xff]
      %v2442 = vld [vmem:[#allocation9 + $0x6d0] sm:$0xff]
      %v2443 = vld [vmem:[#allocation9 + $0x6d8] sm:$0xff]
      %v2444 = vld [vmem:[#allocation9 + $0x6e0] sm:$0xff]
      %v2445 = vld [vmem:[#allocation9 + $0x6e8] sm:$0xff]
      %v2446 = vld [vmem:[#allocation9 + $0x6f0] sm:$0xff]
      %v2447 = vld [vmem:[#allocation9 + $0x6f8] sm:$0xff]
      %v2448 = vld [vmem:[#allocation9 + $0x700] sm:$0xff]
      %v2449 = vld [vmem:[#allocation9 + $0x708] sm:$0xff]
      %v2450 = vld [vmem:[#allocation9 + $0x710] sm:$0xff]
      %v2451 = vld [vmem:[#allocation9 + $0x718] sm:$0xff]
      %v2452 = vld [vmem:[#allocation9 + $0x720] sm:$0xff]
      %v2453 = vld [vmem:[#allocation9 + $0x728] sm:$0xff]
      %v2454 = vld [vmem:[#allocation9 + $0x730] sm:$0xff]
      %v2455 = vld [vmem:[#allocation9 + $0x738] sm:$0xff]
      %v2456 = vld [vmem:[#allocation9 + $0x740] sm:$0xff]
      %v2457 = vld [vmem:[#allocation9 + $0x748] sm:$0xff]
      %v2458 = vld [vmem:[#allocation9 + $0x750] sm:$0xff]
      %v2459 = vld [vmem:[#allocation9 + $0x758] sm:$0xff]
      %v2460 = vld [vmem:[#allocation9 + $0x760] sm:$0xff]
      %v2461 = vld [vmem:[#allocation9 + $0x768] sm:$0xff]
      %v2462 = vld [vmem:[#allocation9 + $0x770] sm:$0xff]
      %v2463 = vld [vmem:[#allocation9 + $0x778] sm:$0xff]
      %v2464 = vld [vmem:[#allocation9 + $0x780] sm:$0xff]
      %v2465 = vld [vmem:[#allocation9 + $0x788] sm:$0xff]
      %v2466 = vld [vmem:[#allocation9 + $0x790] sm:$0xff]
      %v2467 = vld [vmem:[#allocation9 + $0x798] sm:$0xff]
      %v2468 = vld [vmem:[#allocation9 + $0x7a0] sm:$0xff]
      %v2469 = vld [vmem:[#allocation9 + $0x7a8] sm:$0xff]
      %v2470 = vld [vmem:[#allocation9 + $0x7b0] sm:$0xff]
      %v2471 = vld [vmem:[#allocation9 + $0x7b8] sm:$0xff]
      %v2472 = vld [vmem:[#allocation9 + $0x7c0] sm:$0xff]
      %v2473 = vld [vmem:[#allocation9 + $0x7c8] sm:$0xff]
      %v2474 = vld [vmem:[#allocation9 + $0x7d0] sm:$0xff]
      %v2475 = vld [vmem:[#allocation9 + $0x7d8] sm:$0xff]
      %v2476 = vld [vmem:[#allocation9 + $0x7e0] sm:$0xff]
      %v2477 = vld [vmem:[#allocation9 + $0x7e8] sm:$0xff]
      %v2478 = vld [vmem:[#allocation9 + $0x7f0] sm:$0xff]
      %v2479 = vld [vmem:[#allocation9 + $0x7f8] sm:$0xff]
      %v2480 = vld [vmem:[#allocation9 + $0x800] sm:$0xff]
      %v2481 = vld [vmem:[#allocation9 + $0x808] sm:$0xff]
      %v2482 = vld [vmem:[#allocation9 + $0x810] sm:$0xff]
      %v2483 = vld [vmem:[#allocation9 + $0x818] sm:$0xff]
      %v2484 = vld [vmem:[#allocation9 + $0x820] sm:$0xff]
      %v2485 = vld [vmem:[#allocation9 + $0x828] sm:$0xff]
      %v2486 = vld [vmem:[#allocation9 + $0x830] sm:$0xff]
      %v2487 = vld [vmem:[#allocation9 + $0x838] sm:$0xff]
      %v2488 = vld [vmem:[#allocation9 + $0x840] sm:$0xff]
      %v2489 = vld [vmem:[#allocation9 + $0x848] sm:$0xff]
      %v2490 = vld [vmem:[#allocation9 + $0x850] sm:$0xff]
      %v2491 = vld [vmem:[#allocation9 + $0x858] sm:$0xff]
      %v2492 = vld [vmem:[#allocation9 + $0x860] sm:$0xff]
      %v2493 = vld [vmem:[#allocation9 + $0x868] sm:$0xff]
      %v2494 = vld [vmem:[#allocation9 + $0x870] sm:$0xff]
      %v2495 = vld [vmem:[#allocation9 + $0x878] sm:$0xff]
      %v2496 = vld [vmem:[#allocation9 + $0x880] sm:$0xff]
      %v2497 = vld [vmem:[#allocation9 + $0x888] sm:$0xff]
      %v2498 = vld [vmem:[#allocation9 + $0x890] sm:$0xff]
      %v2499 = vld [vmem:[#allocation9 + $0x898] sm:$0xff]
      %v2500 = vld [vmem:[#allocation9 + $0x8a0] sm:$0xff]
      %v2501 = vld [vmem:[#allocation9 + $0x8a8] sm:$0xff]
      %v2502 = vld [vmem:[#allocation9 + $0x8b0] sm:$0xff]
      %v2503 = vld [vmem:[#allocation9 + $0x8b8] sm:$0xff]
      %v2504 = vld [vmem:[#allocation9 + $0x8c0] sm:$0xff]
      %v2505 = vld [vmem:[#allocation9 + $0x8c8] sm:$0xff]
      %v2506 = vld [vmem:[#allocation9 + $0x8d0] sm:$0xff]
      %v2507 = vld [vmem:[#allocation9 + $0x8d8] sm:$0xff]
      %v2508 = vld [vmem:[#allocation9 + $0x8e0] sm:$0xff]
      %v2509 = vld [vmem:[#allocation9 + $0x8e8] sm:$0xff]
      %v2510 = vld [vmem:[#allocation9 + $0x8f0] sm:$0xff]
      %v2511 = vld [vmem:[#allocation9 + $0x8f8] sm:$0xff]
      %v2512 = vld [vmem:[#allocation9 + $0x900] sm:$0xff]
      %v2513 = vld [vmem:[#allocation9 + $0x908] sm:$0xff]
      %v2514 = vld [vmem:[#allocation9 + $0x910] sm:$0xff]
      %v2515 = vld [vmem:[#allocation9 + $0x918] sm:$0xff]
      %v2516 = vld [vmem:[#allocation9 + $0x920] sm:$0xff]
      %v2517 = vld [vmem:[#allocation9 + $0x928] sm:$0xff]
      %v2518 = vld [vmem:[#allocation9 + $0x930] sm:$0xff]
      %v2519 = vld [vmem:[#allocation9 + $0x938] sm:$0xff]
      %v2520 = vld [vmem:[#allocation9 + $0x940] sm:$0xff]
      %v2521 = vld [vmem:[#allocation9 + $0x948] sm:$0xff]
      %v2522 = vld [vmem:[#allocation9 + $0x950] sm:$0xff]
      %v2523 = vld [vmem:[#allocation9 + $0x958] sm:$0xff]
      %v2524 = vld [vmem:[#allocation9 + $0x960] sm:$0xff]
      %v2525 = vld [vmem:[#allocation9 + $0x968] sm:$0xff]
      %v2526 = vld [vmem:[#allocation9 + $0x970] sm:$0xff]
      %v2527 = vld [vmem:[#allocation9 + $0x978] sm:$0xff]
      %v2528 = vld [vmem:[#allocation9 + $0x980] sm:$0xff]
      %v2529 = vld [vmem:[#allocation9 + $0x988] sm:$0xff]
      %v2530 = vld [vmem:[#allocation9 + $0x990] sm:$0xff]
      %v2531 = vld [vmem:[#allocation9 + $0x998] sm:$0xff]
      %v2532 = vld [vmem:[#allocation9 + $0x9a0] sm:$0xff]
      %v2533 = vld [vmem:[#allocation9 + $0x9a8] sm:$0xff]
      %v2534 = vld [vmem:[#allocation9 + $0x9b0] sm:$0xff]
      %v2535 = vld [vmem:[#allocation9 + $0x9b8] sm:$0xff]
      %v2536 = vld [vmem:[#allocation9 + $0x9c0] sm:$0xff]
      %v2537 = vld [vmem:[#allocation9 + $0x9c8] sm:$0xff]
      %v2538 = vld [vmem:[#allocation9 + $0x9d0] sm:$0xff]
      %v2539 = vld [vmem:[#allocation9 + $0x9d8] sm:$0xff]
      %v2540 = vld [vmem:[#allocation9 + $0x9e0] sm:$0xff]
      %v2541 = vld [vmem:[#allocation9 + $0x9e8] sm:$0xff]
      %v2542 = vld [vmem:[#allocation9 + $0x9f0] sm:$0xff]
      %v2543 = vld [vmem:[#allocation9 + $0x9f8] sm:$0xff]
      %v2544 = vld [vmem:[#allocation9 + $0xa00] sm:$0xff]
      %v2545 = vld [vmem:[#allocation9 + $0xa08] sm:$0xff]
      %v2546 = vld [vmem:[#allocation9 + $0xa10] sm:$0xff]
      %v2547 = vld [vmem:[#allocation9 + $0xa18] sm:$0xff]
      %v2548 = vld [vmem:[#allocation9 + $0xa20] sm:$0xff]
      %v2549 = vld [vmem:[#allocation9 + $0xa28] sm:$0xff]
      %v2550 = vld [vmem:[#allocation9 + $0xa30] sm:$0xff]
      %v2551 = vld [vmem:[#allocation9 + $0xa38] sm:$0xff]
      %v2552 = vld [vmem:[#allocation9 + $0xa40] sm:$0xff]
      %v2553 = vld [vmem:[#allocation9 + $0xa48] sm:$0xff]
      %v2554 = vld [vmem:[#allocation9 + $0xa50] sm:$0xff]
      %v2555 = vld [vmem:[#allocation9 + $0xa58] sm:$0xff]
      %v2556 = vld [vmem:[#allocation9 + $0xa60] sm:$0xff]
      %v2557 = vld [vmem:[#allocation9 + $0xa68] sm:$0xff]
      %v2558 = vld [vmem:[#allocation9 + $0xa70] sm:$0xff]
      %v2559 = vld [vmem:[#allocation9 + $0xa78] sm:$0xff]
      %v2560 = vld [vmem:[#allocation9 + $0xa80] sm:$0xff]
      %v2561 = vld [vmem:[#allocation9 + $0xa88] sm:$0xff]
      %v2562 = vld [vmem:[#allocation9 + $0xa90] sm:$0xff]
      %v2563 = vld [vmem:[#allocation9 + $0xa98] sm:$0xff]
      %v2564 = vld [vmem:[#allocation9 + $0xaa0] sm:$0xff]
      %v2565 = vld [vmem:[#allocation9 + $0xaa8] sm:$0xff]
      %v2566 = vld [vmem:[#allocation9 + $0xab0] sm:$0xff]
      %v2567 = vld [vmem:[#allocation9 + $0xab8] sm:$0xff]
      %v2568 = vld [vmem:[#allocation9 + $0xac0] sm:$0xff]
      %v2569 = vld [vmem:[#allocation9 + $0xac8] sm:$0xff]
      %v2570 = vld [vmem:[#allocation9 + $0xad0] sm:$0xff]
      %v2571 = vld [vmem:[#allocation9 + $0xad8] sm:$0xff]
      %v2572 = vld [vmem:[#allocation9 + $0xae0] sm:$0xff]
      %v2573 = vld [vmem:[#allocation9 + $0xae8] sm:$0xff]
      %v2574 = vld [vmem:[#allocation9 + $0xaf0] sm:$0xff]
      %v2575 = vld [vmem:[#allocation9 + $0xaf8] sm:$0xff]
      %v2576 = vld [vmem:[#allocation9 + $0xb00] sm:$0xff]
      %v2577 = vld [vmem:[#allocation9 + $0xb08] sm:$0xff]
      %v2578 = vld [vmem:[#allocation9 + $0xb10] sm:$0xff]
      %v2579 = vld [vmem:[#allocation9 + $0xb18] sm:$0xff]
      %v2580 = vld [vmem:[#allocation9 + $0xb20] sm:$0xff]
      %v2581 = vld [vmem:[#allocation9 + $0xb28] sm:$0xff]
      %v2582 = vld [vmem:[#allocation9 + $0xb30] sm:$0xff]
      %v2583 = vld [vmem:[#allocation9 + $0xb38] sm:$0xff]
      %v2584 = vld [vmem:[#allocation9 + $0xb40] sm:$0xff]
      %v2585 = vld [vmem:[#allocation9 + $0xb48] sm:$0xff]
      %v2586 = vld [vmem:[#allocation9 + $0xb50] sm:$0xff]
      %v2587 = vld [vmem:[#allocation9 + $0xb58] sm:$0xff]
      %v2588 = vld [vmem:[#allocation9 + $0xb60] sm:$0xff]
      %v2589 = vld [vmem:[#allocation9 + $0xb68] sm:$0xff]
      %v2590 = vld [vmem:[#allocation9 + $0xb70] sm:$0xff]
      %v2591 = vld [vmem:[#allocation9 + $0xb78] sm:$0xff]
      %v2592 = vld [vmem:[#allocation9 + $0xb80] sm:$0xff]
      %v2593 = vld [vmem:[#allocation9 + $0xb88] sm:$0xff]
      %v2594 = vld [vmem:[#allocation9 + $0xb90] sm:$0xff]
      %v2595 = vld [vmem:[#allocation9 + $0xb98] sm:$0xff]
      %v2596 = vld [vmem:[#allocation9 + $0xba0] sm:$0xff]
      %v2597 = vld [vmem:[#allocation9 + $0xba8] sm:$0xff]
      %v2598 = vld [vmem:[#allocation9 + $0xbb0] sm:$0xff]
      %v2599 = vld [vmem:[#allocation9 + $0xbb8] sm:$0xff]
      %v2600 = vld [vmem:[#allocation9 + $0xbc0] sm:$0xff]
      %v2601 = vld [vmem:[#allocation9 + $0xbc8] sm:$0xff]
      %v2602 = vld [vmem:[#allocation9 + $0xbd0] sm:$0xff]
      %v2603 = vld [vmem:[#allocation9 + $0xbd8] sm:$0xff]
      %v2604 = vld [vmem:[#allocation9 + $0xbe0] sm:$0xff]
      %v2605 = vld [vmem:[#allocation9 + $0xbe8] sm:$0xff]
      %v2606 = vld [vmem:[#allocation9 + $0xbf0] sm:$0xff]
      %v2607 = vld [vmem:[#allocation9 + $0xbf8] sm:$0xff]
      %v2608 = vld [vmem:[#allocation9 + $0xc00] sm:$0xff]
      %v2609 = vld [vmem:[#allocation9 + $0xc08] sm:$0xff]
      %v2610 = vld [vmem:[#allocation9 + $0xc10] sm:$0xff]
      %v2611 = vld [vmem:[#allocation9 + $0xc18] sm:$0xff]
      %v2612 = vld [vmem:[#allocation9 + $0xc20] sm:$0xff]
      %v2613 = vld [vmem:[#allocation9 + $0xc28] sm:$0xff]
      %v2614 = vld [vmem:[#allocation9 + $0xc30] sm:$0xff]
      %v2615 = vld [vmem:[#allocation9 + $0xc38] sm:$0xff]
      %v2616 = vld [vmem:[#allocation9 + $0xc40] sm:$0xff]
      %v2617 = vld [vmem:[#allocation9 + $0xc48] sm:$0xff]
      %v2618 = vld [vmem:[#allocation9 + $0xc50] sm:$0xff]
      %v2619 = vld [vmem:[#allocation9 + $0xc58] sm:$0xff]
      %v2620 = vld [vmem:[#allocation9 + $0xc60] sm:$0xff]
      %v2621 = vld [vmem:[#allocation9 + $0xc68] sm:$0xff]
      %v2622 = vld [vmem:[#allocation9 + $0xc70] sm:$0xff]
      %v2623 = vld [vmem:[#allocation9 + $0xc78] sm:$0xff]
      %v2624 = vld [vmem:[#allocation9 + $0xc80] sm:$0xff]
      %v2625 = vld [vmem:[#allocation9 + $0xc88] sm:$0xff]
      %v2626 = vld [vmem:[#allocation9 + $0xc90] sm:$0xff]
      %v2627 = vld [vmem:[#allocation9 + $0xc98] sm:$0xff]
      %v2628 = vld [vmem:[#allocation9 + $0xca0] sm:$0xff]
      %v2629 = vld [vmem:[#allocation9 + $0xca8] sm:$0xff]
      %v2630 = vld [vmem:[#allocation9 + $0xcb0] sm:$0xff]
      %v2631 = vld [vmem:[#allocation9 + $0xcb8] sm:$0xff]
      %v2632 = vld [vmem:[#allocation9 + $0xcc0] sm:$0xff]
      %v2633 = vld [vmem:[#allocation9 + $0xcc8] sm:$0xff]
      %v2634 = vld [vmem:[#allocation9 + $0xcd0] sm:$0xff]
      %v2635 = vld [vmem:[#allocation9 + $0xcd8] sm:$0xff]
      %v2636 = vld [vmem:[#allocation9 + $0xce0] sm:$0xff]
      %v2637 = vld [vmem:[#allocation9 + $0xce8] sm:$0xff]
      %v2638 = vld [vmem:[#allocation9 + $0xcf0] sm:$0xff]
      %v2639 = vld [vmem:[#allocation9 + $0xcf8] sm:$0xff]
      %v2640 = vld [vmem:[#allocation9 + $0xd00] sm:$0xff]
      %v2641 = vld [vmem:[#allocation9 + $0xd08] sm:$0xff]
      %v2642 = vld [vmem:[#allocation9 + $0xd10] sm:$0xff]
      %v2643 = vld [vmem:[#allocation9 + $0xd18] sm:$0xff]
      %v2644 = vld [vmem:[#allocation9 + $0xd20] sm:$0xff]
      %v2645 = vld [vmem:[#allocation9 + $0xd28] sm:$0xff]
      %v2646 = vld [vmem:[#allocation9 + $0xd30] sm:$0xff]
      %v2647 = vld [vmem:[#allocation9 + $0xd38] sm:$0xff]
      %v2648 = vld [vmem:[#allocation9 + $0xd40] sm:$0xff]
      %v2649 = vld [vmem:[#allocation9 + $0xd48] sm:$0xff]
      %v2650 = vld [vmem:[#allocation9 + $0xd50] sm:$0xff]
      %v2651 = vld [vmem:[#allocation9 + $0xd58] sm:$0xff]
      %v2652 = vld [vmem:[#allocation9 + $0xd60] sm:$0xff]
      %v2653 = vld [vmem:[#allocation9 + $0xd68] sm:$0xff]
      %v2654 = vld [vmem:[#allocation9 + $0xd70] sm:$0xff]
      %v2655 = vld [vmem:[#allocation9 + $0xd78] sm:$0xff]
      %v2656 = vld [vmem:[#allocation9 + $0xd80] sm:$0xff]
      %v2657 = vld [vmem:[#allocation9 + $0xd88] sm:$0xff]
      %v2658 = vld [vmem:[#allocation9 + $0xd90] sm:$0xff]
      %v2659 = vld [vmem:[#allocation9 + $0xd98] sm:$0xff]
      %v2660 = vld [vmem:[#allocation9 + $0xda0] sm:$0xff]
      %v2661 = vld [vmem:[#allocation9 + $0xda8] sm:$0xff]
      %v2662 = vld [vmem:[#allocation9 + $0xdb0] sm:$0xff]
      %v2663 = vld [vmem:[#allocation9 + $0xdb8] sm:$0xff]
      %v2664 = vld [vmem:[#allocation9 + $0xdc0] sm:$0xff]
      %v2665 = vld [vmem:[#allocation9 + $0xdc8] sm:$0xff]
      %v2666 = vld [vmem:[#allocation9 + $0xdd0] sm:$0xff]
      %v2667 = vld [vmem:[#allocation9 + $0xdd8] sm:$0xff]
      %v2668 = vld [vmem:[#allocation9 + $0xde0] sm:$0xff]
      %v2669 = vld [vmem:[#allocation9 + $0xde8] sm:$0xff]
      %v2670 = vld [vmem:[#allocation9 + $0xdf0] sm:$0xff]
      %v2671 = vld [vmem:[#allocation9 + $0xdf8] sm:$0xff]
      %v2672 = vld [vmem:[#allocation9 + $0xe00] sm:$0xff]
      %v2673 = vld [vmem:[#allocation9 + $0xe08] sm:$0xff]
      %v2674 = vld [vmem:[#allocation9 + $0xe10] sm:$0xff]
      %v2675 = vld [vmem:[#allocation9 + $0xe18] sm:$0xff]
      %v2676 = vld [vmem:[#allocation9 + $0xe20] sm:$0xff]
      %v2677 = vld [vmem:[#allocation9 + $0xe28] sm:$0xff]
      %v2678 = vld [vmem:[#allocation9 + $0xe30] sm:$0xff]
      %v2679 = vld [vmem:[#allocation9 + $0xe38] sm:$0xff]
      %v2680 = vld [vmem:[#allocation9 + $0xe40] sm:$0xff]
      %v2681 = vld [vmem:[#allocation9 + $0xe48] sm:$0xff]
      %v2682 = vld [vmem:[#allocation9 + $0xe50] sm:$0xff]
      %v2683 = vld [vmem:[#allocation9 + $0xe58] sm:$0xff]
      %v2684 = vld [vmem:[#allocation9 + $0xe60] sm:$0xff]
      %v2685 = vld [vmem:[#allocation9 + $0xe68] sm:$0xff]
      %v2686 = vld [vmem:[#allocation9 + $0xe70] sm:$0xff]
      %v2687 = vld [vmem:[#allocation9 + $0xe78] sm:$0xff]
      %v2688 = vld [vmem:[#allocation9 + $0xe80] sm:$0xff]
      %v2689 = vld [vmem:[#allocation9 + $0xe88] sm:$0xff]
      %v2690 = vld [vmem:[#allocation9 + $0xe90] sm:$0xff]
      %v2691 = vld [vmem:[#allocation9 + $0xe98] sm:$0xff]
      %v2692 = vld [vmem:[#allocation9 + $0xea0] sm:$0xff]
      %v2693 = vld [vmem:[#allocation9 + $0xea8] sm:$0xff]
      %v2694 = vld [vmem:[#allocation9 + $0xeb0] sm:$0xff]
      %v2695 = vld [vmem:[#allocation9 + $0xeb8] sm:$0xff]
      %v2696 = vld [vmem:[#allocation9 + $0xec0] sm:$0xff]
      %v2697 = vld [vmem:[#allocation9 + $0xec8] sm:$0xff]
      %v2698 = vld [vmem:[#allocation9 + $0xed0] sm:$0xff]
      %v2699 = vld [vmem:[#allocation9 + $0xed8] sm:$0xff]
      %v2700 = vld [vmem:[#allocation9 + $0xee0] sm:$0xff]
      %v2701 = vld [vmem:[#allocation9 + $0xee8] sm:$0xff]
      %v2702 = vld [vmem:[#allocation9 + $0xef0] sm:$0xff]
      %v2703 = vld [vmem:[#allocation9 + $0xef8] sm:$0xff]
      %v2704 = vld [vmem:[#allocation9 + $0xf00] sm:$0xff]
      %v2705 = vld [vmem:[#allocation9 + $0xf08] sm:$0xff]
      %v2706 = vld [vmem:[#allocation9 + $0xf10] sm:$0xff]
      %v2707 = vld [vmem:[#allocation9 + $0xf18] sm:$0xff]
      %v2708 = vld [vmem:[#allocation9 + $0xf20] sm:$0xff]
      %v2709 = vld [vmem:[#allocation9 + $0xf28] sm:$0xff]
      %v2710 = vld [vmem:[#allocation9 + $0xf30] sm:$0xff]
      %v2711 = vld [vmem:[#allocation9 + $0xf38] sm:$0xff]
      %v2712 = vld [vmem:[#allocation9 + $0xf40] sm:$0xff]
      %v2713 = vld [vmem:[#allocation9 + $0xf48] sm:$0xff]
      %v2714 = vld [vmem:[#allocation9 + $0xf50] sm:$0xff]
      %v2715 = vld [vmem:[#allocation9 + $0xf58] sm:$0xff]
      %v2716 = vld [vmem:[#allocation9 + $0xf60] sm:$0xff]
      %v2717 = vld [vmem:[#allocation9 + $0xf68] sm:$0xff]
      %v2718 = vld [vmem:[#allocation9 + $0xf70] sm:$0xff]
      %v2719 = vld [vmem:[#allocation9 + $0xf78] sm:$0xff]
      %v2720 = vld [vmem:[#allocation9 + $0xf80] sm:$0xff]
      %v2721 = vld [vmem:[#allocation9 + $0xf88] sm:$0xff]
      %v2722 = vld [vmem:[#allocation9 + $0xf90] sm:$0xff]
      %v2723 = vld [vmem:[#allocation9 + $0xf98] sm:$0xff]
      %v2724 = vld [vmem:[#allocation9 + $0xfa0] sm:$0xff]
      %v2725 = vld [vmem:[#allocation9 + $0xfa8] sm:$0xff]
      %v2726 = vld [vmem:[#allocation9 + $0xfb0] sm:$0xff]
      %v2727 = vld [vmem:[#allocation9 + $0xfb8] sm:$0xff]
      %v2728 = vld [vmem:[#allocation9 + $0xfc0] sm:$0xff]
      %v2729 = vld [vmem:[#allocation9 + $0xfc8] sm:$0xff]
      %v2730 = vld [vmem:[#allocation9 + $0xfd0] sm:$0xff]
      %v2731 = vld [vmem:[#allocation9 + $0xfd8] sm:$0xff]
      %v2732 = vld [vmem:[#allocation9 + $0xfe0] sm:$0xff]
      %v2733 = vld [vmem:[#allocation9 + $0xfe8] sm:$0xff]
      %v2734 = vld [vmem:[#allocation9 + $0xff0] sm:$0xff]
      %v2735 = vld [vmem:[#allocation9 + $0xff8] sm:$0xff]
      %v2736 = vld [vmem:[#allocation11] sm:$0xff]
      %v2738 = vlaneseq
      %v2739 = vshrl.u32 %v2738, 7
      %v2740 = vsub.s32 0, %v2739
      %v2741 = vrot.slane %v2736, %v2740
      %v2742 = vlaneseq
      %v2743 = vshrl.u32 %v2742, 7
      %v2744 = vsub.s32 1, %v2743
      %v2745 = vrot.slane %v2736, %v2744
      %v2746 = vlaneseq
      %v2747 = vshrl.u32 %v2746, 7
      %v2748 = vsub.s32 2, %v2747
      %v2749 = vrot.slane %v2736, %v2748
      %v2750 = vlaneseq
      %v2751 = vshrl.u32 %v2750, 7
      %v2752 = vsub.s32 3, %v2751
      %v2753 = vrot.slane %v2736, %v2752
      %v2754 = vlaneseq
      %v2755 = vshrl.u32 %v2754, 7
      %v2756 = vsub.s32 4, %v2755
      %v2757 = vrot.slane %v2736, %v2756
      %v2758 = vlaneseq
      %v2759 = vshrl.u32 %v2758, 7
      %v2760 = vsub.s32 5, %v2759
      %v2761 = vrot.slane %v2736, %v2760
      %v2762 = vlaneseq
      %v2763 = vshrl.u32 %v2762, 7
      %v2764 = vsub.s32 6, %v2763
      %v2765 = vrot.slane %v2736, %v2764
      %v2766 = vlaneseq
      %v2767 = vshrl.u32 %v2766, 7
      %v2768 = vsub.s32 7, %v2767
      %v2769 = vrot.slane %v2736, %v2768
      %v3290 = vunpack.c.l.b16 %v2224
      %v3291 = vunpack.c.h.b16 %v2224
      %v3292 = vunpack.c.l.b16 %v2225
      %v3293 = vunpack.c.h.b16 %v2225
      %v3294 = vunpack.c.l.b16 %v2226
      %v3295 = vunpack.c.h.b16 %v2226
      %v3296 = vunpack.c.l.b16 %v2227
      %v3297 = vunpack.c.h.b16 %v2227
      %v3298 = vunpack.c.l.b16 %v2228
      %v3299 = vunpack.c.h.b16 %v2228
      %v3300 = vunpack.c.l.b16 %v2229
      %v3301 = vunpack.c.h.b16 %v2229
      %v3302 = vunpack.c.l.b16 %v2230
      %v3303 = vunpack.c.h.b16 %v2230
      %v3304 = vunpack.c.l.b16 %v2231
      %v3305 = vunpack.c.h.b16 %v2231
      %v3306 = vunpack.c.l.b16 %v2232
      %v3307 = vunpack.c.h.b16 %v2232
      %v3308 = vunpack.c.l.b16 %v2233
      %v3309 = vunpack.c.h.b16 %v2233
      %v3310 = vunpack.c.l.b16 %v2234
      %v3311 = vunpack.c.h.b16 %v2234
      %v3312 = vunpack.c.l.b16 %v2235
      %v3313 = vunpack.c.h.b16 %v2235
      %v3314 = vunpack.c.l.b16 %v2236
      %v3315 = vunpack.c.h.b16 %v2236
      %v3316 = vunpack.c.l.b16 %v2237
      %v3317 = vunpack.c.h.b16 %v2237
      %v3318 = vunpack.c.l.b16 %v2238
      %v3319 = vunpack.c.h.b16 %v2238
      %v3320 = vunpack.c.l.b16 %v2239
      %v3321 = vunpack.c.h.b16 %v2239
      %v3322 = vunpack.c.l.b16 %v2240
      %v3323 = vunpack.c.h.b16 %v2240
      %v3324 = vunpack.c.l.b16 %v2241
      %v3325 = vunpack.c.h.b16 %v2241
      %v3326 = vunpack.c.l.b16 %v2242
      %v3327 = vunpack.c.h.b16 %v2242
      %v3328 = vunpack.c.l.b16 %v2243
      %v3329 = vunpack.c.h.b16 %v2243
      %v3330 = vunpack.c.l.b16 %v2244
      %v3331 = vunpack.c.h.b16 %v2244
      %v3332 = vunpack.c.l.b16 %v2245
      %v3333 = vunpack.c.h.b16 %v2245
      %v3334 = vunpack.c.l.b16 %v2246
      %v3335 = vunpack.c.h.b16 %v2246
      %v3336 = vunpack.c.l.b16 %v2247
      %v3337 = vunpack.c.h.b16 %v2247
      %v3338 = vunpack.c.l.b16 %v2248
      %v3339 = vunpack.c.h.b16 %v2248
      %v3340 = vunpack.c.l.b16 %v2249
      %v3341 = vunpack.c.h.b16 %v2249
      %v3342 = vunpack.c.l.b16 %v2250
      %v3343 = vunpack.c.h.b16 %v2250
      %v3344 = vunpack.c.l.b16 %v2251
      %v3345 = vunpack.c.h.b16 %v2251
      %v3346 = vunpack.c.l.b16 %v2252
      %v3347 = vunpack.c.h.b16 %v2252
      %v3348 = vunpack.c.l.b16 %v2253
      %v3349 = vunpack.c.h.b16 %v2253
      %v3350 = vunpack.c.l.b16 %v2254
      %v3351 = vunpack.c.h.b16 %v2254
      %v3352 = vunpack.c.l.b16 %v2255
      %v3353 = vunpack.c.h.b16 %v2255
      %v3354 = vunpack.c.l.b16 %v2256
      %v3355 = vunpack.c.h.b16 %v2256
      %v3356 = vunpack.c.l.b16 %v2257
      %v3357 = vunpack.c.h.b16 %v2257
      %v3358 = vunpack.c.l.b16 %v2258
      %v3359 = vunpack.c.h.b16 %v2258
      %v3360 = vunpack.c.l.b16 %v2259
      %v3361 = vunpack.c.h.b16 %v2259
      %v3362 = vunpack.c.l.b16 %v2260
      %v3363 = vunpack.c.h.b16 %v2260
      %v3364 = vunpack.c.l.b16 %v2261
      %v3365 = vunpack.c.h.b16 %v2261
      %v3366 = vunpack.c.l.b16 %v2262
      %v3367 = vunpack.c.h.b16 %v2262
      %v3368 = vunpack.c.l.b16 %v2263
      %v3369 = vunpack.c.h.b16 %v2263
      %v3370 = vunpack.c.l.b16 %v2264
      %v3371 = vunpack.c.h.b16 %v2264
      %v3372 = vunpack.c.l.b16 %v2265
      %v3373 = vunpack.c.h.b16 %v2265
      %v3374 = vunpack.c.l.b16 %v2266
      %v3375 = vunpack.c.h.b16 %v2266
      %v3376 = vunpack.c.l.b16 %v2267
      %v3377 = vunpack.c.h.b16 %v2267
      %v3378 = vunpack.c.l.b16 %v2268
      %v3379 = vunpack.c.h.b16 %v2268
      %v3380 = vunpack.c.l.b16 %v2269
      %v3381 = vunpack.c.h.b16 %v2269
      %v3382 = vunpack.c.l.b16 %v2270
      %v3383 = vunpack.c.h.b16 %v2270
      %v3384 = vunpack.c.l.b16 %v2271
      %v3385 = vunpack.c.h.b16 %v2271
      %v3386 = vunpack.c.l.b16 %v2272
      %v3387 = vunpack.c.h.b16 %v2272
      %v3388 = vunpack.c.l.b16 %v2273
      %v3389 = vunpack.c.h.b16 %v2273
      %v3390 = vunpack.c.l.b16 %v2274
      %v3391 = vunpack.c.h.b16 %v2274
      %v3392 = vunpack.c.l.b16 %v2275
      %v3393 = vunpack.c.h.b16 %v2275
      %v3394 = vunpack.c.l.b16 %v2276
      %v3395 = vunpack.c.h.b16 %v2276
      %v3396 = vunpack.c.l.b16 %v2277
      %v3397 = vunpack.c.h.b16 %v2277
      %v3398 = vunpack.c.l.b16 %v2278
      %v3399 = vunpack.c.h.b16 %v2278
      %v3400 = vunpack.c.l.b16 %v2279
      %v3401 = vunpack.c.h.b16 %v2279
      %v3402 = vunpack.c.l.b16 %v2280
      %v3403 = vunpack.c.h.b16 %v2280
      %v3404 = vunpack.c.l.b16 %v2281
      %v3405 = vunpack.c.h.b16 %v2281
      %v3406 = vunpack.c.l.b16 %v2282
      %v3407 = vunpack.c.h.b16 %v2282
      %v3408 = vunpack.c.l.b16 %v2283
      %v3409 = vunpack.c.h.b16 %v2283
      %v3410 = vunpack.c.l.b16 %v2284
      %v3411 = vunpack.c.h.b16 %v2284
      %v3412 = vunpack.c.l.b16 %v2285
      %v3413 = vunpack.c.h.b16 %v2285
      %v3414 = vunpack.c.l.b16 %v2286
      %v3415 = vunpack.c.h.b16 %v2286
      %v3416 = vunpack.c.l.b16 %v2287
      %v3417 = vunpack.c.h.b16 %v2287
      %v3418 = vunpack.c.l.b16 %v2288
      %v3419 = vunpack.c.h.b16 %v2288
      %v3420 = vunpack.c.l.b16 %v2289
      %v3421 = vunpack.c.h.b16 %v2289
      %v3422 = vunpack.c.l.b16 %v2290
      %v3423 = vunpack.c.h.b16 %v2290
      %v3424 = vunpack.c.l.b16 %v2291
      %v3425 = vunpack.c.h.b16 %v2291
      %v3426 = vunpack.c.l.b16 %v2292
      %v3427 = vunpack.c.h.b16 %v2292
      %v3428 = vunpack.c.l.b16 %v2293
      %v3429 = vunpack.c.h.b16 %v2293
      %v3430 = vunpack.c.l.b16 %v2294
      %v3431 = vunpack.c.h.b16 %v2294
      %v3432 = vunpack.c.l.b16 %v2295
      %v3433 = vunpack.c.h.b16 %v2295
      %v3434 = vunpack.c.l.b16 %v2296
      %v3435 = vunpack.c.h.b16 %v2296
      %v3436 = vunpack.c.l.b16 %v2297
      %v3437 = vunpack.c.h.b16 %v2297
      %v3438 = vunpack.c.l.b16 %v2298
      %v3439 = vunpack.c.h.b16 %v2298
      %v3440 = vunpack.c.l.b16 %v2299
      %v3441 = vunpack.c.h.b16 %v2299
      %v3442 = vunpack.c.l.b16 %v2300
      %v3443 = vunpack.c.h.b16 %v2300
      %v3444 = vunpack.c.l.b16 %v2301
      %v3445 = vunpack.c.h.b16 %v2301
      %v3446 = vunpack.c.l.b16 %v2302
      %v3447 = vunpack.c.h.b16 %v2302
      %v3448 = vunpack.c.l.b16 %v2303
      %v3449 = vunpack.c.h.b16 %v2303
      %v3450 = vunpack.c.l.b16 %v2304
      %v3451 = vunpack.c.h.b16 %v2304
      %v3452 = vunpack.c.l.b16 %v2305
      %v3453 = vunpack.c.h.b16 %v2305
      %v3454 = vunpack.c.l.b16 %v2306
      %v3455 = vunpack.c.h.b16 %v2306
      %v3456 = vunpack.c.l.b16 %v2307
      %v3457 = vunpack.c.h.b16 %v2307
      %v3458 = vunpack.c.l.b16 %v2308
      %v3459 = vunpack.c.h.b16 %v2308
      %v3460 = vunpack.c.l.b16 %v2309
      %v3461 = vunpack.c.h.b16 %v2309
      %v3462 = vunpack.c.l.b16 %v2310
      %v3463 = vunpack.c.h.b16 %v2310
      %v3464 = vunpack.c.l.b16 %v2311
      %v3465 = vunpack.c.h.b16 %v2311
      %v3466 = vunpack.c.l.b16 %v2312
      %v3467 = vunpack.c.h.b16 %v2312
      %v3468 = vunpack.c.l.b16 %v2313
      %v3469 = vunpack.c.h.b16 %v2313
      %v3470 = vunpack.c.l.b16 %v2314
      %v3471 = vunpack.c.h.b16 %v2314
      %v3472 = vunpack.c.l.b16 %v2315
      %v3473 = vunpack.c.h.b16 %v2315
      %v3474 = vunpack.c.l.b16 %v2316
      %v3475 = vunpack.c.h.b16 %v2316
      %v3476 = vunpack.c.l.b16 %v2317
      %v3477 = vunpack.c.h.b16 %v2317
      %v3478 = vunpack.c.l.b16 %v2318
      %v3479 = vunpack.c.h.b16 %v2318
      %v3480 = vunpack.c.l.b16 %v2319
      %v3481 = vunpack.c.h.b16 %v2319
      %v3482 = vunpack.c.l.b16 %v2320
      %v3483 = vunpack.c.h.b16 %v2320
      %v3484 = vunpack.c.l.b16 %v2321
      %v3485 = vunpack.c.h.b16 %v2321
      %v3486 = vunpack.c.l.b16 %v2322
      %v3487 = vunpack.c.h.b16 %v2322
      %v3488 = vunpack.c.l.b16 %v2323
      %v3489 = vunpack.c.h.b16 %v2323
      %v3490 = vunpack.c.l.b16 %v2324
      %v3491 = vunpack.c.h.b16 %v2324
      %v3492 = vunpack.c.l.b16 %v2325
      %v3493 = vunpack.c.h.b16 %v2325
      %v3494 = vunpack.c.l.b16 %v2326
      %v3495 = vunpack.c.h.b16 %v2326
      %v3496 = vunpack.c.l.b16 %v2327
      %v3497 = vunpack.c.h.b16 %v2327
      %v3498 = vunpack.c.l.b16 %v2328
      %v3499 = vunpack.c.h.b16 %v2328
      %v3500 = vunpack.c.l.b16 %v2329
      %v3501 = vunpack.c.h.b16 %v2329
      %v3502 = vunpack.c.l.b16 %v2330
      %v3503 = vunpack.c.h.b16 %v2330
      %v3504 = vunpack.c.l.b16 %v2331
      %v3505 = vunpack.c.h.b16 %v2331
      %v3506 = vunpack.c.l.b16 %v2332
      %v3507 = vunpack.c.h.b16 %v2332
      %v3508 = vunpack.c.l.b16 %v2333
      %v3509 = vunpack.c.h.b16 %v2333
      %v3510 = vunpack.c.l.b16 %v2334
      %v3511 = vunpack.c.h.b16 %v2334
      %v3512 = vunpack.c.l.b16 %v2335
      %v3513 = vunpack.c.h.b16 %v2335
      %v3514 = vunpack.c.l.b16 %v2336
      %v3515 = vunpack.c.h.b16 %v2336
      %v3516 = vunpack.c.l.b16 %v2337
      %v3517 = vunpack.c.h.b16 %v2337
      %v3518 = vunpack.c.l.b16 %v2338
      %v3519 = vunpack.c.h.b16 %v2338
      %v3520 = vunpack.c.l.b16 %v2339
      %v3521 = vunpack.c.h.b16 %v2339
      %v3522 = vunpack.c.l.b16 %v2340
      %v3523 = vunpack.c.h.b16 %v2340
      %v3524 = vunpack.c.l.b16 %v2341
      %v3525 = vunpack.c.h.b16 %v2341
      %v3526 = vunpack.c.l.b16 %v2342
      %v3527 = vunpack.c.h.b16 %v2342
      %v3528 = vunpack.c.l.b16 %v2343
      %v3529 = vunpack.c.h.b16 %v2343
      %v3530 = vunpack.c.l.b16 %v2344
      %v3531 = vunpack.c.h.b16 %v2344
      %v3532 = vunpack.c.l.b16 %v2345
      %v3533 = vunpack.c.h.b16 %v2345
      %v3534 = vunpack.c.l.b16 %v2346
      %v3535 = vunpack.c.h.b16 %v2346
      %v3536 = vunpack.c.l.b16 %v2347
      %v3537 = vunpack.c.h.b16 %v2347
      %v3538 = vunpack.c.l.b16 %v2348
      %v3539 = vunpack.c.h.b16 %v2348
      %v3540 = vunpack.c.l.b16 %v2349
      %v3541 = vunpack.c.h.b16 %v2349
      %v3542 = vunpack.c.l.b16 %v2350
      %v3543 = vunpack.c.h.b16 %v2350
      %v3544 = vunpack.c.l.b16 %v2351
      %v3545 = vunpack.c.h.b16 %v2351
      %v3546 = vunpack.c.l.b16 %v2352
      %v3547 = vunpack.c.h.b16 %v2352
      %v3548 = vunpack.c.l.b16 %v2353
      %v3549 = vunpack.c.h.b16 %v2353
      %v3550 = vunpack.c.l.b16 %v2354
      %v3551 = vunpack.c.h.b16 %v2354
      %v3552 = vunpack.c.l.b16 %v2355
      %v3553 = vunpack.c.h.b16 %v2355
      %v3554 = vunpack.c.l.b16 %v2356
      %v3555 = vunpack.c.h.b16 %v2356
      %v3556 = vunpack.c.l.b16 %v2357
      %v3557 = vunpack.c.h.b16 %v2357
      %v3558 = vunpack.c.l.b16 %v2358
      %v3559 = vunpack.c.h.b16 %v2358
      %v3560 = vunpack.c.l.b16 %v2359
      %v3561 = vunpack.c.h.b16 %v2359
      %v3562 = vunpack.c.l.b16 %v2360
      %v3563 = vunpack.c.h.b16 %v2360
      %v3564 = vunpack.c.l.b16 %v2361
      %v3565 = vunpack.c.h.b16 %v2361
      %v3566 = vunpack.c.l.b16 %v2362
      %v3567 = vunpack.c.h.b16 %v2362
      %v3568 = vunpack.c.l.b16 %v2363
      %v3569 = vunpack.c.h.b16 %v2363
      %v3570 = vunpack.c.l.b16 %v2364
      %v3571 = vunpack.c.h.b16 %v2364
      %v3572 = vunpack.c.l.b16 %v2365
      %v3573 = vunpack.c.h.b16 %v2365
      %v3574 = vunpack.c.l.b16 %v2366
      %v3575 = vunpack.c.h.b16 %v2366
      %v3576 = vunpack.c.l.b16 %v2367
      %v3577 = vunpack.c.h.b16 %v2367
      %v3578 = vunpack.c.l.b16 %v2368
      %v3579 = vunpack.c.h.b16 %v2368
      %v3580 = vunpack.c.l.b16 %v2369
      %v3581 = vunpack.c.h.b16 %v2369
      %v3582 = vunpack.c.l.b16 %v2370
      %v3583 = vunpack.c.h.b16 %v2370
      %v3584 = vunpack.c.l.b16 %v2371
      %v3585 = vunpack.c.h.b16 %v2371
      %v3586 = vunpack.c.l.b16 %v2372
      %v3587 = vunpack.c.h.b16 %v2372
      %v3588 = vunpack.c.l.b16 %v2373
      %v3589 = vunpack.c.h.b16 %v2373
      %v3590 = vunpack.c.l.b16 %v2374
      %v3591 = vunpack.c.h.b16 %v2374
      %v3592 = vunpack.c.l.b16 %v2375
      %v3593 = vunpack.c.h.b16 %v2375
      %v3594 = vunpack.c.l.b16 %v2376
      %v3595 = vunpack.c.h.b16 %v2376
      %v3596 = vunpack.c.l.b16 %v2377
      %v3597 = vunpack.c.h.b16 %v2377
      %v3598 = vunpack.c.l.b16 %v2378
      %v3599 = vunpack.c.h.b16 %v2378
      %v3600 = vunpack.c.l.b16 %v2379
      %v3601 = vunpack.c.h.b16 %v2379
      %v3602 = vunpack.c.l.b16 %v2380
      %v3603 = vunpack.c.h.b16 %v2380
      %v3604 = vunpack.c.l.b16 %v2381
      %v3605 = vunpack.c.h.b16 %v2381
      %v3606 = vunpack.c.l.b16 %v2382
      %v3607 = vunpack.c.h.b16 %v2382
      %v3608 = vunpack.c.l.b16 %v2383
      %v3609 = vunpack.c.h.b16 %v2383
      %v3610 = vunpack.c.l.b16 %v2384
      %v3611 = vunpack.c.h.b16 %v2384
      %v3612 = vunpack.c.l.b16 %v2385
      %v3613 = vunpack.c.h.b16 %v2385
      %v3614 = vunpack.c.l.b16 %v2386
      %v3615 = vunpack.c.h.b16 %v2386
      %v3616 = vunpack.c.l.b16 %v2387
      %v3617 = vunpack.c.h.b16 %v2387
      %v3618 = vunpack.c.l.b16 %v2388
      %v3619 = vunpack.c.h.b16 %v2388
      %v3620 = vunpack.c.l.b16 %v2389
      %v3621 = vunpack.c.h.b16 %v2389
      %v3622 = vunpack.c.l.b16 %v2390
      %v3623 = vunpack.c.h.b16 %v2390
      %v3624 = vunpack.c.l.b16 %v2391
      %v3625 = vunpack.c.h.b16 %v2391
      %v3626 = vunpack.c.l.b16 %v2392
      %v3627 = vunpack.c.h.b16 %v2392
      %v3628 = vunpack.c.l.b16 %v2393
      %v3629 = vunpack.c.h.b16 %v2393
      %v3630 = vunpack.c.l.b16 %v2394
      %v3631 = vunpack.c.h.b16 %v2394
      %v3632 = vunpack.c.l.b16 %v2395
      %v3633 = vunpack.c.h.b16 %v2395
      %v3634 = vunpack.c.l.b16 %v2396
      %v3635 = vunpack.c.h.b16 %v2396
      %v3636 = vunpack.c.l.b16 %v2397
      %v3637 = vunpack.c.h.b16 %v2397
      %v3638 = vunpack.c.l.b16 %v2398
      %v3639 = vunpack.c.h.b16 %v2398
      %v3640 = vunpack.c.l.b16 %v2399
      %v3641 = vunpack.c.h.b16 %v2399
      %v3642 = vunpack.c.l.b16 %v2400
      %v3643 = vunpack.c.h.b16 %v2400
      %v3644 = vunpack.c.l.b16 %v2401
      %v3645 = vunpack.c.h.b16 %v2401
      %v3646 = vunpack.c.l.b16 %v2402
      %v3647 = vunpack.c.h.b16 %v2402
      %v3648 = vunpack.c.l.b16 %v2403
      %v3649 = vunpack.c.h.b16 %v2403
      %v3650 = vunpack.c.l.b16 %v2404
      %v3651 = vunpack.c.h.b16 %v2404
      %v3652 = vunpack.c.l.b16 %v2405
      %v3653 = vunpack.c.h.b16 %v2405
      %v3654 = vunpack.c.l.b16 %v2406
      %v3655 = vunpack.c.h.b16 %v2406
      %v3656 = vunpack.c.l.b16 %v2407
      %v3657 = vunpack.c.h.b16 %v2407
      %v3658 = vunpack.c.l.b16 %v2408
      %v3659 = vunpack.c.h.b16 %v2408
      %v3660 = vunpack.c.l.b16 %v2409
      %v3661 = vunpack.c.h.b16 %v2409
      %v3662 = vunpack.c.l.b16 %v2410
      %v3663 = vunpack.c.h.b16 %v2410
      %v3664 = vunpack.c.l.b16 %v2411
      %v3665 = vunpack.c.h.b16 %v2411
      %v3666 = vunpack.c.l.b16 %v2412
      %v3667 = vunpack.c.h.b16 %v2412
      %v3668 = vunpack.c.l.b16 %v2413
      %v3669 = vunpack.c.h.b16 %v2413
      %v3670 = vunpack.c.l.b16 %v2414
      %v3671 = vunpack.c.h.b16 %v2414
      %v3672 = vunpack.c.l.b16 %v2415
      %v3673 = vunpack.c.h.b16 %v2415
      %v3674 = vunpack.c.l.b16 %v2416
      %v3675 = vunpack.c.h.b16 %v2416
      %v3676 = vunpack.c.l.b16 %v2417
      %v3677 = vunpack.c.h.b16 %v2417
      %v3678 = vunpack.c.l.b16 %v2418
      %v3679 = vunpack.c.h.b16 %v2418
      %v3680 = vunpack.c.l.b16 %v2419
      %v3681 = vunpack.c.h.b16 %v2419
      %v3682 = vunpack.c.l.b16 %v2420
      %v3683 = vunpack.c.h.b16 %v2420
      %v3684 = vunpack.c.l.b16 %v2421
      %v3685 = vunpack.c.h.b16 %v2421
      %v3686 = vunpack.c.l.b16 %v2422
      %v3687 = vunpack.c.h.b16 %v2422
      %v3688 = vunpack.c.l.b16 %v2423
      %v3689 = vunpack.c.h.b16 %v2423
      %v3690 = vunpack.c.l.b16 %v2424
      %v3691 = vunpack.c.h.b16 %v2424
      %v3692 = vunpack.c.l.b16 %v2425
      %v3693 = vunpack.c.h.b16 %v2425
      %v3694 = vunpack.c.l.b16 %v2426
      %v3695 = vunpack.c.h.b16 %v2426
      %v3696 = vunpack.c.l.b16 %v2427
      %v3697 = vunpack.c.h.b16 %v2427
      %v3698 = vunpack.c.l.b16 %v2428
      %v3699 = vunpack.c.h.b16 %v2428
      %v3700 = vunpack.c.l.b16 %v2429
      %v3701 = vunpack.c.h.b16 %v2429
      %v3702 = vunpack.c.l.b16 %v2430
      %v3703 = vunpack.c.h.b16 %v2430
      %v3704 = vunpack.c.l.b16 %v2431
      %v3705 = vunpack.c.h.b16 %v2431
      %v3706 = vunpack.c.l.b16 %v2432
      %v3707 = vunpack.c.h.b16 %v2432
      %v3708 = vunpack.c.l.b16 %v2433
      %v3709 = vunpack.c.h.b16 %v2433
      %v3710 = vunpack.c.l.b16 %v2434
      %v3711 = vunpack.c.h.b16 %v2434
      %v3712 = vunpack.c.l.b16 %v2435
      %v3713 = vunpack.c.h.b16 %v2435
      %v3714 = vunpack.c.l.b16 %v2436
      %v3715 = vunpack.c.h.b16 %v2436
      %v3716 = vunpack.c.l.b16 %v2437
      %v3717 = vunpack.c.h.b16 %v2437
      %v3718 = vunpack.c.l.b16 %v2438
      %v3719 = vunpack.c.h.b16 %v2438
      %v3720 = vunpack.c.l.b16 %v2439
      %v3721 = vunpack.c.h.b16 %v2439
      %v3722 = vunpack.c.l.b16 %v2440
      %v3723 = vunpack.c.h.b16 %v2440
      %v3724 = vunpack.c.l.b16 %v2441
      %v3725 = vunpack.c.h.b16 %v2441
      %v3726 = vunpack.c.l.b16 %v2442
      %v3727 = vunpack.c.h.b16 %v2442
      %v3728 = vunpack.c.l.b16 %v2443
      %v3729 = vunpack.c.h.b16 %v2443
      %v3730 = vunpack.c.l.b16 %v2444
      %v3731 = vunpack.c.h.b16 %v2444
      %v3732 = vunpack.c.l.b16 %v2445
      %v3733 = vunpack.c.h.b16 %v2445
      %v3734 = vunpack.c.l.b16 %v2446
      %v3735 = vunpack.c.h.b16 %v2446
      %v3736 = vunpack.c.l.b16 %v2447
      %v3737 = vunpack.c.h.b16 %v2447
      %v3738 = vunpack.c.l.b16 %v2448
      %v3739 = vunpack.c.h.b16 %v2448
      %v3740 = vunpack.c.l.b16 %v2449
      %v3741 = vunpack.c.h.b16 %v2449
      %v3742 = vunpack.c.l.b16 %v2450
      %v3743 = vunpack.c.h.b16 %v2450
      %v3744 = vunpack.c.l.b16 %v2451
      %v3745 = vunpack.c.h.b16 %v2451
      %v3746 = vunpack.c.l.b16 %v2452
      %v3747 = vunpack.c.h.b16 %v2452
      %v3748 = vunpack.c.l.b16 %v2453
      %v3749 = vunpack.c.h.b16 %v2453
      %v3750 = vunpack.c.l.b16 %v2454
      %v3751 = vunpack.c.h.b16 %v2454
      %v3752 = vunpack.c.l.b16 %v2455
      %v3753 = vunpack.c.h.b16 %v2455
      %v3754 = vunpack.c.l.b16 %v2456
      %v3755 = vunpack.c.h.b16 %v2456
      %v3756 = vunpack.c.l.b16 %v2457
      %v3757 = vunpack.c.h.b16 %v2457
      %v3758 = vunpack.c.l.b16 %v2458
      %v3759 = vunpack.c.h.b16 %v2458
      %v3760 = vunpack.c.l.b16 %v2459
      %v3761 = vunpack.c.h.b16 %v2459
      %v3762 = vunpack.c.l.b16 %v2460
      %v3763 = vunpack.c.h.b16 %v2460
      %v3764 = vunpack.c.l.b16 %v2461
      %v3765 = vunpack.c.h.b16 %v2461
      %v3766 = vunpack.c.l.b16 %v2462
      %v3767 = vunpack.c.h.b16 %v2462
      %v3768 = vunpack.c.l.b16 %v2463
      %v3769 = vunpack.c.h.b16 %v2463
      %v3770 = vunpack.c.l.b16 %v2464
      %v3771 = vunpack.c.h.b16 %v2464
      %v3772 = vunpack.c.l.b16 %v2465
      %v3773 = vunpack.c.h.b16 %v2465
      %v3774 = vunpack.c.l.b16 %v2466
      %v3775 = vunpack.c.h.b16 %v2466
      %v3776 = vunpack.c.l.b16 %v2467
      %v3777 = vunpack.c.h.b16 %v2467
      %v3778 = vunpack.c.l.b16 %v2468
      %v3779 = vunpack.c.h.b16 %v2468
      %v3780 = vunpack.c.l.b16 %v2469
      %v3781 = vunpack.c.h.b16 %v2469
      %v3782 = vunpack.c.l.b16 %v2470
      %v3783 = vunpack.c.h.b16 %v2470
      %v3784 = vunpack.c.l.b16 %v2471
      %v3785 = vunpack.c.h.b16 %v2471
      %v3786 = vunpack.c.l.b16 %v2472
      %v3787 = vunpack.c.h.b16 %v2472
      %v3788 = vunpack.c.l.b16 %v2473
      %v3789 = vunpack.c.h.b16 %v2473
      %v3790 = vunpack.c.l.b16 %v2474
      %v3791 = vunpack.c.h.b16 %v2474
      %v3792 = vunpack.c.l.b16 %v2475
      %v3793 = vunpack.c.h.b16 %v2475
      %v3794 = vunpack.c.l.b16 %v2476
      %v3795 = vunpack.c.h.b16 %v2476
      %v3796 = vunpack.c.l.b16 %v2477
      %v3797 = vunpack.c.h.b16 %v2477
      %v3798 = vunpack.c.l.b16 %v2478
      %v3799 = vunpack.c.h.b16 %v2478
      %v3800 = vunpack.c.l.b16 %v2479
      %v3801 = vunpack.c.h.b16 %v2479
      %v3802 = vunpack.c.l.b16 %v2480
      %v3803 = vunpack.c.h.b16 %v2480
      %v3804 = vunpack.c.l.b16 %v2481
      %v3805 = vunpack.c.h.b16 %v2481
      %v3806 = vunpack.c.l.b16 %v2482
      %v3807 = vunpack.c.h.b16 %v2482
      %v3808 = vunpack.c.l.b16 %v2483
      %v3809 = vunpack.c.h.b16 %v2483
      %v3810 = vunpack.c.l.b16 %v2484
      %v3811 = vunpack.c.h.b16 %v2484
      %v3812 = vunpack.c.l.b16 %v2485
      %v3813 = vunpack.c.h.b16 %v2485
      %v3814 = vunpack.c.l.b16 %v2486
      %v3815 = vunpack.c.h.b16 %v2486
      %v3816 = vunpack.c.l.b16 %v2487
      %v3817 = vunpack.c.h.b16 %v2487
      %v3818 = vunpack.c.l.b16 %v2488
      %v3819 = vunpack.c.h.b16 %v2488
      %v3820 = vunpack.c.l.b16 %v2489
      %v3821 = vunpack.c.h.b16 %v2489
      %v3822 = vunpack.c.l.b16 %v2490
      %v3823 = vunpack.c.h.b16 %v2490
      %v3824 = vunpack.c.l.b16 %v2491
      %v3825 = vunpack.c.h.b16 %v2491
      %v3826 = vunpack.c.l.b16 %v2492
      %v3827 = vunpack.c.h.b16 %v2492
      %v3828 = vunpack.c.l.b16 %v2493
      %v3829 = vunpack.c.h.b16 %v2493
      %v3830 = vunpack.c.l.b16 %v2494
      %v3831 = vunpack.c.h.b16 %v2494
      %v3832 = vunpack.c.l.b16 %v2495
      %v3833 = vunpack.c.h.b16 %v2495
      %v3834 = vunpack.c.l.b16 %v2496
      %v3835 = vunpack.c.h.b16 %v2496
      %v3836 = vunpack.c.l.b16 %v2497
      %v3837 = vunpack.c.h.b16 %v2497
      %v3838 = vunpack.c.l.b16 %v2498
      %v3839 = vunpack.c.h.b16 %v2498
      %v3840 = vunpack.c.l.b16 %v2499
      %v3841 = vunpack.c.h.b16 %v2499
      %v3842 = vunpack.c.l.b16 %v2500
      %v3843 = vunpack.c.h.b16 %v2500
      %v3844 = vunpack.c.l.b16 %v2501
      %v3845 = vunpack.c.h.b16 %v2501
      %v3846 = vunpack.c.l.b16 %v2502
      %v3847 = vunpack.c.h.b16 %v2502
      %v3848 = vunpack.c.l.b16 %v2503
      %v3849 = vunpack.c.h.b16 %v2503
      %v3850 = vunpack.c.l.b16 %v2504
      %v3851 = vunpack.c.h.b16 %v2504
      %v3852 = vunpack.c.l.b16 %v2505
      %v3853 = vunpack.c.h.b16 %v2505
      %v3854 = vunpack.c.l.b16 %v2506
      %v3855 = vunpack.c.h.b16 %v2506
      %v3856 = vunpack.c.l.b16 %v2507
      %v3857 = vunpack.c.h.b16 %v2507
      %v3858 = vunpack.c.l.b16 %v2508
      %v3859 = vunpack.c.h.b16 %v2508
      %v3860 = vunpack.c.l.b16 %v2509
      %v3861 = vunpack.c.h.b16 %v2509
      %v3862 = vunpack.c.l.b16 %v2510
      %v3863 = vunpack.c.h.b16 %v2510
      %v3864 = vunpack.c.l.b16 %v2511
      %v3865 = vunpack.c.h.b16 %v2511
      %v3866 = vunpack.c.l.b16 %v2512
      %v3867 = vunpack.c.h.b16 %v2512
      %v3868 = vunpack.c.l.b16 %v2513
      %v3869 = vunpack.c.h.b16 %v2513
      %v3870 = vunpack.c.l.b16 %v2514
      %v3871 = vunpack.c.h.b16 %v2514
      %v3872 = vunpack.c.l.b16 %v2515
      %v3873 = vunpack.c.h.b16 %v2515
      %v3874 = vunpack.c.l.b16 %v2516
      %v3875 = vunpack.c.h.b16 %v2516
      %v3876 = vunpack.c.l.b16 %v2517
      %v3877 = vunpack.c.h.b16 %v2517
      %v3878 = vunpack.c.l.b16 %v2518
      %v3879 = vunpack.c.h.b16 %v2518
      %v3880 = vunpack.c.l.b16 %v2519
      %v3881 = vunpack.c.h.b16 %v2519
      %v3882 = vunpack.c.l.b16 %v2520
      %v3883 = vunpack.c.h.b16 %v2520
      %v3884 = vunpack.c.l.b16 %v2521
      %v3885 = vunpack.c.h.b16 %v2521
      %v3886 = vunpack.c.l.b16 %v2522
      %v3887 = vunpack.c.h.b16 %v2522
      %v3888 = vunpack.c.l.b16 %v2523
      %v3889 = vunpack.c.h.b16 %v2523
      %v3890 = vunpack.c.l.b16 %v2524
      %v3891 = vunpack.c.h.b16 %v2524
      %v3892 = vunpack.c.l.b16 %v2525
      %v3893 = vunpack.c.h.b16 %v2525
      %v3894 = vunpack.c.l.b16 %v2526
      %v3895 = vunpack.c.h.b16 %v2526
      %v3896 = vunpack.c.l.b16 %v2527
      %v3897 = vunpack.c.h.b16 %v2527
      %v3898 = vunpack.c.l.b16 %v2528
      %v3899 = vunpack.c.h.b16 %v2528
      %v3900 = vunpack.c.l.b16 %v2529
      %v3901 = vunpack.c.h.b16 %v2529
      %v3902 = vunpack.c.l.b16 %v2530
      %v3903 = vunpack.c.h.b16 %v2530
      %v3904 = vunpack.c.l.b16 %v2531
      %v3905 = vunpack.c.h.b16 %v2531
      %v3906 = vunpack.c.l.b16 %v2532
      %v3907 = vunpack.c.h.b16 %v2532
      %v3908 = vunpack.c.l.b16 %v2533
      %v3909 = vunpack.c.h.b16 %v2533
      %v3910 = vunpack.c.l.b16 %v2534
      %v3911 = vunpack.c.h.b16 %v2534
      %v3912 = vunpack.c.l.b16 %v2535
      %v3913 = vunpack.c.h.b16 %v2535
      %v3914 = vunpack.c.l.b16 %v2536
      %v3915 = vunpack.c.h.b16 %v2536
      %v3916 = vunpack.c.l.b16 %v2537
      %v3917 = vunpack.c.h.b16 %v2537
      %v3918 = vunpack.c.l.b16 %v2538
      %v3919 = vunpack.c.h.b16 %v2538
      %v3920 = vunpack.c.l.b16 %v2539
      %v3921 = vunpack.c.h.b16 %v2539
      %v3922 = vunpack.c.l.b16 %v2540
      %v3923 = vunpack.c.h.b16 %v2540
      %v3924 = vunpack.c.l.b16 %v2541
      %v3925 = vunpack.c.h.b16 %v2541
      %v3926 = vunpack.c.l.b16 %v2542
      %v3927 = vunpack.c.h.b16 %v2542
      %v3928 = vunpack.c.l.b16 %v2543
      %v3929 = vunpack.c.h.b16 %v2543
      %v3930 = vunpack.c.l.b16 %v2544
      %v3931 = vunpack.c.h.b16 %v2544
      %v3932 = vunpack.c.l.b16 %v2545
      %v3933 = vunpack.c.h.b16 %v2545
      %v3934 = vunpack.c.l.b16 %v2546
      %v3935 = vunpack.c.h.b16 %v2546
      %v3936 = vunpack.c.l.b16 %v2547
      %v3937 = vunpack.c.h.b16 %v2547
      %v3938 = vunpack.c.l.b16 %v2548
      %v3939 = vunpack.c.h.b16 %v2548
      %v3940 = vunpack.c.l.b16 %v2549
      %v3941 = vunpack.c.h.b16 %v2549
      %v3942 = vunpack.c.l.b16 %v2550
      %v3943 = vunpack.c.h.b16 %v2550
      %v3944 = vunpack.c.l.b16 %v2551
      %v3945 = vunpack.c.h.b16 %v2551
      %v3946 = vunpack.c.l.b16 %v2552
      %v3947 = vunpack.c.h.b16 %v2552
      %v3948 = vunpack.c.l.b16 %v2553
      %v3949 = vunpack.c.h.b16 %v2553
      %v3950 = vunpack.c.l.b16 %v2554
      %v3951 = vunpack.c.h.b16 %v2554
      %v3952 = vunpack.c.l.b16 %v2555
      %v3953 = vunpack.c.h.b16 %v2555
      %v3954 = vunpack.c.l.b16 %v2556
      %v3955 = vunpack.c.h.b16 %v2556
      %v3956 = vunpack.c.l.b16 %v2557
      %v3957 = vunpack.c.h.b16 %v2557
      %v3958 = vunpack.c.l.b16 %v2558
      %v3959 = vunpack.c.h.b16 %v2558
      %v3960 = vunpack.c.l.b16 %v2559
      %v3961 = vunpack.c.h.b16 %v2559
      %v3962 = vunpack.c.l.b16 %v2560
      %v3963 = vunpack.c.h.b16 %v2560
      %v3964 = vunpack.c.l.b16 %v2561
      %v3965 = vunpack.c.h.b16 %v2561
      %v3966 = vunpack.c.l.b16 %v2562
      %v3967 = vunpack.c.h.b16 %v2562
      %v3968 = vunpack.c.l.b16 %v2563
      %v3969 = vunpack.c.h.b16 %v2563
      %v3970 = vunpack.c.l.b16 %v2564
      %v3971 = vunpack.c.h.b16 %v2564
      %v3972 = vunpack.c.l.b16 %v2565
      %v3973 = vunpack.c.h.b16 %v2565
      %v3974 = vunpack.c.l.b16 %v2566
      %v3975 = vunpack.c.h.b16 %v2566
      %v3976 = vunpack.c.l.b16 %v2567
      %v3977 = vunpack.c.h.b16 %v2567
      %v3978 = vunpack.c.l.b16 %v2568
      %v3979 = vunpack.c.h.b16 %v2568
      %v3980 = vunpack.c.l.b16 %v2569
      %v3981 = vunpack.c.h.b16 %v2569
      %v3982 = vunpack.c.l.b16 %v2570
      %v3983 = vunpack.c.h.b16 %v2570
      %v3984 = vunpack.c.l.b16 %v2571
      %v3985 = vunpack.c.h.b16 %v2571
      %v3986 = vunpack.c.l.b16 %v2572
      %v3987 = vunpack.c.h.b16 %v2572
      %v3988 = vunpack.c.l.b16 %v2573
      %v3989 = vunpack.c.h.b16 %v2573
      %v3990 = vunpack.c.l.b16 %v2574
      %v3991 = vunpack.c.h.b16 %v2574
      %v3992 = vunpack.c.l.b16 %v2575
      %v3993 = vunpack.c.h.b16 %v2575
      %v3994 = vunpack.c.l.b16 %v2576
      %v3995 = vunpack.c.h.b16 %v2576
      %v3996 = vunpack.c.l.b16 %v2577
      %v3997 = vunpack.c.h.b16 %v2577
      %v3998 = vunpack.c.l.b16 %v2578
      %v3999 = vunpack.c.h.b16 %v2578
      %v4000 = vunpack.c.l.b16 %v2579
      %v4001 = vunpack.c.h.b16 %v2579
      %v4002 = vunpack.c.l.b16 %v2580
      %v4003 = vunpack.c.h.b16 %v2580
      %v4004 = vunpack.c.l.b16 %v2581
      %v4005 = vunpack.c.h.b16 %v2581
      %v4006 = vunpack.c.l.b16 %v2582
      %v4007 = vunpack.c.h.b16 %v2582
      %v4008 = vunpack.c.l.b16 %v2583
      %v4009 = vunpack.c.h.b16 %v2583
      %v4010 = vunpack.c.l.b16 %v2584
      %v4011 = vunpack.c.h.b16 %v2584
      %v4012 = vunpack.c.l.b16 %v2585
      %v4013 = vunpack.c.h.b16 %v2585
      %v4014 = vunpack.c.l.b16 %v2586
      %v4015 = vunpack.c.h.b16 %v2586
      %v4016 = vunpack.c.l.b16 %v2587
      %v4017 = vunpack.c.h.b16 %v2587
      %v4018 = vunpack.c.l.b16 %v2588
      %v4019 = vunpack.c.h.b16 %v2588
      %v4020 = vunpack.c.l.b16 %v2589
      %v4021 = vunpack.c.h.b16 %v2589
      %v4022 = vunpack.c.l.b16 %v2590
      %v4023 = vunpack.c.h.b16 %v2590
      %v4024 = vunpack.c.l.b16 %v2591
      %v4025 = vunpack.c.h.b16 %v2591
      %v4026 = vunpack.c.l.b16 %v2592
      %v4027 = vunpack.c.h.b16 %v2592
      %v4028 = vunpack.c.l.b16 %v2593
      %v4029 = vunpack.c.h.b16 %v2593
      %v4030 = vunpack.c.l.b16 %v2594
      %v4031 = vunpack.c.h.b16 %v2594
      %v4032 = vunpack.c.l.b16 %v2595
      %v4033 = vunpack.c.h.b16 %v2595
      %v4034 = vunpack.c.l.b16 %v2596
      %v4035 = vunpack.c.h.b16 %v2596
      %v4036 = vunpack.c.l.b16 %v2597
      %v4037 = vunpack.c.h.b16 %v2597
      %v4038 = vunpack.c.l.b16 %v2598
      %v4039 = vunpack.c.h.b16 %v2598
      %v4040 = vunpack.c.l.b16 %v2599
      %v4041 = vunpack.c.h.b16 %v2599
      %v4042 = vunpack.c.l.b16 %v2600
      %v4043 = vunpack.c.h.b16 %v2600
      %v4044 = vunpack.c.l.b16 %v2601
      %v4045 = vunpack.c.h.b16 %v2601
      %v4046 = vunpack.c.l.b16 %v2602
      %v4047 = vunpack.c.h.b16 %v2602
      %v4048 = vunpack.c.l.b16 %v2603
      %v4049 = vunpack.c.h.b16 %v2603
      %v4050 = vunpack.c.l.b16 %v2604
      %v4051 = vunpack.c.h.b16 %v2604
      %v4052 = vunpack.c.l.b16 %v2605
      %v4053 = vunpack.c.h.b16 %v2605
      %v4054 = vunpack.c.l.b16 %v2606
      %v4055 = vunpack.c.h.b16 %v2606
      %v4056 = vunpack.c.l.b16 %v2607
      %v4057 = vunpack.c.h.b16 %v2607
      %v4058 = vunpack.c.l.b16 %v2608
      %v4059 = vunpack.c.h.b16 %v2608
      %v4060 = vunpack.c.l.b16 %v2609
      %v4061 = vunpack.c.h.b16 %v2609
      %v4062 = vunpack.c.l.b16 %v2610
      %v4063 = vunpack.c.h.b16 %v2610
      %v4064 = vunpack.c.l.b16 %v2611
      %v4065 = vunpack.c.h.b16 %v2611
      %v4066 = vunpack.c.l.b16 %v2612
      %v4067 = vunpack.c.h.b16 %v2612
      %v4068 = vunpack.c.l.b16 %v2613
      %v4069 = vunpack.c.h.b16 %v2613
      %v4070 = vunpack.c.l.b16 %v2614
      %v4071 = vunpack.c.h.b16 %v2614
      %v4072 = vunpack.c.l.b16 %v2615
      %v4073 = vunpack.c.h.b16 %v2615
      %v4074 = vunpack.c.l.b16 %v2616
      %v4075 = vunpack.c.h.b16 %v2616
      %v4076 = vunpack.c.l.b16 %v2617
      %v4077 = vunpack.c.h.b16 %v2617
      %v4078 = vunpack.c.l.b16 %v2618
      %v4079 = vunpack.c.h.b16 %v2618
      %v4080 = vunpack.c.l.b16 %v2619
      %v4081 = vunpack.c.h.b16 %v2619
      %v4082 = vunpack.c.l.b16 %v2620
      %v4083 = vunpack.c.h.b16 %v2620
      %v4084 = vunpack.c.l.b16 %v2621
      %v4085 = vunpack.c.h.b16 %v2621
      %v4086 = vunpack.c.l.b16 %v2622
      %v4087 = vunpack.c.h.b16 %v2622
      %v4088 = vunpack.c.l.b16 %v2623
      %v4089 = vunpack.c.h.b16 %v2623
      %v4090 = vunpack.c.l.b16 %v2624
      %v4091 = vunpack.c.h.b16 %v2624
      %v4092 = vunpack.c.l.b16 %v2625
      %v4093 = vunpack.c.h.b16 %v2625
      %v4094 = vunpack.c.l.b16 %v2626
      %v4095 = vunpack.c.h.b16 %v2626
      %v4096 = vunpack.c.l.b16 %v2627
      %v4097 = vunpack.c.h.b16 %v2627
      %v4098 = vunpack.c.l.b16 %v2628
      %v4099 = vunpack.c.h.b16 %v2628
      %v4100 = vunpack.c.l.b16 %v2629
      %v4101 = vunpack.c.h.b16 %v2629
      %v4102 = vunpack.c.l.b16 %v2630
      %v4103 = vunpack.c.h.b16 %v2630
      %v4104 = vunpack.c.l.b16 %v2631
      %v4105 = vunpack.c.h.b16 %v2631
      %v4106 = vunpack.c.l.b16 %v2632
      %v4107 = vunpack.c.h.b16 %v2632
      %v4108 = vunpack.c.l.b16 %v2633
      %v4109 = vunpack.c.h.b16 %v2633
      %v4110 = vunpack.c.l.b16 %v2634
      %v4111 = vunpack.c.h.b16 %v2634
      %v4112 = vunpack.c.l.b16 %v2635
      %v4113 = vunpack.c.h.b16 %v2635
      %v4114 = vunpack.c.l.b16 %v2636
      %v4115 = vunpack.c.h.b16 %v2636
      %v4116 = vunpack.c.l.b16 %v2637
      %v4117 = vunpack.c.h.b16 %v2637
      %v4118 = vunpack.c.l.b16 %v2638
      %v4119 = vunpack.c.h.b16 %v2638
      %v4120 = vunpack.c.l.b16 %v2639
      %v4121 = vunpack.c.h.b16 %v2639
      %v4122 = vunpack.c.l.b16 %v2640
      %v4123 = vunpack.c.h.b16 %v2640
      %v4124 = vunpack.c.l.b16 %v2641
      %v4125 = vunpack.c.h.b16 %v2641
      %v4126 = vunpack.c.l.b16 %v2642
      %v4127 = vunpack.c.h.b16 %v2642
      %v4128 = vunpack.c.l.b16 %v2643
      %v4129 = vunpack.c.h.b16 %v2643
      %v4130 = vunpack.c.l.b16 %v2644
      %v4131 = vunpack.c.h.b16 %v2644
      %v4132 = vunpack.c.l.b16 %v2645
      %v4133 = vunpack.c.h.b16 %v2645
      %v4134 = vunpack.c.l.b16 %v2646
      %v4135 = vunpack.c.h.b16 %v2646
      %v4136 = vunpack.c.l.b16 %v2647
      %v4137 = vunpack.c.h.b16 %v2647
      %v4138 = vunpack.c.l.b16 %v2648
      %v4139 = vunpack.c.h.b16 %v2648
      %v4140 = vunpack.c.l.b16 %v2649
      %v4141 = vunpack.c.h.b16 %v2649
      %v4142 = vunpack.c.l.b16 %v2650
      %v4143 = vunpack.c.h.b16 %v2650
      %v4144 = vunpack.c.l.b16 %v2651
      %v4145 = vunpack.c.h.b16 %v2651
      %v4146 = vunpack.c.l.b16 %v2652
      %v4147 = vunpack.c.h.b16 %v2652
      %v4148 = vunpack.c.l.b16 %v2653
      %v4149 = vunpack.c.h.b16 %v2653
      %v4150 = vunpack.c.l.b16 %v2654
      %v4151 = vunpack.c.h.b16 %v2654
      %v4152 = vunpack.c.l.b16 %v2655
      %v4153 = vunpack.c.h.b16 %v2655
      %v4154 = vunpack.c.l.b16 %v2656
      %v4155 = vunpack.c.h.b16 %v2656
      %v4156 = vunpack.c.l.b16 %v2657
      %v4157 = vunpack.c.h.b16 %v2657
      %v4158 = vunpack.c.l.b16 %v2658
      %v4159 = vunpack.c.h.b16 %v2658
      %v4160 = vunpack.c.l.b16 %v2659
      %v4161 = vunpack.c.h.b16 %v2659
      %v4162 = vunpack.c.l.b16 %v2660
      %v4163 = vunpack.c.h.b16 %v2660
      %v4164 = vunpack.c.l.b16 %v2661
      %v4165 = vunpack.c.h.b16 %v2661
      %v4166 = vunpack.c.l.b16 %v2662
      %v4167 = vunpack.c.h.b16 %v2662
      %v4168 = vunpack.c.l.b16 %v2663
      %v4169 = vunpack.c.h.b16 %v2663
      %v4170 = vunpack.c.l.b16 %v2664
      %v4171 = vunpack.c.h.b16 %v2664
      %v4172 = vunpack.c.l.b16 %v2665
      %v4173 = vunpack.c.h.b16 %v2665
      %v4174 = vunpack.c.l.b16 %v2666
      %v4175 = vunpack.c.h.b16 %v2666
      %v4176 = vunpack.c.l.b16 %v2667
      %v4177 = vunpack.c.h.b16 %v2667
      %v4178 = vunpack.c.l.b16 %v2668
      %v4179 = vunpack.c.h.b16 %v2668
      %v4180 = vunpack.c.l.b16 %v2669
      %v4181 = vunpack.c.h.b16 %v2669
      %v4182 = vunpack.c.l.b16 %v2670
      %v4183 = vunpack.c.h.b16 %v2670
      %v4184 = vunpack.c.l.b16 %v2671
      %v4185 = vunpack.c.h.b16 %v2671
      %v4186 = vunpack.c.l.b16 %v2672
      %v4187 = vunpack.c.h.b16 %v2672
      %v4188 = vunpack.c.l.b16 %v2673
      %v4189 = vunpack.c.h.b16 %v2673
      %v4190 = vunpack.c.l.b16 %v2674
      %v4191 = vunpack.c.h.b16 %v2674
      %v4192 = vunpack.c.l.b16 %v2675
      %v4193 = vunpack.c.h.b16 %v2675
      %v4194 = vunpack.c.l.b16 %v2676
      %v4195 = vunpack.c.h.b16 %v2676
      %v4196 = vunpack.c.l.b16 %v2677
      %v4197 = vunpack.c.h.b16 %v2677
      %v4198 = vunpack.c.l.b16 %v2678
      %v4199 = vunpack.c.h.b16 %v2678
      %v4200 = vunpack.c.l.b16 %v2679
      %v4201 = vunpack.c.h.b16 %v2679
      %v4202 = vunpack.c.l.b16 %v2680
      %v4203 = vunpack.c.h.b16 %v2680
      %v4204 = vunpack.c.l.b16 %v2681
      %v4205 = vunpack.c.h.b16 %v2681
      %v4206 = vunpack.c.l.b16 %v2682
      %v4207 = vunpack.c.h.b16 %v2682
      %v4208 = vunpack.c.l.b16 %v2683
      %v4209 = vunpack.c.h.b16 %v2683
      %v4210 = vunpack.c.l.b16 %v2684
      %v4211 = vunpack.c.h.b16 %v2684
      %v4212 = vunpack.c.l.b16 %v2685
      %v4213 = vunpack.c.h.b16 %v2685
      %v4214 = vunpack.c.l.b16 %v2686
      %v4215 = vunpack.c.h.b16 %v2686
      %v4216 = vunpack.c.l.b16 %v2687
      %v4217 = vunpack.c.h.b16 %v2687
      %v4218 = vunpack.c.l.b16 %v2688
      %v4219 = vunpack.c.h.b16 %v2688
      %v4220 = vunpack.c.l.b16 %v2689
      %v4221 = vunpack.c.h.b16 %v2689
      %v4222 = vunpack.c.l.b16 %v2690
      %v4223 = vunpack.c.h.b16 %v2690
      %v4224 = vunpack.c.l.b16 %v2691
      %v4225 = vunpack.c.h.b16 %v2691
      %v4226 = vunpack.c.l.b16 %v2692
      %v4227 = vunpack.c.h.b16 %v2692
      %v4228 = vunpack.c.l.b16 %v2693
      %v4229 = vunpack.c.h.b16 %v2693
      %v4230 = vunpack.c.l.b16 %v2694
      %v4231 = vunpack.c.h.b16 %v2694
      %v4232 = vunpack.c.l.b16 %v2695
      %v4233 = vunpack.c.h.b16 %v2695
      %v4234 = vunpack.c.l.b16 %v2696
      %v4235 = vunpack.c.h.b16 %v2696
      %v4236 = vunpack.c.l.b16 %v2697
      %v4237 = vunpack.c.h.b16 %v2697
      %v4238 = vunpack.c.l.b16 %v2698
      %v4239 = vunpack.c.h.b16 %v2698
      %v4240 = vunpack.c.l.b16 %v2699
      %v4241 = vunpack.c.h.b16 %v2699
      %v4242 = vunpack.c.l.b16 %v2700
      %v4243 = vunpack.c.h.b16 %v2700
      %v4244 = vunpack.c.l.b16 %v2701
      %v4245 = vunpack.c.h.b16 %v2701
      %v4246 = vunpack.c.l.b16 %v2702
      %v4247 = vunpack.c.h.b16 %v2702
      %v4248 = vunpack.c.l.b16 %v2703
      %v4249 = vunpack.c.h.b16 %v2703
      %v4250 = vunpack.c.l.b16 %v2704
      %v4251 = vunpack.c.h.b16 %v2704
      %v4252 = vunpack.c.l.b16 %v2705
      %v4253 = vunpack.c.h.b16 %v2705
      %v4254 = vunpack.c.l.b16 %v2706
      %v4255 = vunpack.c.h.b16 %v2706
      %v4256 = vunpack.c.l.b16 %v2707
      %v4257 = vunpack.c.h.b16 %v2707
      %v4258 = vunpack.c.l.b16 %v2708
      %v4259 = vunpack.c.h.b16 %v2708
      %v4260 = vunpack.c.l.b16 %v2709
      %v4261 = vunpack.c.h.b16 %v2709
      %v4262 = vunpack.c.l.b16 %v2710
      %v4263 = vunpack.c.h.b16 %v2710
      %v4264 = vunpack.c.l.b16 %v2711
      %v4265 = vunpack.c.h.b16 %v2711
      %v4266 = vunpack.c.l.b16 %v2712
      %v4267 = vunpack.c.h.b16 %v2712
      %v4268 = vunpack.c.l.b16 %v2713
      %v4269 = vunpack.c.h.b16 %v2713
      %v4270 = vunpack.c.l.b16 %v2714
      %v4271 = vunpack.c.h.b16 %v2714
      %v4272 = vunpack.c.l.b16 %v2715
      %v4273 = vunpack.c.h.b16 %v2715
      %v4274 = vunpack.c.l.b16 %v2716
      %v4275 = vunpack.c.h.b16 %v2716
      %v4276 = vunpack.c.l.b16 %v2717
      %v4277 = vunpack.c.h.b16 %v2717
      %v4278 = vunpack.c.l.b16 %v2718
      %v4279 = vunpack.c.h.b16 %v2718
      %v4280 = vunpack.c.l.b16 %v2719
      %v4281 = vunpack.c.h.b16 %v2719
      %v4282 = vunpack.c.l.b16 %v2720
      %v4283 = vunpack.c.h.b16 %v2720
      %v4284 = vunpack.c.l.b16 %v2721
      %v4285 = vunpack.c.h.b16 %v2721
      %v4286 = vunpack.c.l.b16 %v2722
      %v4287 = vunpack.c.h.b16 %v2722
      %v4288 = vunpack.c.l.b16 %v2723
      %v4289 = vunpack.c.h.b16 %v2723
      %v4290 = vunpack.c.l.b16 %v2724
      %v4291 = vunpack.c.h.b16 %v2724
      %v4292 = vunpack.c.l.b16 %v2725
      %v4293 = vunpack.c.h.b16 %v2725
      %v4294 = vunpack.c.l.b16 %v2726
      %v4295 = vunpack.c.h.b16 %v2726
      %v4296 = vunpack.c.l.b16 %v2727
      %v4297 = vunpack.c.h.b16 %v2727
      %v4298 = vunpack.c.l.b16 %v2728
      %v4299 = vunpack.c.h.b16 %v2728
      %v4300 = vunpack.c.l.b16 %v2729
      %v4301 = vunpack.c.h.b16 %v2729
      %v4302 = vunpack.c.l.b16 %v2730
      %v4303 = vunpack.c.h.b16 %v2730
      %v4304 = vunpack.c.l.b16 %v2731
      %v4305 = vunpack.c.h.b16 %v2731
      %v4306 = vunpack.c.l.b16 %v2732
      %v4307 = vunpack.c.h.b16 %v2732
      %v4308 = vunpack.c.l.b16 %v2733
      %v4309 = vunpack.c.h.b16 %v2733
      %v4310 = vunpack.c.l.b16 %v2734
      %v4311 = vunpack.c.h.b16 %v2734
      %v4312 = vunpack.c.l.b16 %v2735
      %v4313 = vunpack.c.h.b16 %v2735
      %v4314 = vpack.c.b16 %v3298, %v3290
      %v4315 = vpack.c.b16 %v3299, %v3291
      %v4316 = vpack.c.b16 %v3300, %v3292
      %v4317 = vpack.c.b16 %v3301, %v3293
      %v4318 = vpack.c.b16 %v3302, %v3294
      %v4319 = vpack.c.b16 %v3303, %v3295
      %v4320 = vpack.c.b16 %v3304, %v3296
      %v4321 = vpack.c.b16 %v3305, %v3297
      %v4322 = vpack.c.b16 %v3314, %v3306
      %v4323 = vpack.c.b16 %v3315, %v3307
      %v4324 = vpack.c.b16 %v3316, %v3308
      %v4325 = vpack.c.b16 %v3317, %v3309
      %v4326 = vpack.c.b16 %v3318, %v3310
      %v4327 = vpack.c.b16 %v3319, %v3311
      %v4328 = vpack.c.b16 %v3320, %v3312
      %v4329 = vpack.c.b16 %v3321, %v3313
      %v4330 = vpack.c.b16 %v3330, %v3322
      %v4331 = vpack.c.b16 %v3331, %v3323
      %v4332 = vpack.c.b16 %v3332, %v3324
      %v4333 = vpack.c.b16 %v3333, %v3325
      %v4334 = vpack.c.b16 %v3334, %v3326
      %v4335 = vpack.c.b16 %v3335, %v3327
      %v4336 = vpack.c.b16 %v3336, %v3328
      %v4337 = vpack.c.b16 %v3337, %v3329
      %v4338 = vpack.c.b16 %v3346, %v3338
      %v4339 = vpack.c.b16 %v3347, %v3339
      %v4340 = vpack.c.b16 %v3348, %v3340
      %v4341 = vpack.c.b16 %v3349, %v3341
      %v4342 = vpack.c.b16 %v3350, %v3342
      %v4343 = vpack.c.b16 %v3351, %v3343
      %v4344 = vpack.c.b16 %v3352, %v3344
      %v4345 = vpack.c.b16 %v3353, %v3345
      %v4346 = vpack.c.b16 %v3362, %v3354
      %v4347 = vpack.c.b16 %v3363, %v3355
      %v4348 = vpack.c.b16 %v3364, %v3356
      %v4349 = vpack.c.b16 %v3365, %v3357
      %v4350 = vpack.c.b16 %v3366, %v3358
      %v4351 = vpack.c.b16 %v3367, %v3359
      %v4352 = vpack.c.b16 %v3368, %v3360
      %v4353 = vpack.c.b16 %v3369, %v3361
      %v4354 = vpack.c.b16 %v3378, %v3370
      %v4355 = vpack.c.b16 %v3379, %v3371
      %v4356 = vpack.c.b16 %v3380, %v3372
      %v4357 = vpack.c.b16 %v3381, %v3373
      %v4358 = vpack.c.b16 %v3382, %v3374
      %v4359 = vpack.c.b16 %v3383, %v3375
      %v4360 = vpack.c.b16 %v3384, %v3376
      %v4361 = vpack.c.b16 %v3385, %v3377
      %v4362 = vpack.c.b16 %v3394, %v3386
      %v4363 = vpack.c.b16 %v3395, %v3387
      %v4364 = vpack.c.b16 %v3396, %v3388
      %v4365 = vpack.c.b16 %v3397, %v3389
      %v4366 = vpack.c.b16 %v3398, %v3390
      %v4367 = vpack.c.b16 %v3399, %v3391
      %v4368 = vpack.c.b16 %v3400, %v3392
      %v4369 = vpack.c.b16 %v3401, %v3393
      %v4370 = vpack.c.b16 %v3410, %v3402
      %v4371 = vpack.c.b16 %v3411, %v3403
      %v4372 = vpack.c.b16 %v3412, %v3404
      %v4373 = vpack.c.b16 %v3413, %v3405
      %v4374 = vpack.c.b16 %v3414, %v3406
      %v4375 = vpack.c.b16 %v3415, %v3407
      %v4376 = vpack.c.b16 %v3416, %v3408
      %v4377 = vpack.c.b16 %v3417, %v3409
      %v4378 = vpack.c.b16 %v3426, %v3418
      %v4379 = vpack.c.b16 %v3427, %v3419
      %v4380 = vpack.c.b16 %v3428, %v3420
      %v4381 = vpack.c.b16 %v3429, %v3421
      %v4382 = vpack.c.b16 %v3430, %v3422
      %v4383 = vpack.c.b16 %v3431, %v3423
      %v4384 = vpack.c.b16 %v3432, %v3424
      %v4385 = vpack.c.b16 %v3433, %v3425
      %v4386 = vpack.c.b16 %v3442, %v3434
      %v4387 = vpack.c.b16 %v3443, %v3435
      %v4388 = vpack.c.b16 %v3444, %v3436
      %v4389 = vpack.c.b16 %v3445, %v3437
      %v4390 = vpack.c.b16 %v3446, %v3438
      %v4391 = vpack.c.b16 %v3447, %v3439
      %v4392 = vpack.c.b16 %v3448, %v3440
      %v4393 = vpack.c.b16 %v3449, %v3441
      %v4394 = vpack.c.b16 %v3458, %v3450
      %v4395 = vpack.c.b16 %v3459, %v3451
      %v4396 = vpack.c.b16 %v3460, %v3452
      %v4397 = vpack.c.b16 %v3461, %v3453
      %v4398 = vpack.c.b16 %v3462, %v3454
      %v4399 = vpack.c.b16 %v3463, %v3455
      %v4400 = vpack.c.b16 %v3464, %v3456
      %v4401 = vpack.c.b16 %v3465, %v3457
      %v4402 = vpack.c.b16 %v3474, %v3466
      %v4403 = vpack.c.b16 %v3475, %v3467
      %v4404 = vpack.c.b16 %v3476, %v3468
      %v4405 = vpack.c.b16 %v3477, %v3469
      %v4406 = vpack.c.b16 %v3478, %v3470
      %v4407 = vpack.c.b16 %v3479, %v3471
      %v4408 = vpack.c.b16 %v3480, %v3472
      %v4409 = vpack.c.b16 %v3481, %v3473
      %v4410 = vpack.c.b16 %v3490, %v3482
      %v4411 = vpack.c.b16 %v3491, %v3483
      %v4412 = vpack.c.b16 %v3492, %v3484
      %v4413 = vpack.c.b16 %v3493, %v3485
      %v4414 = vpack.c.b16 %v3494, %v3486
      %v4415 = vpack.c.b16 %v3495, %v3487
      %v4416 = vpack.c.b16 %v3496, %v3488
      %v4417 = vpack.c.b16 %v3497, %v3489
      %v4418 = vpack.c.b16 %v3506, %v3498
      %v4419 = vpack.c.b16 %v3507, %v3499
      %v4420 = vpack.c.b16 %v3508, %v3500
      %v4421 = vpack.c.b16 %v3509, %v3501
      %v4422 = vpack.c.b16 %v3510, %v3502
      %v4423 = vpack.c.b16 %v3511, %v3503
      %v4424 = vpack.c.b16 %v3512, %v3504
      %v4425 = vpack.c.b16 %v3513, %v3505
      %v4426 = vpack.c.b16 %v3522, %v3514
      %v4427 = vpack.c.b16 %v3523, %v3515
      %v4428 = vpack.c.b16 %v3524, %v3516
      %v4429 = vpack.c.b16 %v3525, %v3517
      %v4430 = vpack.c.b16 %v3526, %v3518
      %v4431 = vpack.c.b16 %v3527, %v3519
      %v4432 = vpack.c.b16 %v3528, %v3520
      %v4433 = vpack.c.b16 %v3529, %v3521
      %v4434 = vpack.c.b16 %v3538, %v3530
      %v4435 = vpack.c.b16 %v3539, %v3531
      %v4436 = vpack.c.b16 %v3540, %v3532
      %v4437 = vpack.c.b16 %v3541, %v3533
      %v4438 = vpack.c.b16 %v3542, %v3534
      %v4439 = vpack.c.b16 %v3543, %v3535
      %v4440 = vpack.c.b16 %v3544, %v3536
      %v4441 = vpack.c.b16 %v3545, %v3537
      %v4442 = vpack.c.b16 %v3554, %v3546
      %v4443 = vpack.c.b16 %v3555, %v3547
      %v4444 = vpack.c.b16 %v3556, %v3548
      %v4445 = vpack.c.b16 %v3557, %v3549
      %v4446 = vpack.c.b16 %v3558, %v3550
      %v4447 = vpack.c.b16 %v3559, %v3551
      %v4448 = vpack.c.b16 %v3560, %v3552
      %v4449 = vpack.c.b16 %v3561, %v3553
      %v4450 = vpack.c.b16 %v3570, %v3562
      %v4451 = vpack.c.b16 %v3571, %v3563
      %v4452 = vpack.c.b16 %v3572, %v3564
      %v4453 = vpack.c.b16 %v3573, %v3565
      %v4454 = vpack.c.b16 %v3574, %v3566
      %v4455 = vpack.c.b16 %v3575, %v3567
      %v4456 = vpack.c.b16 %v3576, %v3568
      %v4457 = vpack.c.b16 %v3577, %v3569
      %v4458 = vpack.c.b16 %v3586, %v3578
      %v4459 = vpack.c.b16 %v3587, %v3579
      %v4460 = vpack.c.b16 %v3588, %v3580
      %v4461 = vpack.c.b16 %v3589, %v3581
      %v4462 = vpack.c.b16 %v3590, %v3582
      %v4463 = vpack.c.b16 %v3591, %v3583
      %v4464 = vpack.c.b16 %v3592, %v3584
      %v4465 = vpack.c.b16 %v3593, %v3585
      %v4466 = vpack.c.b16 %v3602, %v3594
      %v4467 = vpack.c.b16 %v3603, %v3595
      %v4468 = vpack.c.b16 %v3604, %v3596
      %v4469 = vpack.c.b16 %v3605, %v3597
      %v4470 = vpack.c.b16 %v3606, %v3598
      %v4471 = vpack.c.b16 %v3607, %v3599
      %v4472 = vpack.c.b16 %v3608, %v3600
      %v4473 = vpack.c.b16 %v3609, %v3601
      %v4474 = vpack.c.b16 %v3618, %v3610
      %v4475 = vpack.c.b16 %v3619, %v3611
      %v4476 = vpack.c.b16 %v3620, %v3612
      %v4477 = vpack.c.b16 %v3621, %v3613
      %v4478 = vpack.c.b16 %v3622, %v3614
      %v4479 = vpack.c.b16 %v3623, %v3615
      %v4480 = vpack.c.b16 %v3624, %v3616
      %v4481 = vpack.c.b16 %v3625, %v3617
      %v4482 = vpack.c.b16 %v3634, %v3626
      %v4483 = vpack.c.b16 %v3635, %v3627
      %v4484 = vpack.c.b16 %v3636, %v3628
      %v4485 = vpack.c.b16 %v3637, %v3629
      %v4486 = vpack.c.b16 %v3638, %v3630
      %v4487 = vpack.c.b16 %v3639, %v3631
      %v4488 = vpack.c.b16 %v3640, %v3632
      %v4489 = vpack.c.b16 %v3641, %v3633
      %v4490 = vpack.c.b16 %v3650, %v3642
      %v4491 = vpack.c.b16 %v3651, %v3643
      %v4492 = vpack.c.b16 %v3652, %v3644
      %v4493 = vpack.c.b16 %v3653, %v3645
      %v4494 = vpack.c.b16 %v3654, %v3646
      %v4495 = vpack.c.b16 %v3655, %v3647
      %v4496 = vpack.c.b16 %v3656, %v3648
      %v4497 = vpack.c.b16 %v3657, %v3649
      %v4498 = vpack.c.b16 %v3666, %v3658
      %v4499 = vpack.c.b16 %v3667, %v3659
      %v4500 = vpack.c.b16 %v3668, %v3660
      %v4501 = vpack.c.b16 %v3669, %v3661
      %v4502 = vpack.c.b16 %v3670, %v3662
      %v4503 = vpack.c.b16 %v3671, %v3663
      %v4504 = vpack.c.b16 %v3672, %v3664
      %v4505 = vpack.c.b16 %v3673, %v3665
      %v4506 = vpack.c.b16 %v3682, %v3674
      %v4507 = vpack.c.b16 %v3683, %v3675
      %v4508 = vpack.c.b16 %v3684, %v3676
      %v4509 = vpack.c.b16 %v3685, %v3677
      %v4510 = vpack.c.b16 %v3686, %v3678
      %v4511 = vpack.c.b16 %v3687, %v3679
      %v4512 = vpack.c.b16 %v3688, %v3680
      %v4513 = vpack.c.b16 %v3689, %v3681
      %v4514 = vpack.c.b16 %v3698, %v3690
      %v4515 = vpack.c.b16 %v3699, %v3691
      %v4516 = vpack.c.b16 %v3700, %v3692
      %v4517 = vpack.c.b16 %v3701, %v3693
      %v4518 = vpack.c.b16 %v3702, %v3694
      %v4519 = vpack.c.b16 %v3703, %v3695
      %v4520 = vpack.c.b16 %v3704, %v3696
      %v4521 = vpack.c.b16 %v3705, %v3697
      %v4522 = vpack.c.b16 %v3714, %v3706
      %v4523 = vpack.c.b16 %v3715, %v3707
      %v4524 = vpack.c.b16 %v3716, %v3708
      %v4525 = vpack.c.b16 %v3717, %v3709
      %v4526 = vpack.c.b16 %v3718, %v3710
      %v4527 = vpack.c.b16 %v3719, %v3711
      %v4528 = vpack.c.b16 %v3720, %v3712
      %v4529 = vpack.c.b16 %v3721, %v3713
      %v4530 = vpack.c.b16 %v3730, %v3722
      %v4531 = vpack.c.b16 %v3731, %v3723
      %v4532 = vpack.c.b16 %v3732, %v3724
      %v4533 = vpack.c.b16 %v3733, %v3725
      %v4534 = vpack.c.b16 %v3734, %v3726
      %v4535 = vpack.c.b16 %v3735, %v3727
      %v4536 = vpack.c.b16 %v3736, %v3728
      %v4537 = vpack.c.b16 %v3737, %v3729
      %v4538 = vpack.c.b16 %v3746, %v3738
      %v4539 = vpack.c.b16 %v3747, %v3739
      %v4540 = vpack.c.b16 %v3748, %v3740
      %v4541 = vpack.c.b16 %v3749, %v3741
      %v4542 = vpack.c.b16 %v3750, %v3742
      %v4543 = vpack.c.b16 %v3751, %v3743
      %v4544 = vpack.c.b16 %v3752, %v3744
      %v4545 = vpack.c.b16 %v3753, %v3745
      %v4546 = vpack.c.b16 %v3762, %v3754
      %v4547 = vpack.c.b16 %v3763, %v3755
      %v4548 = vpack.c.b16 %v3764, %v3756
      %v4549 = vpack.c.b16 %v3765, %v3757
      %v4550 = vpack.c.b16 %v3766, %v3758
      %v4551 = vpack.c.b16 %v3767, %v3759
      %v4552 = vpack.c.b16 %v3768, %v3760
      %v4553 = vpack.c.b16 %v3769, %v3761
      %v4554 = vpack.c.b16 %v3778, %v3770
      %v4555 = vpack.c.b16 %v3779, %v3771
      %v4556 = vpack.c.b16 %v3780, %v3772
      %v4557 = vpack.c.b16 %v3781, %v3773
      %v4558 = vpack.c.b16 %v3782, %v3774
      %v4559 = vpack.c.b16 %v3783, %v3775
      %v4560 = vpack.c.b16 %v3784, %v3776
      %v4561 = vpack.c.b16 %v3785, %v3777
      %v4562 = vpack.c.b16 %v3794, %v3786
      %v4563 = vpack.c.b16 %v3795, %v3787
      %v4564 = vpack.c.b16 %v3796, %v3788
      %v4565 = vpack.c.b16 %v3797, %v3789
      %v4566 = vpack.c.b16 %v3798, %v3790
      %v4567 = vpack.c.b16 %v3799, %v3791
      %v4568 = vpack.c.b16 %v3800, %v3792
      %v4569 = vpack.c.b16 %v3801, %v3793
      %v4570 = vpack.c.b16 %v3810, %v3802
      %v4571 = vpack.c.b16 %v3811, %v3803
      %v4572 = vpack.c.b16 %v3812, %v3804
      %v4573 = vpack.c.b16 %v3813, %v3805
      %v4574 = vpack.c.b16 %v3814, %v3806
      %v4575 = vpack.c.b16 %v3815, %v3807
      %v4576 = vpack.c.b16 %v3816, %v3808
      %v4577 = vpack.c.b16 %v3817, %v3809
      %v4578 = vpack.c.b16 %v3826, %v3818
      %v4579 = vpack.c.b16 %v3827, %v3819
      %v4580 = vpack.c.b16 %v3828, %v3820
      %v4581 = vpack.c.b16 %v3829, %v3821
      %v4582 = vpack.c.b16 %v3830, %v3822
      %v4583 = vpack.c.b16 %v3831, %v3823
      %v4584 = vpack.c.b16 %v3832, %v3824
      %v4585 = vpack.c.b16 %v3833, %v3825
      %v4586 = vpack.c.b16 %v3842, %v3834
      %v4587 = vpack.c.b16 %v3843, %v3835
      %v4588 = vpack.c.b16 %v3844, %v3836
      %v4589 = vpack.c.b16 %v3845, %v3837
      %v4590 = vpack.c.b16 %v3846, %v3838
      %v4591 = vpack.c.b16 %v3847, %v3839
      %v4592 = vpack.c.b16 %v3848, %v3840
      %v4593 = vpack.c.b16 %v3849, %v3841
      %v4594 = vpack.c.b16 %v3858, %v3850
      %v4595 = vpack.c.b16 %v3859, %v3851
      %v4596 = vpack.c.b16 %v3860, %v3852
      %v4597 = vpack.c.b16 %v3861, %v3853
      %v4598 = vpack.c.b16 %v3862, %v3854
      %v4599 = vpack.c.b16 %v3863, %v3855
      %v4600 = vpack.c.b16 %v3864, %v3856
      %v4601 = vpack.c.b16 %v3865, %v3857
      %v4602 = vpack.c.b16 %v3874, %v3866
      %v4603 = vpack.c.b16 %v3875, %v3867
      %v4604 = vpack.c.b16 %v3876, %v3868
      %v4605 = vpack.c.b16 %v3877, %v3869
      %v4606 = vpack.c.b16 %v3878, %v3870
      %v4607 = vpack.c.b16 %v3879, %v3871
      %v4608 = vpack.c.b16 %v3880, %v3872
      %v4609 = vpack.c.b16 %v3881, %v3873
      %v4610 = vpack.c.b16 %v3890, %v3882
      %v4611 = vpack.c.b16 %v3891, %v3883
      %v4612 = vpack.c.b16 %v3892, %v3884
      %v4613 = vpack.c.b16 %v3893, %v3885
      %v4614 = vpack.c.b16 %v3894, %v3886
      %v4615 = vpack.c.b16 %v3895, %v3887
      %v4616 = vpack.c.b16 %v3896, %v3888
      %v4617 = vpack.c.b16 %v3897, %v3889
      %v4618 = vpack.c.b16 %v3906, %v3898
      %v4619 = vpack.c.b16 %v3907, %v3899
      %v4620 = vpack.c.b16 %v3908, %v3900
      %v4621 = vpack.c.b16 %v3909, %v3901
      %v4622 = vpack.c.b16 %v3910, %v3902
      %v4623 = vpack.c.b16 %v3911, %v3903
      %v4624 = vpack.c.b16 %v3912, %v3904
      %v4625 = vpack.c.b16 %v3913, %v3905
      %v4626 = vpack.c.b16 %v3922, %v3914
      %v4627 = vpack.c.b16 %v3923, %v3915
      %v4628 = vpack.c.b16 %v3924, %v3916
      %v4629 = vpack.c.b16 %v3925, %v3917
      %v4630 = vpack.c.b16 %v3926, %v3918
      %v4631 = vpack.c.b16 %v3927, %v3919
      %v4632 = vpack.c.b16 %v3928, %v3920
      %v4633 = vpack.c.b16 %v3929, %v3921
      %v4634 = vpack.c.b16 %v3938, %v3930
      %v4635 = vpack.c.b16 %v3939, %v3931
      %v4636 = vpack.c.b16 %v3940, %v3932
      %v4637 = vpack.c.b16 %v3941, %v3933
      %v4638 = vpack.c.b16 %v3942, %v3934
      %v4639 = vpack.c.b16 %v3943, %v3935
      %v4640 = vpack.c.b16 %v3944, %v3936
      %v4641 = vpack.c.b16 %v3945, %v3937
      %v4642 = vpack.c.b16 %v3954, %v3946
      %v4643 = vpack.c.b16 %v3955, %v3947
      %v4644 = vpack.c.b16 %v3956, %v3948
      %v4645 = vpack.c.b16 %v3957, %v3949
      %v4646 = vpack.c.b16 %v3958, %v3950
      %v4647 = vpack.c.b16 %v3959, %v3951
      %v4648 = vpack.c.b16 %v3960, %v3952
      %v4649 = vpack.c.b16 %v3961, %v3953
      %v4650 = vpack.c.b16 %v3970, %v3962
      %v4651 = vpack.c.b16 %v3971, %v3963
      %v4652 = vpack.c.b16 %v3972, %v3964
      %v4653 = vpack.c.b16 %v3973, %v3965
      %v4654 = vpack.c.b16 %v3974, %v3966
      %v4655 = vpack.c.b16 %v3975, %v3967
      %v4656 = vpack.c.b16 %v3976, %v3968
      %v4657 = vpack.c.b16 %v3977, %v3969
      %v4658 = vpack.c.b16 %v3986, %v3978
      %v4659 = vpack.c.b16 %v3987, %v3979
      %v4660 = vpack.c.b16 %v3988, %v3980
      %v4661 = vpack.c.b16 %v3989, %v3981
      %v4662 = vpack.c.b16 %v3990, %v3982
      %v4663 = vpack.c.b16 %v3991, %v3983
      %v4664 = vpack.c.b16 %v3992, %v3984
      %v4665 = vpack.c.b16 %v3993, %v3985
      %v4666 = vpack.c.b16 %v4002, %v3994
      %v4667 = vpack.c.b16 %v4003, %v3995
      %v4668 = vpack.c.b16 %v4004, %v3996
      %v4669 = vpack.c.b16 %v4005, %v3997
      %v4670 = vpack.c.b16 %v4006, %v3998
      %v4671 = vpack.c.b16 %v4007, %v3999
      %v4672 = vpack.c.b16 %v4008, %v4000
      %v4673 = vpack.c.b16 %v4009, %v4001
      %v4674 = vpack.c.b16 %v4018, %v4010
      %v4675 = vpack.c.b16 %v4019, %v4011
      %v4676 = vpack.c.b16 %v4020, %v4012
      %v4677 = vpack.c.b16 %v4021, %v4013
      %v4678 = vpack.c.b16 %v4022, %v4014
      %v4679 = vpack.c.b16 %v4023, %v4015
      %v4680 = vpack.c.b16 %v4024, %v4016
      %v4681 = vpack.c.b16 %v4025, %v4017
      %v4682 = vpack.c.b16 %v4034, %v4026
      %v4683 = vpack.c.b16 %v4035, %v4027
      %v4684 = vpack.c.b16 %v4036, %v4028
      %v4685 = vpack.c.b16 %v4037, %v4029
      %v4686 = vpack.c.b16 %v4038, %v4030
      %v4687 = vpack.c.b16 %v4039, %v4031
      %v4688 = vpack.c.b16 %v4040, %v4032
      %v4689 = vpack.c.b16 %v4041, %v4033
      %v4690 = vpack.c.b16 %v4050, %v4042
      %v4691 = vpack.c.b16 %v4051, %v4043
      %v4692 = vpack.c.b16 %v4052, %v4044
      %v4693 = vpack.c.b16 %v4053, %v4045
      %v4694 = vpack.c.b16 %v4054, %v4046
      %v4695 = vpack.c.b16 %v4055, %v4047
      %v4696 = vpack.c.b16 %v4056, %v4048
      %v4697 = vpack.c.b16 %v4057, %v4049
      %v4698 = vpack.c.b16 %v4066, %v4058
      %v4699 = vpack.c.b16 %v4067, %v4059
      %v4700 = vpack.c.b16 %v4068, %v4060
      %v4701 = vpack.c.b16 %v4069, %v4061
      %v4702 = vpack.c.b16 %v4070, %v4062
      %v4703 = vpack.c.b16 %v4071, %v4063
      %v4704 = vpack.c.b16 %v4072, %v4064
      %v4705 = vpack.c.b16 %v4073, %v4065
      %v4706 = vpack.c.b16 %v4082, %v4074
      %v4707 = vpack.c.b16 %v4083, %v4075
      %v4708 = vpack.c.b16 %v4084, %v4076
      %v4709 = vpack.c.b16 %v4085, %v4077
      %v4710 = vpack.c.b16 %v4086, %v4078
      %v4711 = vpack.c.b16 %v4087, %v4079
      %v4712 = vpack.c.b16 %v4088, %v4080
      %v4713 = vpack.c.b16 %v4089, %v4081
      %v4714 = vpack.c.b16 %v4098, %v4090
      %v4715 = vpack.c.b16 %v4099, %v4091
      %v4716 = vpack.c.b16 %v4100, %v4092
      %v4717 = vpack.c.b16 %v4101, %v4093
      %v4718 = vpack.c.b16 %v4102, %v4094
      %v4719 = vpack.c.b16 %v4103, %v4095
      %v4720 = vpack.c.b16 %v4104, %v4096
      %v4721 = vpack.c.b16 %v4105, %v4097
      %v4722 = vpack.c.b16 %v4114, %v4106
      %v4723 = vpack.c.b16 %v4115, %v4107
      %v4724 = vpack.c.b16 %v4116, %v4108
      %v4725 = vpack.c.b16 %v4117, %v4109
      %v4726 = vpack.c.b16 %v4118, %v4110
      %v4727 = vpack.c.b16 %v4119, %v4111
      %v4728 = vpack.c.b16 %v4120, %v4112
      %v4729 = vpack.c.b16 %v4121, %v4113
      %v4730 = vpack.c.b16 %v4130, %v4122
      %v4731 = vpack.c.b16 %v4131, %v4123
      %v4732 = vpack.c.b16 %v4132, %v4124
      %v4733 = vpack.c.b16 %v4133, %v4125
      %v4734 = vpack.c.b16 %v4134, %v4126
      %v4735 = vpack.c.b16 %v4135, %v4127
      %v4736 = vpack.c.b16 %v4136, %v4128
      %v4737 = vpack.c.b16 %v4137, %v4129
      %v4738 = vpack.c.b16 %v4146, %v4138
      %v4739 = vpack.c.b16 %v4147, %v4139
      %v4740 = vpack.c.b16 %v4148, %v4140
      %v4741 = vpack.c.b16 %v4149, %v4141
      %v4742 = vpack.c.b16 %v4150, %v4142
      %v4743 = vpack.c.b16 %v4151, %v4143
      %v4744 = vpack.c.b16 %v4152, %v4144
      %v4745 = vpack.c.b16 %v4153, %v4145
      %v4746 = vpack.c.b16 %v4162, %v4154
      %v4747 = vpack.c.b16 %v4163, %v4155
      %v4748 = vpack.c.b16 %v4164, %v4156
      %v4749 = vpack.c.b16 %v4165, %v4157
      %v4750 = vpack.c.b16 %v4166, %v4158
      %v4751 = vpack.c.b16 %v4167, %v4159
      %v4752 = vpack.c.b16 %v4168, %v4160
      %v4753 = vpack.c.b16 %v4169, %v4161
      %v4754 = vpack.c.b16 %v4178, %v4170
      %v4755 = vpack.c.b16 %v4179, %v4171
      %v4756 = vpack.c.b16 %v4180, %v4172
      %v4757 = vpack.c.b16 %v4181, %v4173
      %v4758 = vpack.c.b16 %v4182, %v4174
      %v4759 = vpack.c.b16 %v4183, %v4175
      %v4760 = vpack.c.b16 %v4184, %v4176
      %v4761 = vpack.c.b16 %v4185, %v4177
      %v4762 = vpack.c.b16 %v4194, %v4186
      %v4763 = vpack.c.b16 %v4195, %v4187
      %v4764 = vpack.c.b16 %v4196, %v4188
      %v4765 = vpack.c.b16 %v4197, %v4189
      %v4766 = vpack.c.b16 %v4198, %v4190
      %v4767 = vpack.c.b16 %v4199, %v4191
      %v4768 = vpack.c.b16 %v4200, %v4192
      %v4769 = vpack.c.b16 %v4201, %v4193
      %v4770 = vpack.c.b16 %v4210, %v4202
      %v4771 = vpack.c.b16 %v4211, %v4203
      %v4772 = vpack.c.b16 %v4212, %v4204
      %v4773 = vpack.c.b16 %v4213, %v4205
      %v4774 = vpack.c.b16 %v4214, %v4206
      %v4775 = vpack.c.b16 %v4215, %v4207
      %v4776 = vpack.c.b16 %v4216, %v4208
      %v4777 = vpack.c.b16 %v4217, %v4209
      %v4778 = vpack.c.b16 %v4226, %v4218
      %v4779 = vpack.c.b16 %v4227, %v4219
      %v4780 = vpack.c.b16 %v4228, %v4220
      %v4781 = vpack.c.b16 %v4229, %v4221
      %v4782 = vpack.c.b16 %v4230, %v4222
      %v4783 = vpack.c.b16 %v4231, %v4223
      %v4784 = vpack.c.b16 %v4232, %v4224
      %v4785 = vpack.c.b16 %v4233, %v4225
      %v4786 = vpack.c.b16 %v4242, %v4234
      %v4787 = vpack.c.b16 %v4243, %v4235
      %v4788 = vpack.c.b16 %v4244, %v4236
      %v4789 = vpack.c.b16 %v4245, %v4237
      %v4790 = vpack.c.b16 %v4246, %v4238
      %v4791 = vpack.c.b16 %v4247, %v4239
      %v4792 = vpack.c.b16 %v4248, %v4240
      %v4793 = vpack.c.b16 %v4249, %v4241
      %v4794 = vpack.c.b16 %v4258, %v4250
      %v4795 = vpack.c.b16 %v4259, %v4251
      %v4796 = vpack.c.b16 %v4260, %v4252
      %v4797 = vpack.c.b16 %v4261, %v4253
      %v4798 = vpack.c.b16 %v4262, %v4254
      %v4799 = vpack.c.b16 %v4263, %v4255
      %v4800 = vpack.c.b16 %v4264, %v4256
      %v4801 = vpack.c.b16 %v4265, %v4257
      %v4802 = vpack.c.b16 %v4274, %v4266
      %v4803 = vpack.c.b16 %v4275, %v4267
      %v4804 = vpack.c.b16 %v4276, %v4268
      %v4805 = vpack.c.b16 %v4277, %v4269
      %v4806 = vpack.c.b16 %v4278, %v4270
      %v4807 = vpack.c.b16 %v4279, %v4271
      %v4808 = vpack.c.b16 %v4280, %v4272
      %v4809 = vpack.c.b16 %v4281, %v4273
      %v4810 = vpack.c.b16 %v4290, %v4282
      %v4811 = vpack.c.b16 %v4291, %v4283
      %v4812 = vpack.c.b16 %v4292, %v4284
      %v4813 = vpack.c.b16 %v4293, %v4285
      %v4814 = vpack.c.b16 %v4294, %v4286
      %v4815 = vpack.c.b16 %v4295, %v4287
      %v4816 = vpack.c.b16 %v4296, %v4288
      %v4817 = vpack.c.b16 %v4297, %v4289
      %v4818 = vpack.c.b16 %v4306, %v4298
      %v4819 = vpack.c.b16 %v4307, %v4299
      %v4820 = vpack.c.b16 %v4308, %v4300
      %v4821 = vpack.c.b16 %v4309, %v4301
      %v4822 = vpack.c.b16 %v4310, %v4302
      %v4823 = vpack.c.b16 %v4311, %v4303
      %v4824 = vpack.c.b16 %v4312, %v4304
      %v4825 = vpack.c.b16 %v4313, %v4305
      %5338 = vmatprep.subr.bf16.mxu0 %v4315
      %5339 = vmatpush1.bf16.msra.mxu0 %v4314
      %5340 = vmatprep.subr.bf16.mxu0 %v4323
      %5341 = vmatpush1.bf16.msra.mxu0 %v4322
      %5342 = vmatprep.subr.bf16.mxu0 %v4331
      %5343 = vmatpush1.bf16.msra.mxu0 %v4330
      %5344 = vmatprep.subr.bf16.mxu0 %v4339
      %5345 = vmatpush1.bf16.msra.mxu0 %v4338
      %5346 = vmatprep.subr.bf16.mxu0 %v4347
      %5347 = vmatpush1.bf16.msra.mxu0 %v4346
      %5348 = vmatprep.subr.bf16.mxu0 %v4355
      %5349 = vmatpush1.bf16.msra.mxu0 %v4354
      %5350 = vmatprep.subr.bf16.mxu0 %v4363
      %5351 = vmatpush1.bf16.msra.mxu0 %v4362
      %5352 = vmatprep.subr.bf16.mxu0 %v4371
      %5353 = vmatpush1.bf16.msra.mxu0 %v4370
      %5354 = vmatprep.subr.bf16.mxu0 %v4379
      %5355 = vmatpush1.bf16.msra.mxu0 %v4378
      %5356 = vmatprep.subr.bf16.mxu0 %v4387
      %5357 = vmatpush1.bf16.msra.mxu0 %v4386
      %5358 = vmatprep.subr.bf16.mxu0 %v4395
      %5359 = vmatpush1.bf16.msra.mxu0 %v4394
      %5360 = vmatprep.subr.bf16.mxu0 %v4403
      %5361 = vmatpush1.bf16.msra.mxu0 %v4402
      %5362 = vmatprep.subr.bf16.mxu0 %v4411
      %5363 = vmatpush1.bf16.msra.mxu0 %v4410
      %5364 = vmatprep.subr.bf16.mxu0 %v4419
      %5365 = vmatpush1.bf16.msra.mxu0 %v4418
      %5366 = vmatprep.subr.bf16.mxu0 %v4427
      %5367 = vmatpush1.bf16.msra.mxu0 %v4426
      %5368 = vmatprep.subr.bf16.mxu0 %v4435
      %5369 = vmatpush1.bf16.msra.mxu0 %v4434
      %5370 = vmatprep.mubr.bf16.mxu0 %v2217
      %5371 = vmatmul.mubr.bf16.gmra.mrb[0].mxu0 %v2216
      %v5372 = vpop.f32.mrb[0].mxu0
      %v5373 = vadd.f32 %v2741, %v5372
      %v5374 = vpop.f32.mrb[0].mxu0
      %v5375 = vadd.f32 %v2745, %v5374
      %v5376 = vpop.f32.mrb[0].mxu0
      %v5377 = vadd.f32 %v2741, %v5376
      %v5378 = vpop.f32.mrb[0].mxu0
      %v5379 = vadd.f32 %v2745, %v5378
      %5380 = vdwg.mxu0
      %5381 = vmatprep.subr.bf16.mxu0 %v4443
      %5382 = vmatpush1.bf16.msra.mxu0 %v4442
      %5383 = vmatprep.subr.bf16.mxu0 %v4451
      %5384 = vmatpush1.bf16.msra.mxu0 %v4450
      %5385 = vmatprep.subr.bf16.mxu0 %v4459
      %5386 = vmatpush1.bf16.msra.mxu0 %v4458
      %5387 = vmatprep.subr.bf16.mxu0 %v4467
      %5388 = vmatpush1.bf16.msra.mxu0 %v4466
      %5389 = vmatprep.subr.bf16.mxu0 %v4475
      %5390 = vmatpush1.bf16.msra.mxu0 %v4474
      %5391 = vmatprep.subr.bf16.mxu0 %v4483
      %5392 = vmatpush1.bf16.msra.mxu0 %v4482
      %5393 = vmatprep.subr.bf16.mxu0 %v4491
      %5394 = vmatpush1.bf16.msra.mxu0 %v4490
      %5395 = vmatprep.subr.bf16.mxu0 %v4499
      %5396 = vmatpush1.bf16.msra.mxu0 %v4498
      %5397 = vmatprep.subr.bf16.mxu0 %v4507
      %5398 = vmatpush1.bf16.msra.mxu0 %v4506
      %5399 = vmatprep.subr.bf16.mxu0 %v4515
      %5400 = vmatpush1.bf16.msra.mxu0 %v4514
      %5401 = vmatprep.subr.bf16.mxu0 %v4523
      %5402 = vmatpush1.bf16.msra.mxu0 %v4522
      %5403 = vmatprep.subr.bf16.mxu0 %v4531
      %5404 = vmatpush1.bf16.msra.mxu0 %v4530
      %5405 = vmatprep.subr.bf16.mxu0 %v4539
      %5406 = vmatpush1.bf16.msra.mxu0 %v4538
      %5407 = vmatprep.subr.bf16.mxu0 %v4547
      %5408 = vmatpush1.bf16.msra.mxu0 %v4546
      %5409 = vmatprep.subr.bf16.mxu0 %v4555
      %5410 = vmatpush1.bf16.msra.mxu0 %v4554
      %5411 = vmatprep.subr.bf16.mxu0 %v4563
      %5412 = vmatpush1.bf16.msra.mxu0 %v4562
      %5413 = vmatprep.mubr.bf16.mxu0 %v2219
      %5414 = vmatmul.mubr.bf16.gmra.mrb[0].mxu0 %v2218
      %v5415 = vpop.f32.mrb[0].mxu0
      %v5416 = vadd.f32 %v5373, %v5415
      %v5417 = vpop.f32.mrb[0].mxu0
      %v5418 = vadd.f32 %v5375, %v5417
      %v5419 = vpop.f32.mrb[0].mxu0
      %v5420 = vadd.f32 %v5377, %v5419
      %v5421 = vpop.f32.mrb[0].mxu0
      %v5422 = vadd.f32 %v5379, %v5421
      %5423 = vdwg.mxu0
      %5424 = vmatprep.subr.bf16.mxu0 %v4571
      %5425 = vmatpush1.bf16.msra.mxu0 %v4570
      %5426 = vmatprep.subr.bf16.mxu0 %v4579
      %5427 = vmatpush1.bf16.msra.mxu0 %v4578
      %5428 = vmatprep.subr.bf16.mxu0 %v4587
      %5429 = vmatpush1.bf16.msra.mxu0 %v4586
      %5430 = vmatprep.subr.bf16.mxu0 %v4595
      %5431 = vmatpush1.bf16.msra.mxu0 %v4594
      %5432 = vmatprep.subr.bf16.mxu0 %v4603
      %5433 = vmatpush1.bf16.msra.mxu0 %v4602
      %5434 = vmatprep.subr.bf16.mxu0 %v4611
      %5435 = vmatpush1.bf16.msra.mxu0 %v4610
      %5436 = vmatprep.subr.bf16.mxu0 %v4619
      %5437 = vmatpush1.bf16.msra.mxu0 %v4618
      %5438 = vmatprep.subr.bf16.mxu0 %v4627
      %5439 = vmatpush1.bf16.msra.mxu0 %v4626
      %5440 = vmatprep.subr.bf16.mxu0 %v4635
      %5441 = vmatpush1.bf16.msra.mxu0 %v4634
      %5442 = vmatprep.subr.bf16.mxu0 %v4643
      %5443 = vmatpush1.bf16.msra.mxu0 %v4642
      %5444 = vmatprep.subr.bf16.mxu0 %v4651
      %5445 = vmatpush1.bf16.msra.mxu0 %v4650
      %5446 = vmatprep.subr.bf16.mxu0 %v4659
      %5447 = vmatpush1.bf16.msra.mxu0 %v4658
      %5448 = vmatprep.subr.bf16.mxu0 %v4667
      %5449 = vmatpush1.bf16.msra.mxu0 %v4666
      %5450 = vmatprep.subr.bf16.mxu0 %v4675
      %5451 = vmatpush1.bf16.msra.mxu0 %v4674
      %5452 = vmatprep.subr.bf16.mxu0 %v4683
      %5453 = vmatpush1.bf16.msra.mxu0 %v4682
      %5454 = vmatprep.subr.bf16.mxu0 %v4691
      %5455 = vmatpush1.bf16.msra.mxu0 %v4690
      %5456 = vmatprep.mubr.bf16.mxu0 %v2221
      %5457 = vmatmul.mubr.bf16.gmra.mrb[0].mxu0 %v2220
      %v5458 = vpop.f32.mrb[0].mxu0
      %v5459 = vadd.f32 %v5416, %v5458
      %v5460 = vpop.f32.mrb[0].mxu0
      %v5461 = vadd.f32 %v5418, %v5460
      %v5462 = vpop.f32.mrb[0].mxu0
      %v5463 = vadd.f32 %v5420, %v5462
      %v5464 = vpop.f32.mrb[0].mxu0
      %v5465 = vadd.f32 %v5422, %v5464
      %5466 = vdwg.mxu0
      %5467 = vmatprep.subr.bf16.mxu0 %v4699
      %5468 = vmatpush1.bf16.msra.mxu0 %v4698
      %5469 = vmatprep.subr.bf16.mxu0 %v4707
      %5470 = vmatpush1.bf16.msra.mxu0 %v4706
      %5471 = vmatprep.subr.bf16.mxu0 %v4715
      %5472 = vmatpush1.bf16.msra.mxu0 %v4714
      %5473 = vmatprep.subr.bf16.mxu0 %v4723
      %5474 = vmatpush1.bf16.msra.mxu0 %v4722
      %5475 = vmatprep.subr.bf16.mxu0 %v4731
      %5476 = vmatpush1.bf16.msra.mxu0 %v4730
      %5477 = vmatprep.subr.bf16.mxu0 %v4739
      %5478 = vmatpush1.bf16.msra.mxu0 %v4738
      %5479 = vmatprep.subr.bf16.mxu0 %v4747
      %5480 = vmatpush1.bf16.msra.mxu0 %v4746
      %5481 = vmatprep.subr.bf16.mxu0 %v4755
      %5482 = vmatpush1.bf16.msra.mxu0 %v4754
      %5483 = vmatprep.subr.bf16.mxu0 %v4763
      %5484 = vmatpush1.bf16.msra.mxu0 %v4762
      %5485 = vmatprep.subr.bf16.mxu0 %v4771
      %5486 = vmatpush1.bf16.msra.mxu0 %v4770
      %5487 = vmatprep.subr.bf16.mxu0 %v4779
      %5488 = vmatpush1.bf16.msra.mxu0 %v4778
      %5489 = vmatprep.subr.bf16.mxu0 %v4787
      %5490 = vmatpush1.bf16.msra.mxu0 %v4786
      %5491 = vmatprep.subr.bf16.mxu0 %v4795
      %5492 = vmatpush1.bf16.msra.mxu0 %v4794
      %5493 = vmatprep.subr.bf16.mxu0 %v4803
      %5494 = vmatpush1.bf16.msra.mxu0 %v4802
      %5495 = vmatprep.subr.bf16.mxu0 %v4811
      %5496 = vmatpush1.bf16.msra.mxu0 %v4810
      %5497 = vmatprep.subr.bf16.mxu0 %v4819
      %5498 = vmatpush1.bf16.msra.mxu0 %v4818
      %5499 = vmatprep.mubr.bf16.mxu0 %v2223
      %5500 = vmatmul.mubr.bf16.gmra.mrb[0].mxu0 %v2222
      %v5501 = vpop.f32.mrb[0].mxu0
      %v5502 = vadd.f32 %v5459, %v5501
      %v5503 = vpop.f32.mrb[0].mxu0
      %v5504 = vadd.f32 %v5461, %v5503
      %v5505 = vpop.f32.mrb[0].mxu0
      %v5506 = vadd.f32 %v5463, %v5505
      %v5507 = vpop.f32.mrb[0].mxu0
      %v5508 = vadd.f32 %v5465, %v5507
      %5509 = vdwg.mxu0
      %5510 = vmatprep.subr.bf16.mxu0 %v4317
      %5511 = vmatpush1.bf16.msra.mxu0 %v4316
      %5512 = vmatprep.subr.bf16.mxu0 %v4325
      %5513 = vmatpush1.bf16.msra.mxu0 %v4324
      %5514 = vmatprep.subr.bf16.mxu0 %v4333
      %5515 = vmatpush1.bf16.msra.mxu0 %v4332
      %5516 = vmatprep.subr.bf16.mxu0 %v4341
      %5517 = vmatpush1.bf16.msra.mxu0 %v4340
      %5518 = vmatprep.subr.bf16.mxu0 %v4349
      %5519 = vmatpush1.bf16.msra.mxu0 %v4348
      %5520 = vmatprep.subr.bf16.mxu0 %v4357
      %5521 = vmatpush1.bf16.msra.mxu0 %v4356
      %5522 = vmatprep.subr.bf16.mxu0 %v4365
      %5523 = vmatpush1.bf16.msra.mxu0 %v4364
      %5524 = vmatprep.subr.bf16.mxu0 %v4373
      %5525 = vmatpush1.bf16.msra.mxu0 %v4372
      %5526 = vmatprep.subr.bf16.mxu0 %v4381
      %5527 = vmatpush1.bf16.msra.mxu0 %v4380
      %5528 = vmatprep.subr.bf16.mxu0 %v4389
      %5529 = vmatpush1.bf16.msra.mxu0 %v4388
      %5530 = vmatprep.subr.bf16.mxu0 %v4397
      %5531 = vmatpush1.bf16.msra.mxu0 %v4396
      %5532 = vmatprep.subr.bf16.mxu0 %v4405
      %5533 = vmatpush1.bf16.msra.mxu0 %v4404
      %5534 = vmatprep.subr.bf16.mxu0 %v4413
      %5535 = vmatpush1.bf16.msra.mxu0 %v4412
      %5536 = vmatprep.subr.bf16.mxu0 %v4421
      %5537 = vmatpush1.bf16.msra.mxu0 %v4420
      %5538 = vmatprep.subr.bf16.mxu0 %v4429
      %5539 = vmatpush1.bf16.msra.mxu0 %v4428
      %5540 = vmatprep.subr.bf16.mxu0 %v4437
      %5541 = vmatpush1.bf16.msra.mxu0 %v4436
      %5542 = vmatprep.mubr.bf16.mxu0 %v2217
      %5543 = vmatmul.mubr.bf16.gmra.mrb[0].mxu0 %v2216
      %v5544 = vpop.f32.mrb[0].mxu0
      %v5545 = vadd.f32 %v2749, %v5544
      %v5546 = vpop.f32.mrb[0].mxu0
      %v5547 = vadd.f32 %v2753, %v5546
      %v5548 = vpop.f32.mrb[0].mxu0
      %v5549 = vadd.f32 %v2749, %v5548
      %v5550 = vpop.f32.mrb[0].mxu0
      %v5551 = vadd.f32 %v2753, %v5550
      %5552 = vdwg.mxu0
      %5553 = vmatprep.subr.bf16.mxu0 %v4445
      %5554 = vmatpush1.bf16.msra.mxu0 %v4444
      %5555 = vmatprep.subr.bf16.mxu0 %v4453
      %5556 = vmatpush1.bf16.msra.mxu0 %v4452
      %5557 = vmatprep.subr.bf16.mxu0 %v4461
      %5558 = vmatpush1.bf16.msra.mxu0 %v4460
      %5559 = vmatprep.subr.bf16.mxu0 %v4469
      %5560 = vmatpush1.bf16.msra.mxu0 %v4468
      %5561 = vmatprep.subr.bf16.mxu0 %v4477
      %5562 = vmatpush1.bf16.msra.mxu0 %v4476
      %5563 = vmatprep.subr.bf16.mxu0 %v4485
      %5564 = vmatpush1.bf16.msra.mxu0 %v4484
      %5565 = vmatprep.subr.bf16.mxu0 %v4493
      %5566 = vmatpush1.bf16.msra.mxu0 %v4492
      %5567 = vmatprep.subr.bf16.mxu0 %v4501
      %5568 = vmatpush1.bf16.msra.mxu0 %v4500
      %5569 = vmatprep.subr.bf16.mxu0 %v4509
      %5570 = vmatpush1.bf16.msra.mxu0 %v4508
      %5571 = vmatprep.subr.bf16.mxu0 %v4517
      %5572 = vmatpush1.bf16.msra.mxu0 %v4516
      %5573 = vmatprep.subr.bf16.mxu0 %v4525
      %5574 = vmatpush1.bf16.msra.mxu0 %v4524
      %5575 = vmatprep.subr.bf16.mxu0 %v4533
      %5576 = vmatpush1.bf16.msra.mxu0 %v4532
      %5577 = vmatprep.subr.bf16.mxu0 %v4541
      %5578 = vmatpush1.bf16.msra.mxu0 %v4540
      %5579 = vmatprep.subr.bf16.mxu0 %v4549
      %5580 = vmatpush1.bf16.msra.mxu0 %v4548
      %5581 = vmatprep.subr.bf16.mxu0 %v4557
      %5582 = vmatpush1.bf16.msra.mxu0 %v4556
      %5583 = vmatprep.subr.bf16.mxu0 %v4565
      %5584 = vmatpush1.bf16.msra.mxu0 %v4564
      %5585 = vmatprep.mubr.bf16.mxu0 %v2219
      %5586 = vmatmul.mubr.bf16.gmra.mrb[0].mxu0 %v2218
      %v5587 = vpop.f32.mrb[0].mxu0
      %v5588 = vadd.f32 %v5545, %v5587
      %v5589 = vpop.f32.mrb[0].mxu0
      %v5590 = vadd.f32 %v5547, %v5589
      %v5591 = vpop.f32.mrb[0].mxu0
      %v5592 = vadd.f32 %v5549, %v5591
      %v5593 = vpop.f32.mrb[0].mxu0
      %v5594 = vadd.f32 %v5551, %v5593
      %5595 = vdwg.mxu0
      %5596 = vmatprep.subr.bf16.mxu0 %v4573
      %5597 = vmatpush1.bf16.msra.mxu0 %v4572
      %5598 = vmatprep.subr.bf16.mxu0 %v4581
      %5599 = vmatpush1.bf16.msra.mxu0 %v4580
      %5600 = vmatprep.subr.bf16.mxu0 %v4589
      %5601 = vmatpush1.bf16.msra.mxu0 %v4588
      %5602 = vmatprep.subr.bf16.mxu0 %v4597
      %5603 = vmatpush1.bf16.msra.mxu0 %v4596
      %5604 = vmatprep.subr.bf16.mxu0 %v4605
      %5605 = vmatpush1.bf16.msra.mxu0 %v4604
      %5606 = vmatprep.subr.bf16.mxu0 %v4613
      %5607 = vmatpush1.bf16.msra.mxu0 %v4612
      %5608 = vmatprep.subr.bf16.mxu0 %v4621
      %5609 = vmatpush1.bf16.msra.mxu0 %v4620
      %5610 = vmatprep.subr.bf16.mxu0 %v4629
      %5611 = vmatpush1.bf16.msra.mxu0 %v4628
      %5612 = vmatprep.subr.bf16.mxu0 %v4637
      %5613 = vmatpush1.bf16.msra.mxu0 %v4636
      %5614 = vmatprep.subr.bf16.mxu0 %v4645
      %5615 = vmatpush1.bf16.msra.mxu0 %v4644
      %5616 = vmatprep.subr.bf16.mxu0 %v4653
      %5617 = vmatpush1.bf16.msra.mxu0 %v4652
      %5618 = vmatprep.subr.bf16.mxu0 %v4661
      %5619 = vmatpush1.bf16.msra.mxu0 %v4660
      %5620 = vmatprep.subr.bf16.mxu0 %v4669
      %5621 = vmatpush1.bf16.msra.mxu0 %v4668
      %5622 = vmatprep.subr.bf16.mxu0 %v4677
      %5623 = vmatpush1.bf16.msra.mxu0 %v4676
      %5624 = vmatprep.subr.bf16.mxu0 %v4685
      %5625 = vmatpush1.bf16.msra.mxu0 %v4684
      %5626 = vmatprep.subr.bf16.mxu0 %v4693
      %5627 = vmatpush1.bf16.msra.mxu0 %v4692
      %5628 = vmatprep.mubr.bf16.mxu0 %v2221
      %5629 = vmatmul.mubr.bf16.gmra.mrb[0].mxu0 %v2220
      %v5630 = vpop.f32.mrb[0].mxu0
      %v5631 = vadd.f32 %v5588, %v5630
      %v5632 = vpop.f32.mrb[0].mxu0
      %v5633 = vadd.f32 %v5590, %v5632
      %v5634 = vpop.f32.mrb[0].mxu0
      %v5635 = vadd.f32 %v5592, %v5634
      %v5636 = vpop.f32.mrb[0].mxu0
      %v5637 = vadd.f32 %v5594, %v5636
      %5638 = vdwg.mxu0
      %5639 = vmatprep.subr.bf16.mxu0 %v4701
      %5640 = vmatpush1.bf16.msra.mxu0 %v4700
      %5641 = vmatprep.subr.bf16.mxu0 %v4709
      %5642 = vmatpush1.bf16.msra.mxu0 %v4708
      %5643 = vmatprep.subr.bf16.mxu0 %v4717
      %5644 = vmatpush1.bf16.msra.mxu0 %v4716
      %5645 = vmatprep.subr.bf16.mxu0 %v4725
      %5646 = vmatpush1.bf16.msra.mxu0 %v4724
      %5647 = vmatprep.subr.bf16.mxu0 %v4733
      %5648 = vmatpush1.bf16.msra.mxu0 %v4732
      %5649 = vmatprep.subr.bf16.mxu0 %v4741
      %5650 = vmatpush1.bf16.msra.mxu0 %v4740
      %5651 = vmatprep.subr.bf16.mxu0 %v4749
      %5652 = vmatpush1.bf16.msra.mxu0 %v4748
      %5653 = vmatprep.subr.bf16.mxu0 %v4757
      %5654 = vmatpush1.bf16.msra.mxu0 %v4756
      %5655 = vmatprep.subr.bf16.mxu0 %v4765
      %5656 = vmatpush1.bf16.msra.mxu0 %v4764
      %5657 = vmatprep.subr.bf16.mxu0 %v4773
      %5658 = vmatpush1.bf16.msra.mxu0 %v4772
      %5659 = vmatprep.subr.bf16.mxu0 %v4781
      %5660 = vmatpush1.bf16.msra.mxu0 %v4780
      %5661 = vmatprep.subr.bf16.mxu0 %v4789
      %5662 = vmatpush1.bf16.msra.mxu0 %v4788
      %5663 = vmatprep.subr.bf16.mxu0 %v4797
      %5664 = vmatpush1.bf16.msra.mxu0 %v4796
      %5665 = vmatprep.subr.bf16.mxu0 %v4805
      %5666 = vmatpush1.bf16.msra.mxu0 %v4804
      %5667 = vmatprep.subr.bf16.mxu0 %v4813
      %5668 = vmatpush1.bf16.msra.mxu0 %v4812
      %5669 = vmatprep.subr.bf16.mxu0 %v4821
      %5670 = vmatpush1.bf16.msra.mxu0 %v4820
      %5671 = vmatprep.mubr.bf16.mxu0 %v2223
      %5672 = vmatmul.mubr.bf16.gmra.mrb[0].mxu0 %v2222
      %v5673 = vpop.f32.mrb[0].mxu0
      %v5674 = vadd.f32 %v5631, %v5673
      %v5675 = vpop.f32.mrb[0].mxu0
      %v5676 = vadd.f32 %v5633, %v5675
      %v5677 = vpop.f32.mrb[0].mxu0
      %v5678 = vadd.f32 %v5635, %v5677
      %v5679 = vpop.f32.mrb[0].mxu0
      %v5680 = vadd.f32 %v5637, %v5679
      %5681 = vdwg.mxu0
      %5682 = vmatprep.subr.bf16.mxu0 %v4319
      %5683 = vmatpush1.bf16.msra.mxu0 %v4318
      %5684 = vmatprep.subr.bf16.mxu0 %v4327
      %5685 = vmatpush1.bf16.msra.mxu0 %v4326
      %5686 = vmatprep.subr.bf16.mxu0 %v4335
      %5687 = vmatpush1.bf16.msra.mxu0 %v4334
      %5688 = vmatprep.subr.bf16.mxu0 %v4343
      %5689 = vmatpush1.bf16.msra.mxu0 %v4342
      %5690 = vmatprep.subr.bf16.mxu0 %v4351
      %5691 = vmatpush1.bf16.msra.mxu0 %v4350
      %5692 = vmatprep.subr.bf16.mxu0 %v4359
      %5693 = vmatpush1.bf16.msra.mxu0 %v4358
      %5694 = vmatprep.subr.bf16.mxu0 %v4367
      %5695 = vmatpush1.bf16.msra.mxu0 %v4366
      %5696 = vmatprep.subr.bf16.mxu0 %v4375
      %5697 = vmatpush1.bf16.msra.mxu0 %v4374
      %5698 = vmatprep.subr.bf16.mxu0 %v4383
      %5699 = vmatpush1.bf16.msra.mxu0 %v4382
      %5700 = vmatprep.subr.bf16.mxu0 %v4391
      %5701 = vmatpush1.bf16.msra.mxu0 %v4390
      %5702 = vmatprep.subr.bf16.mxu0 %v4399
      %5703 = vmatpush1.bf16.msra.mxu0 %v4398
      %5704 = vmatprep.subr.bf16.mxu0 %v4407
      %5705 = vmatpush1.bf16.msra.mxu0 %v4406
      %5706 = vmatprep.subr.bf16.mxu0 %v4415
      %5707 = vmatpush1.bf16.msra.mxu0 %v4414
      %5708 = vmatprep.subr.bf16.mxu0 %v4423
      %5709 = vmatpush1.bf16.msra.mxu0 %v4422
      %5710 = vmatprep.subr.bf16.mxu0 %v4431
      %5711 = vmatpush1.bf16.msra.mxu0 %v4430
      %5712 = vmatprep.subr.bf16.mxu0 %v4439
      %5713 = vmatpush1.bf16.msra.mxu0 %v4438
      %5714 = vmatprep.mubr.bf16.mxu0 %v2217
      %5715 = vmatmul.mubr.bf16.gmra.mrb[0].mxu0 %v2216
      %v5716 = vpop.f32.mrb[0].mxu0
      %v5717 = vadd.f32 %v2757, %v5716
      %v5718 = vpop.f32.mrb[0].mxu0
      %v5719 = vadd.f32 %v2761, %v5718
      %v5720 = vpop.f32.mrb[0].mxu0
      %v5721 = vadd.f32 %v2757, %v5720
      %v5722 = vpop.f32.mrb[0].mxu0
      %v5723 = vadd.f32 %v2761, %v5722
      %5724 = vdwg.mxu0
      %5725 = vmatprep.subr.bf16.mxu0 %v4447
      %5726 = vmatpush1.bf16.msra.mxu0 %v4446
      %5727 = vmatprep.subr.bf16.mxu0 %v4455
      %5728 = vmatpush1.bf16.msra.mxu0 %v4454
      %5729 = vmatprep.subr.bf16.mxu0 %v4463
      %5730 = vmatpush1.bf16.msra.mxu0 %v4462
      %5731 = vmatprep.subr.bf16.mxu0 %v4471
      %5732 = vmatpush1.bf16.msra.mxu0 %v4470
      %5733 = vmatprep.subr.bf16.mxu0 %v4479
      %5734 = vmatpush1.bf16.msra.mxu0 %v4478
      %5735 = vmatprep.subr.bf16.mxu0 %v4487
      %5736 = vmatpush1.bf16.msra.mxu0 %v4486
      %5737 = vmatprep.subr.bf16.mxu0 %v4495
      %5738 = vmatpush1.bf16.msra.mxu0 %v4494
      %5739 = vmatprep.subr.bf16.mxu0 %v4503
      %5740 = vmatpush1.bf16.msra.mxu0 %v4502
      %5741 = vmatprep.subr.bf16.mxu0 %v4511
      %5742 = vmatpush1.bf16.msra.mxu0 %v4510
      %5743 = vmatprep.subr.bf16.mxu0 %v4519
      %5744 = vmatpush1.bf16.msra.mxu0 %v4518
      %5745 = vmatprep.subr.bf16.mxu0 %v4527
      %5746 = vmatpush1.bf16.msra.mxu0 %v4526
      %5747 = vmatprep.subr.bf16.mxu0 %v4535
      %5748 = vmatpush1.bf16.msra.mxu0 %v4534
      %5749 = vmatprep.subr.bf16.mxu0 %v4543
      %5750 = vmatpush1.bf16.msra.mxu0 %v4542
      %5751 = vmatprep.subr.bf16.mxu0 %v4551
      %5752 = vmatpush1.bf16.msra.mxu0 %v4550
      %5753 = vmatprep.subr.bf16.mxu0 %v4559
      %5754 = vmatpush1.bf16.msra.mxu0 %v4558
      %5755 = vmatprep.subr.bf16.mxu0 %v4567
      %5756 = vmatpush1.bf16.msra.mxu0 %v4566
      %5757 = vmatprep.mubr.bf16.mxu0 %v2219
      %5758 = vmatmul.mubr.bf16.gmra.mrb[0].mxu0 %v2218
      %v5759 = vpop.f32.mrb[0].mxu0
      %v5760 = vadd.f32 %v5717, %v5759
      %v5761 = vpop.f32.mrb[0].mxu0
      %v5762 = vadd.f32 %v5719, %v5761
      %v5763 = vpop.f32.mrb[0].mxu0
      %v5764 = vadd.f32 %v5721, %v5763
      %v5765 = vpop.f32.mrb[0].mxu0
      %v5766 = vadd.f32 %v5723, %v5765
      %5767 = vdwg.mxu0
      %5768 = vmatprep.subr.bf16.mxu0 %v4575
      %5769 = vmatpush1.bf16.msra.mxu0 %v4574
      %5770 = vmatprep.subr.bf16.mxu0 %v4583
      %5771 = vmatpush1.bf16.msra.mxu0 %v4582
      %5772 = vmatprep.subr.bf16.mxu0 %v4591
      %5773 = vmatpush1.bf16.msra.mxu0 %v4590
      %5774 = vmatprep.subr.bf16.mxu0 %v4599
      %5775 = vmatpush1.bf16.msra.mxu0 %v4598
      %5776 = vmatprep.subr.bf16.mxu0 %v4607
      %5777 = vmatpush1.bf16.msra.mxu0 %v4606
      %5778 = vmatprep.subr.bf16.mxu0 %v4615
      %5779 = vmatpush1.bf16.msra.mxu0 %v4614
      %5780 = vmatprep.subr.bf16.mxu0 %v4623
      %5781 = vmatpush1.bf16.msra.mxu0 %v4622
      %5782 = vmatprep.subr.bf16.mxu0 %v4631
      %5783 = vmatpush1.bf16.msra.mxu0 %v4630
      %5784 = vmatprep.subr.bf16.mxu0 %v4639
      %5785 = vmatpush1.bf16.msra.mxu0 %v4638
      %5786 = vmatprep.subr.bf16.mxu0 %v4647
      %5787 = vmatpush1.bf16.msra.mxu0 %v4646
      %5788 = vmatprep.subr.bf16.mxu0 %v4655
      %5789 = vmatpush1.bf16.msra.mxu0 %v4654
      %5790 = vmatprep.subr.bf16.mxu0 %v4663
      %5791 = vmatpush1.bf16.msra.mxu0 %v4662
      %5792 = vmatprep.subr.bf16.mxu0 %v4671
      %5793 = vmatpush1.bf16.msra.mxu0 %v4670
      %5794 = vmatprep.subr.bf16.mxu0 %v4679
      %5795 = vmatpush1.bf16.msra.mxu0 %v4678
      %5796 = vmatprep.subr.bf16.mxu0 %v4687
      %5797 = vmatpush1.bf16.msra.mxu0 %v4686
      %5798 = vmatprep.subr.bf16.mxu0 %v4695
      %5799 = vmatpush1.bf16.msra.mxu0 %v4694
      %5800 = vmatprep.mubr.bf16.mxu0 %v2221
      %5801 = vmatmul.mubr.bf16.gmra.mrb[0].mxu0 %v2220
      %v5802 = vpop.f32.mrb[0].mxu0
      %v5803 = vadd.f32 %v5760, %v5802
      %v5804 = vpop.f32.mrb[0].mxu0
      %v5805 = vadd.f32 %v5762, %v5804
      %v5806 = vpop.f32.mrb[0].mxu0
      %v5807 = vadd.f32 %v5764, %v5806
      %v5808 = vpop.f32.mrb[0].mxu0
      %v5809 = vadd.f32 %v5766, %v5808
      %5810 = vdwg.mxu0
      %5811 = vmatprep.subr.bf16.mxu0 %v4703
      %5812 = vmatpush1.bf16.msra.mxu0 %v4702
      %5813 = vmatprep.subr.bf16.mxu0 %v4711
      %5814 = vmatpush1.bf16.msra.mxu0 %v4710
      %5815 = vmatprep.subr.bf16.mxu0 %v4719
      %5816 = vmatpush1.bf16.msra.mxu0 %v4718
      %5817 = vmatprep.subr.bf16.mxu0 %v4727
      %5818 = vmatpush1.bf16.msra.mxu0 %v4726
      %5819 = vmatprep.subr.bf16.mxu0 %v4735
      %5820 = vmatpush1.bf16.msra.mxu0 %v4734
      %5821 = vmatprep.subr.bf16.mxu0 %v4743
      %5822 = vmatpush1.bf16.msra.mxu0 %v4742
      %5823 = vmatprep.subr.bf16.mxu0 %v4751
      %5824 = vmatpush1.bf16.msra.mxu0 %v4750
      %5825 = vmatprep.subr.bf16.mxu0 %v4759
      %5826 = vmatpush1.bf16.msra.mxu0 %v4758
      %5827 = vmatprep.subr.bf16.mxu0 %v4767
      %5828 = vmatpush1.bf16.msra.mxu0 %v4766
      %5829 = vmatprep.subr.bf16.mxu0 %v4775
      %5830 = vmatpush1.bf16.msra.mxu0 %v4774
      %5831 = vmatprep.subr.bf16.mxu0 %v4783
      %5832 = vmatpush1.bf16.msra.mxu0 %v4782
      %5833 = vmatprep.subr.bf16.mxu0 %v4791
      %5834 = vmatpush1.bf16.msra.mxu0 %v4790
      %5835 = vmatprep.subr.bf16.mxu0 %v4799
      %5836 = vmatpush1.bf16.msra.mxu0 %v4798
      %5837 = vmatprep.subr.bf16.mxu0 %v4807
      %5838 = vmatpush1.bf16.msra.mxu0 %v4806
      %5839 = vmatprep.subr.bf16.mxu0 %v4815
      %5840 = vmatpush1.bf16.msra.mxu0 %v4814
      %5841 = vmatprep.subr.bf16.mxu0 %v4823
      %5842 = vmatpush1.bf16.msra.mxu0 %v4822
      %5843 = vmatprep.mubr.bf16.mxu0 %v2223
      %5844 = vmatmul.mubr.bf16.gmra.mrb[0].mxu0 %v2222
      %v5845 = vpop.f32.mrb[0].mxu0
      %v5846 = vadd.f32 %v5803, %v5845
      %v5847 = vpop.f32.mrb[0].mxu0
      %v5848 = vadd.f32 %v5805, %v5847
      %v5849 = vpop.f32.mrb[0].mxu0
      %v5850 = vadd.f32 %v5807, %v5849
      %v5851 = vpop.f32.mrb[0].mxu0
      %v5852 = vadd.f32 %v5809, %v5851
      %5853 = vdwg.mxu0
      %5854 = vmatprep.subr.bf16.mxu0 %v4321
      %5855 = vmatpush1.bf16.msra.mxu0 %v4320
      %5856 = vmatprep.subr.bf16.mxu0 %v4329
      %5857 = vmatpush1.bf16.msra.mxu0 %v4328
      %5858 = vmatprep.subr.bf16.mxu0 %v4337
      %5859 = vmatpush1.bf16.msra.mxu0 %v4336
      %5860 = vmatprep.subr.bf16.mxu0 %v4345
      %5861 = vmatpush1.bf16.msra.mxu0 %v4344
      %5862 = vmatprep.subr.bf16.mxu0 %v4353
      %5863 = vmatpush1.bf16.msra.mxu0 %v4352
      %5864 = vmatprep.subr.bf16.mxu0 %v4361
      %5865 = vmatpush1.bf16.msra.mxu0 %v4360
      %5866 = vmatprep.subr.bf16.mxu0 %v4369
      %5867 = vmatpush1.bf16.msra.mxu0 %v4368
      %5868 = vmatprep.subr.bf16.mxu0 %v4377
      %5869 = vmatpush1.bf16.msra.mxu0 %v4376
      %5870 = vmatprep.subr.bf16.mxu0 %v4385
      %5871 = vmatpush1.bf16.msra.mxu0 %v4384
      %5872 = vmatprep.subr.bf16.mxu0 %v4393
      %5873 = vmatpush1.bf16.msra.mxu0 %v4392
      %5874 = vmatprep.subr.bf16.mxu0 %v4401
      %5875 = vmatpush1.bf16.msra.mxu0 %v4400
      %5876 = vmatprep.subr.bf16.mxu0 %v4409
      %5877 = vmatpush1.bf16.msra.mxu0 %v4408
      %5878 = vmatprep.subr.bf16.mxu0 %v4417
      %5879 = vmatpush1.bf16.msra.mxu0 %v4416
      %5880 = vmatprep.subr.bf16.mxu0 %v4425
      %5881 = vmatpush1.bf16.msra.mxu0 %v4424
      %5882 = vmatprep.subr.bf16.mxu0 %v4433
      %5883 = vmatpush1.bf16.msra.mxu0 %v4432
      %5884 = vmatprep.subr.bf16.mxu0 %v4441
      %5885 = vmatpush1.bf16.msra.mxu0 %v4440
      %5886 = vmatprep.mubr.bf16.mxu0 %v2217
      %5887 = vmatmul.mubr.bf16.gmra.mrb[0].mxu0 %v2216
      %v5888 = vpop.f32.mrb[0].mxu0
      %v5889 = vadd.f32 %v2765, %v5888
      %v5890 = vpop.f32.mrb[0].mxu0
      %v5891 = vadd.f32 %v2769, %v5890
      %v5892 = vpop.f32.mrb[0].mxu0
      %v5893 = vadd.f32 %v2765, %v5892
      %v5894 = vpop.f32.mrb[0].mxu0
      %v5895 = vadd.f32 %v2769, %v5894
      %5896 = vdwg.mxu0
      %5897 = vmatprep.subr.bf16.mxu0 %v4449
      %5898 = vmatpush1.bf16.msra.mxu0 %v4448
      %5899 = vmatprep.subr.bf16.mxu0 %v4457
      %5900 = vmatpush1.bf16.msra.mxu0 %v4456
      %5901 = vmatprep.subr.bf16.mxu0 %v4465
      %5902 = vmatpush1.bf16.msra.mxu0 %v4464
      %5903 = vmatprep.subr.bf16.mxu0 %v4473
      %5904 = vmatpush1.bf16.msra.mxu0 %v4472
      %5905 = vmatprep.subr.bf16.mxu0 %v4481
      %5906 = vmatpush1.bf16.msra.mxu0 %v4480
      %5907 = vmatprep.subr.bf16.mxu0 %v4489
      %5908 = vmatpush1.bf16.msra.mxu0 %v4488
      %5909 = vmatprep.subr.bf16.mxu0 %v4497
      %5910 = vmatpush1.bf16.msra.mxu0 %v4496
      %5911 = vmatprep.subr.bf16.mxu0 %v4505
      %5912 = vmatpush1.bf16.msra.mxu0 %v4504
      %5913 = vmatprep.subr.bf16.mxu0 %v4513
      %5914 = vmatpush1.bf16.msra.mxu0 %v4512
      %5915 = vmatprep.subr.bf16.mxu0 %v4521
      %5916 = vmatpush1.bf16.msra.mxu0 %v4520
      %5917 = vmatprep.subr.bf16.mxu0 %v4529
      %5918 = vmatpush1.bf16.msra.mxu0 %v4528
      %5919 = vmatprep.subr.bf16.mxu0 %v4537
      %5920 = vmatpush1.bf16.msra.mxu0 %v4536
      %5921 = vmatprep.subr.bf16.mxu0 %v4545
      %5922 = vmatpush1.bf16.msra.mxu0 %v4544
      %5923 = vmatprep.subr.bf16.mxu0 %v4553
      %5924 = vmatpush1.bf16.msra.mxu0 %v4552
      %5925 = vmatprep.subr.bf16.mxu0 %v4561
      %5926 = vmatpush1.bf16.msra.mxu0 %v4560
      %5927 = vmatprep.subr.bf16.mxu0 %v4569
      %5928 = vmatpush1.bf16.msra.mxu0 %v4568
      %5929 = vmatprep.mubr.bf16.mxu0 %v2219
      %5930 = vmatmul.mubr.bf16.gmra.mrb[0].mxu0 %v2218
      %v5931 = vpop.f32.mrb[0].mxu0
      %v5932 = vadd.f32 %v5889, %v5931
      %v5933 = vpop.f32.mrb[0].mxu0
      %v5934 = vadd.f32 %v5891, %v5933
      %v5935 = vpop.f32.mrb[0].mxu0
      %v5936 = vadd.f32 %v5893, %v5935
      %v5937 = vpop.f32.mrb[0].mxu0
      %v5938 = vadd.f32 %v5895, %v5937
      %5939 = vdwg.mxu0
      %5940 = vmatprep.subr.bf16.mxu0 %v4577
      %5941 = vmatpush1.bf16.msra.mxu0 %v4576
      %5942 = vmatprep.subr.bf16.mxu0 %v4585
      %5943 = vmatpush1.bf16.msra.mxu0 %v4584
      %5944 = vmatprep.subr.bf16.mxu0 %v4593
      %5945 = vmatpush1.bf16.msra.mxu0 %v4592
      %5946 = vmatprep.subr.bf16.mxu0 %v4601
      %5947 = vmatpush1.bf16.msra.mxu0 %v4600
      %5948 = vmatprep.subr.bf16.mxu0 %v4609
      %5949 = vmatpush1.bf16.msra.mxu0 %v4608
      %5950 = vmatprep.subr.bf16.mxu0 %v4617
      %5951 = vmatpush1.bf16.msra.mxu0 %v4616
      %5952 = vmatprep.subr.bf16.mxu0 %v4625
      %5953 = vmatpush1.bf16.msra.mxu0 %v4624
      %5954 = vmatprep.subr.bf16.mxu0 %v4633
      %5955 = vmatpush1.bf16.msra.mxu0 %v4632
      %5956 = vmatprep.subr.bf16.mxu0 %v4641
      %5957 = vmatpush1.bf16.msra.mxu0 %v4640
      %5958 = vmatprep.subr.bf16.mxu0 %v4649
      %5959 = vmatpush1.bf16.msra.mxu0 %v4648
      %5960 = vmatprep.subr.bf16.mxu0 %v4657
      %5961 = vmatpush1.bf16.msra.mxu0 %v4656
      %5962 = vmatprep.subr.bf16.mxu0 %v4665
      %5963 = vmatpush1.bf16.msra.mxu0 %v4664
      %5964 = vmatprep.subr.bf16.mxu0 %v4673
      %5965 = vmatpush1.bf16.msra.mxu0 %v4672
      %5966 = vmatprep.subr.bf16.mxu0 %v4681
      %5967 = vmatpush1.bf16.msra.mxu0 %v4680
      %5968 = vmatprep.subr.bf16.mxu0 %v4689
      %5969 = vmatpush1.bf16.msra.mxu0 %v4688
      %5970 = vmatprep.subr.bf16.mxu0 %v4697
      %5971 = vmatpush1.bf16.msra.mxu0 %v4696
      %5972 = vmatprep.mubr.bf16.mxu0 %v2221
      %5973 = vmatmul.mubr.bf16.gmra.mrb[0].mxu0 %v2220
      %v5974 = vpop.f32.mrb[0].mxu0
      %v5975 = vadd.f32 %v5932, %v5974
      %v5976 = vpop.f32.mrb[0].mxu0
      %v5977 = vadd.f32 %v5934, %v5976
      %v5978 = vpop.f32.mrb[0].mxu0
      %v5979 = vadd.f32 %v5936, %v5978
      %v5980 = vpop.f32.mrb[0].mxu0
      %v5981 = vadd.f32 %v5938, %v5980
      %5982 = vdwg.mxu0
      %5983 = vmatprep.subr.bf16.mxu0 %v4705
      %5984 = vmatpush1.bf16.msra.mxu0 %v4704
      %5985 = vmatprep.subr.bf16.mxu0 %v4713
      %5986 = vmatpush1.bf16.msra.mxu0 %v4712
      %5987 = vmatprep.subr.bf16.mxu0 %v4721
      %5988 = vmatpush1.bf16.msra.mxu0 %v4720
      %5989 = vmatprep.subr.bf16.mxu0 %v4729
      %5990 = vmatpush1.bf16.msra.mxu0 %v4728
      %5991 = vmatprep.subr.bf16.mxu0 %v4737
      %5992 = vmatpush1.bf16.msra.mxu0 %v4736
      %5993 = vmatprep.subr.bf16.mxu0 %v4745
      %5994 = vmatpush1.bf16.msra.mxu0 %v4744
      %5995 = vmatprep.subr.bf16.mxu0 %v4753
      %5996 = vmatpush1.bf16.msra.mxu0 %v4752
      %5997 = vmatprep.subr.bf16.mxu0 %v4761
      %5998 = vmatpush1.bf16.msra.mxu0 %v4760
      %5999 = vmatprep.subr.bf16.mxu0 %v4769
      %6000 = vmatpush1.bf16.msra.mxu0 %v4768
      %6001 = vmatprep.subr.bf16.mxu0 %v4777
      %6002 = vmatpush1.bf16.msra.mxu0 %v4776
      %6003 = vmatprep.subr.bf16.mxu0 %v4785
      %6004 = vmatpush1.bf16.msra.mxu0 %v4784
      %6005 = vmatprep.subr.bf16.mxu0 %v4793
      %6006 = vmatpush1.bf16.msra.mxu0 %v4792
      %6007 = vmatprep.subr.bf16.mxu0 %v4801
      %6008 = vmatpush1.bf16.msra.mxu0 %v4800
      %6009 = vmatprep.subr.bf16.mxu0 %v4809
      %6010 = vmatpush1.bf16.msra.mxu0 %v4808
      %6011 = vmatprep.subr.bf16.mxu0 %v4817
      %6012 = vmatpush1.bf16.msra.mxu0 %v4816
      %6013 = vmatprep.subr.bf16.mxu0 %v4825
      %6014 = vmatpush1.bf16.msra.mxu0 %v4824
      %6015 = vmatprep.mubr.bf16.mxu0 %v2223
      %6016 = vmatmul.mubr.bf16.gmra.mrb[0].mxu0 %v2222
      %v6017 = vpop.f32.mrb[0].mxu0
      %v6018 = vadd.f32 %v5975, %v6017
      %v6019 = vpop.f32.mrb[0].mxu0
      %v6020 = vadd.f32 %v5977, %v6019
      %v6021 = vpop.f32.mrb[0].mxu0
      %v6022 = vadd.f32 %v5979, %v6021
      %v6023 = vpop.f32.mrb[0].mxu0
      %v6024 = vadd.f32 %v5981, %v6023
      %6025 = vdwg.mxu0
      %v6026 = vmax.f32 %v5502, 0.0
      %v6027 = vmax.f32 %v5504, 0.0
      %v6028 = vmax.f32 %v5674, 0.0
      %v6029 = vmax.f32 %v5676, 0.0
      %v6030 = vmax.f32 %v5846, 0.0
      %v6031 = vmax.f32 %v5848, 0.0
      %v6032 = vmax.f32 %v6018, 0.0
      %v6033 = vmax.f32 %v6020, 0.0
      %v6034 = vmax.f32 %v5506, 0.0
      %v6035 = vmax.f32 %v5508, 0.0
      %v6036 = vmax.f32 %v5678, 0.0
      %v6037 = vmax.f32 %v5680, 0.0
      %v6038 = vmax.f32 %v5850, 0.0
      %v6039 = vmax.f32 %v5852, 0.0
      %v6040 = vmax.f32 %v6022, 0.0
      %v6041 = vmax.f32 %v6024, 0.0
      %v6042 = vpack.c.bf16 %v6034, %v6026
      %v6043 = vpack.c.bf16 %v6035, %v6027
      %v6044 = vpack.c.bf16 %v6036, %v6028
      %v6045 = vpack.c.bf16 %v6037, %v6029
      %v6046 = vpack.c.bf16 %v6038, %v6030
      %v6047 = vpack.c.bf16 %v6039, %v6031
      %v6048 = vpack.c.bf16 %v6040, %v6032
      %v6049 = vpack.c.bf16 %v6041, %v6033
      %v6050 = vld [vmem:[#allocation12] sm:$0xf]
      %v6051 = vld [vmem:[#allocation12 + $0x4] sm:$0xf]
      %v6052 = vld [vmem:[#allocation12 + $0x8] sm:$0xf]
      %v6053 = vld [vmem:[#allocation12 + $0xc] sm:$0xf]
      %v6054 = vld [vmem:[#allocation12 + $0x10] sm:$0xf]
      %v6055 = vld [vmem:[#allocation12 + $0x14] sm:$0xf]
      %v6056 = vld [vmem:[#allocation12 + $0x18] sm:$0xf]
      %v6057 = vld [vmem:[#allocation12 + $0x1c] sm:$0xf]
      %v6058 = vld [vmem:[#allocation12 + $0x20] sm:$0xf]
      %v6059 = vld [vmem:[#allocation12 + $0x24] sm:$0xf]
      %v6060 = vld [vmem:[#allocation12 + $0x28] sm:$0xf]
      %v6061 = vld [vmem:[#allocation12 + $0x2c] sm:$0xf]
      %v6062 = vld [vmem:[#allocation12 + $0x30] sm:$0xf]
      %v6063 = vld [vmem:[#allocation12 + $0x34] sm:$0xf]
      %v6064 = vld [vmem:[#allocation12 + $0x38] sm:$0xf]
      %v6065 = vld [vmem:[#allocation12 + $0x3c] sm:$0xf]
      %v6066 = vld [vmem:[#allocation12 + $0x40] sm:$0xf]
      %v6067 = vld [vmem:[#allocation12 + $0x44] sm:$0xf]
      %v6068 = vld [vmem:[#allocation12 + $0x48] sm:$0xf]
      %v6069 = vld [vmem:[#allocation12 + $0x4c] sm:$0xf]
      %v6070 = vld [vmem:[#allocation12 + $0x50] sm:$0xf]
      %v6071 = vld [vmem:[#allocation12 + $0x54] sm:$0xf]
      %v6072 = vld [vmem:[#allocation12 + $0x58] sm:$0xf]
      %v6073 = vld [vmem:[#allocation12 + $0x5c] sm:$0xf]
      %v6074 = vld [vmem:[#allocation12 + $0x60] sm:$0xf]
      %v6075 = vld [vmem:[#allocation12 + $0x64] sm:$0xf]
      %v6076 = vld [vmem:[#allocation12 + $0x68] sm:$0xf]
      %v6077 = vld [vmem:[#allocation12 + $0x6c] sm:$0xf]
      %v6078 = vld [vmem:[#allocation12 + $0x70] sm:$0xf]
      %v6079 = vld [vmem:[#allocation12 + $0x74] sm:$0xf]
      %v6080 = vld [vmem:[#allocation12 + $0x78] sm:$0xf]
      %v6081 = vld [vmem:[#allocation12 + $0x7c] sm:$0xf]
      %v6082 = vld [vmem:[#allocation12 + $0x80] sm:$0xf]
      %v6083 = vld [vmem:[#allocation12 + $0x84] sm:$0xf]
      %v6084 = vld [vmem:[#allocation12 + $0x88] sm:$0xf]
      %v6085 = vld [vmem:[#allocation12 + $0x8c] sm:$0xf]
      %v6086 = vld [vmem:[#allocation12 + $0x90] sm:$0xf]
      %v6087 = vld [vmem:[#allocation12 + $0x94] sm:$0xf]
      %v6088 = vld [vmem:[#allocation12 + $0x98] sm:$0xf]
      %v6089 = vld [vmem:[#allocation12 + $0x9c] sm:$0xf]
      %v6090 = vld [vmem:[#allocation12 + $0xa0] sm:$0xf]
      %v6091 = vld [vmem:[#allocation12 + $0xa4] sm:$0xf]
      %v6092 = vld [vmem:[#allocation12 + $0xa8] sm:$0xf]
      %v6093 = vld [vmem:[#allocation12 + $0xac] sm:$0xf]
      %v6094 = vld [vmem:[#allocation12 + $0xb0] sm:$0xf]
      %v6095 = vld [vmem:[#allocation12 + $0xb4] sm:$0xf]
      %v6096 = vld [vmem:[#allocation12 + $0xb8] sm:$0xf]
      %v6097 = vld [vmem:[#allocation12 + $0xbc] sm:$0xf]
      %v6098 = vld [vmem:[#allocation12 + $0xc0] sm:$0xf]
      %v6099 = vld [vmem:[#allocation12 + $0xc4] sm:$0xf]
      %v6100 = vld [vmem:[#allocation12 + $0xc8] sm:$0xf]
      %v6101 = vld [vmem:[#allocation12 + $0xcc] sm:$0xf]
      %v6102 = vld [vmem:[#allocation12 + $0xd0] sm:$0xf]
      %v6103 = vld [vmem:[#allocation12 + $0xd4] sm:$0xf]
      %v6104 = vld [vmem:[#allocation12 + $0xd8] sm:$0xf]
      %v6105 = vld [vmem:[#allocation12 + $0xdc] sm:$0xf]
      %v6106 = vld [vmem:[#allocation12 + $0xe0] sm:$0xf]
      %v6107 = vld [vmem:[#allocation12 + $0xe4] sm:$0xf]
      %v6108 = vld [vmem:[#allocation12 + $0xe8] sm:$0xf]
      %v6109 = vld [vmem:[#allocation12 + $0xec] sm:$0xf]
      %v6110 = vld [vmem:[#allocation12 + $0xf0] sm:$0xf]
      %v6111 = vld [vmem:[#allocation12 + $0xf4] sm:$0xf]
      %v6112 = vld [vmem:[#allocation12 + $0xf8] sm:$0xf]
      %v6113 = vld [vmem:[#allocation12 + $0xfc] sm:$0xf]
      %v6114 = vld [vmem:[#allocation12 + $0x100] sm:$0xf]
      %v6115 = vld [vmem:[#allocation12 + $0x104] sm:$0xf]
      %v6116 = vld [vmem:[#allocation12 + $0x108] sm:$0xf]
      %v6117 = vld [vmem:[#allocation12 + $0x10c] sm:$0xf]
      %v6118 = vld [vmem:[#allocation12 + $0x110] sm:$0xf]
      %v6119 = vld [vmem:[#allocation12 + $0x114] sm:$0xf]
      %v6120 = vld [vmem:[#allocation12 + $0x118] sm:$0xf]
      %v6121 = vld [vmem:[#allocation12 + $0x11c] sm:$0xf]
      %v6122 = vld [vmem:[#allocation12 + $0x120] sm:$0xf]
      %v6123 = vld [vmem:[#allocation12 + $0x124] sm:$0xf]
      %v6124 = vld [vmem:[#allocation12 + $0x128] sm:$0xf]
      %v6125 = vld [vmem:[#allocation12 + $0x12c] sm:$0xf]
      %v6126 = vld [vmem:[#allocation12 + $0x130] sm:$0xf]
      %v6127 = vld [vmem:[#allocation12 + $0x134] sm:$0xf]
      %v6128 = vld [vmem:[#allocation12 + $0x138] sm:$0xf]
      %v6129 = vld [vmem:[#allocation12 + $0x13c] sm:$0xf]
      %v6130 = vld [vmem:[#allocation12 + $0x140] sm:$0xf]
      %v6131 = vld [vmem:[#allocation12 + $0x144] sm:$0xf]
      %v6132 = vld [vmem:[#allocation12 + $0x148] sm:$0xf]
      %v6133 = vld [vmem:[#allocation12 + $0x14c] sm:$0xf]
      %v6134 = vld [vmem:[#allocation12 + $0x150] sm:$0xf]
      %v6135 = vld [vmem:[#allocation12 + $0x154] sm:$0xf]
      %v6136 = vld [vmem:[#allocation12 + $0x158] sm:$0xf]
      %v6137 = vld [vmem:[#allocation12 + $0x15c] sm:$0xf]
      %v6138 = vld [vmem:[#allocation12 + $0x160] sm:$0xf]
      %v6139 = vld [vmem:[#allocation12 + $0x164] sm:$0xf]
      %v6140 = vld [vmem:[#allocation12 + $0x168] sm:$0xf]
      %v6141 = vld [vmem:[#allocation12 + $0x16c] sm:$0xf]
      %v6142 = vld [vmem:[#allocation12 + $0x170] sm:$0xf]
      %v6143 = vld [vmem:[#allocation12 + $0x174] sm:$0xf]
      %v6144 = vld [vmem:[#allocation12 + $0x178] sm:$0xf]
      %v6145 = vld [vmem:[#allocation12 + $0x17c] sm:$0xf]
      %v6146 = vld [vmem:[#allocation12 + $0x180] sm:$0xf]
      %v6147 = vld [vmem:[#allocation12 + $0x184] sm:$0xf]
      %v6148 = vld [vmem:[#allocation12 + $0x188] sm:$0xf]
      %v6149 = vld [vmem:[#allocation12 + $0x18c] sm:$0xf]
      %v6150 = vld [vmem:[#allocation12 + $0x190] sm:$0xf]
      %v6151 = vld [vmem:[#allocation12 + $0x194] sm:$0xf]
      %v6152 = vld [vmem:[#allocation12 + $0x198] sm:$0xf]
      %v6153 = vld [vmem:[#allocation12 + $0x19c] sm:$0xf]
      %v6154 = vld [vmem:[#allocation12 + $0x1a0] sm:$0xf]
      %v6155 = vld [vmem:[#allocation12 + $0x1a4] sm:$0xf]
      %v6156 = vld [vmem:[#allocation12 + $0x1a8] sm:$0xf]
      %v6157 = vld [vmem:[#allocation12 + $0x1ac] sm:$0xf]
      %v6158 = vld [vmem:[#allocation12 + $0x1b0] sm:$0xf]
      %v6159 = vld [vmem:[#allocation12 + $0x1b4] sm:$0xf]
      %v6160 = vld [vmem:[#allocation12 + $0x1b8] sm:$0xf]
      %v6161 = vld [vmem:[#allocation12 + $0x1bc] sm:$0xf]
      %v6162 = vld [vmem:[#allocation12 + $0x1c0] sm:$0xf]
      %v6163 = vld [vmem:[#allocation12 + $0x1c4] sm:$0xf]
      %v6164 = vld [vmem:[#allocation12 + $0x1c8] sm:$0xf]
      %v6165 = vld [vmem:[#allocation12 + $0x1cc] sm:$0xf]
      %v6166 = vld [vmem:[#allocation12 + $0x1d0] sm:$0xf]
      %v6167 = vld [vmem:[#allocation12 + $0x1d4] sm:$0xf]
      %v6168 = vld [vmem:[#allocation12 + $0x1d8] sm:$0xf]
      %v6169 = vld [vmem:[#allocation12 + $0x1dc] sm:$0xf]
      %v6170 = vld [vmem:[#allocation12 + $0x1e0] sm:$0xf]
      %v6171 = vld [vmem:[#allocation12 + $0x1e4] sm:$0xf]
      %v6172 = vld [vmem:[#allocation12 + $0x1e8] sm:$0xf]
      %v6173 = vld [vmem:[#allocation12 + $0x1ec] sm:$0xf]
      %v6174 = vld [vmem:[#allocation12 + $0x1f0] sm:$0xf]
      %v6175 = vld [vmem:[#allocation12 + $0x1f4] sm:$0xf]
      %v6176 = vld [vmem:[#allocation12 + $0x1f8] sm:$0xf]
      %v6177 = vld [vmem:[#allocation12 + $0x1fc] sm:$0xf]
      %v6178 = vld [vmem:[#allocation14] sm:$0x1]
      %v6180 = vlaneseq
      %v6181 = vshrl.u32 %v6180, 7
      %v6182 = vsub.s32 0, %v6181
      %v6183 = vrot.slane %v6178, %v6182
      %v6313 = vunpack.c.l.b16 %v6050
      %v6314 = vunpack.c.l.b16 %v6051
      %v6315 = vunpack.c.l.b16 %v6052
      %v6316 = vunpack.c.l.b16 %v6053
      %v6317 = vunpack.c.l.b16 %v6054
      %v6318 = vunpack.c.l.b16 %v6055
      %v6319 = vunpack.c.l.b16 %v6056
      %v6320 = vunpack.c.l.b16 %v6057
      %v6321 = vunpack.c.l.b16 %v6058
      %v6322 = vunpack.c.l.b16 %v6059
      %v6323 = vunpack.c.l.b16 %v6060
      %v6324 = vunpack.c.l.b16 %v6061
      %v6325 = vunpack.c.l.b16 %v6062
      %v6326 = vunpack.c.l.b16 %v6063
      %v6327 = vunpack.c.l.b16 %v6064
      %v6328 = vunpack.c.l.b16 %v6065
      %v6329 = vunpack.c.l.b16 %v6066
      %v6330 = vunpack.c.l.b16 %v6067
      %v6331 = vunpack.c.l.b16 %v6068
      %v6332 = vunpack.c.l.b16 %v6069
      %v6333 = vunpack.c.l.b16 %v6070
      %v6334 = vunpack.c.l.b16 %v6071
      %v6335 = vunpack.c.l.b16 %v6072
      %v6336 = vunpack.c.l.b16 %v6073
      %v6337 = vunpack.c.l.b16 %v6074
      %v6338 = vunpack.c.l.b16 %v6075
      %v6339 = vunpack.c.l.b16 %v6076
      %v6340 = vunpack.c.l.b16 %v6077
      %v6341 = vunpack.c.l.b16 %v6078
      %v6342 = vunpack.c.l.b16 %v6079
      %v6343 = vunpack.c.l.b16 %v6080
      %v6344 = vunpack.c.l.b16 %v6081
      %v6345 = vunpack.c.l.b16 %v6082
      %v6346 = vunpack.c.l.b16 %v6083
      %v6347 = vunpack.c.l.b16 %v6084
      %v6348 = vunpack.c.l.b16 %v6085
      %v6349 = vunpack.c.l.b16 %v6086
      %v6350 = vunpack.c.l.b16 %v6087
      %v6351 = vunpack.c.l.b16 %v6088
      %v6352 = vunpack.c.l.b16 %v6089
      %v6353 = vunpack.c.l.b16 %v6090
      %v6354 = vunpack.c.l.b16 %v6091
      %v6355 = vunpack.c.l.b16 %v6092
      %v6356 = vunpack.c.l.b16 %v6093
      %v6357 = vunpack.c.l.b16 %v6094
      %v6358 = vunpack.c.l.b16 %v6095
      %v6359 = vunpack.c.l.b16 %v6096
      %v6360 = vunpack.c.l.b16 %v6097
      %v6361 = vunpack.c.l.b16 %v6098
      %v6362 = vunpack.c.l.b16 %v6099
      %v6363 = vunpack.c.l.b16 %v6100
      %v6364 = vunpack.c.l.b16 %v6101
      %v6365 = vunpack.c.l.b16 %v6102
      %v6366 = vunpack.c.l.b16 %v6103
      %v6367 = vunpack.c.l.b16 %v6104
      %v6368 = vunpack.c.l.b16 %v6105
      %v6369 = vunpack.c.l.b16 %v6106
      %v6370 = vunpack.c.l.b16 %v6107
      %v6371 = vunpack.c.l.b16 %v6108
      %v6372 = vunpack.c.l.b16 %v6109
      %v6373 = vunpack.c.l.b16 %v6110
      %v6374 = vunpack.c.l.b16 %v6111
      %v6375 = vunpack.c.l.b16 %v6112
      %v6376 = vunpack.c.l.b16 %v6113
      %v6377 = vunpack.c.l.b16 %v6114
      %v6378 = vunpack.c.l.b16 %v6115
      %v6379 = vunpack.c.l.b16 %v6116
      %v6380 = vunpack.c.l.b16 %v6117
      %v6381 = vunpack.c.l.b16 %v6118
      %v6382 = vunpack.c.l.b16 %v6119
      %v6383 = vunpack.c.l.b16 %v6120
      %v6384 = vunpack.c.l.b16 %v6121
      %v6385 = vunpack.c.l.b16 %v6122
      %v6386 = vunpack.c.l.b16 %v6123
      %v6387 = vunpack.c.l.b16 %v6124
      %v6388 = vunpack.c.l.b16 %v6125
      %v6389 = vunpack.c.l.b16 %v6126
      %v6390 = vunpack.c.l.b16 %v6127
      %v6391 = vunpack.c.l.b16 %v6128
      %v6392 = vunpack.c.l.b16 %v6129
      %v6393 = vunpack.c.l.b16 %v6130
      %v6394 = vunpack.c.l.b16 %v6131
      %v6395 = vunpack.c.l.b16 %v6132
      %v6396 = vunpack.c.l.b16 %v6133
      %v6397 = vunpack.c.l.b16 %v6134
      %v6398 = vunpack.c.l.b16 %v6135
      %v6399 = vunpack.c.l.b16 %v6136
      %v6400 = vunpack.c.l.b16 %v6137
      %v6401 = vunpack.c.l.b16 %v6138
      %v6402 = vunpack.c.l.b16 %v6139
      %v6403 = vunpack.c.l.b16 %v6140
      %v6404 = vunpack.c.l.b16 %v6141
      %v6405 = vunpack.c.l.b16 %v6142
      %v6406 = vunpack.c.l.b16 %v6143
      %v6407 = vunpack.c.l.b16 %v6144
      %v6408 = vunpack.c.l.b16 %v6145
      %v6409 = vunpack.c.l.b16 %v6146
      %v6410 = vunpack.c.l.b16 %v6147
      %v6411 = vunpack.c.l.b16 %v6148
      %v6412 = vunpack.c.l.b16 %v6149
      %v6413 = vunpack.c.l.b16 %v6150
      %v6414 = vunpack.c.l.b16 %v6151
      %v6415 = vunpack.c.l.b16 %v6152
      %v6416 = vunpack.c.l.b16 %v6153
      %v6417 = vunpack.c.l.b16 %v6154
      %v6418 = vunpack.c.l.b16 %v6155
      %v6419 = vunpack.c.l.b16 %v6156
      %v6420 = vunpack.c.l.b16 %v6157
      %v6421 = vunpack.c.l.b16 %v6158
      %v6422 = vunpack.c.l.b16 %v6159
      %v6423 = vunpack.c.l.b16 %v6160
      %v6424 = vunpack.c.l.b16 %v6161
      %v6425 = vunpack.c.l.b16 %v6162
      %v6426 = vunpack.c.l.b16 %v6163
      %v6427 = vunpack.c.l.b16 %v6164
      %v6428 = vunpack.c.l.b16 %v6165
      %v6429 = vunpack.c.l.b16 %v6166
      %v6430 = vunpack.c.l.b16 %v6167
      %v6431 = vunpack.c.l.b16 %v6168
      %v6432 = vunpack.c.l.b16 %v6169
      %v6433 = vunpack.c.l.b16 %v6170
      %v6434 = vunpack.c.l.b16 %v6171
      %v6435 = vunpack.c.l.b16 %v6172
      %v6436 = vunpack.c.l.b16 %v6173
      %v6437 = vunpack.c.l.b16 %v6174
      %v6438 = vunpack.c.l.b16 %v6175
      %v6439 = vunpack.c.l.b16 %v6176
      %v6440 = vunpack.c.l.b16 %v6177
      %v6441 = vpack.c.b16 %v6314, %v6313
      %v6442 = vpack.c.b16 %v6316, %v6315
      %v6443 = vpack.c.b16 %v6318, %v6317
      %v6444 = vpack.c.b16 %v6320, %v6319
      %v6445 = vpack.c.b16 %v6322, %v6321
      %v6446 = vpack.c.b16 %v6324, %v6323
      %v6447 = vpack.c.b16 %v6326, %v6325
      %v6448 = vpack.c.b16 %v6328, %v6327
      %v6449 = vpack.c.b16 %v6330, %v6329
      %v6450 = vpack.c.b16 %v6332, %v6331
      %v6451 = vpack.c.b16 %v6334, %v6333
      %v6452 = vpack.c.b16 %v6336, %v6335
      %v6453 = vpack.c.b16 %v6338, %v6337
      %v6454 = vpack.c.b16 %v6340, %v6339
      %v6455 = vpack.c.b16 %v6342, %v6341
      %v6456 = vpack.c.b16 %v6344, %v6343
      %v6457 = vpack.c.b16 %v6346, %v6345
      %v6458 = vpack.c.b16 %v6348, %v6347
      %v6459 = vpack.c.b16 %v6350, %v6349
      %v6460 = vpack.c.b16 %v6352, %v6351
      %v6461 = vpack.c.b16 %v6354, %v6353
      %v6462 = vpack.c.b16 %v6356, %v6355
      %v6463 = vpack.c.b16 %v6358, %v6357
      %v6464 = vpack.c.b16 %v6360, %v6359
      %v6465 = vpack.c.b16 %v6362, %v6361
      %v6466 = vpack.c.b16 %v6364, %v6363
      %v6467 = vpack.c.b16 %v6366, %v6365
      %v6468 = vpack.c.b16 %v6368, %v6367
      %v6469 = vpack.c.b16 %v6370, %v6369
      %v6470 = vpack.c.b16 %v6372, %v6371
      %v6471 = vpack.c.b16 %v6374, %v6373
      %v6472 = vpack.c.b16 %v6376, %v6375
      %v6473 = vpack.c.b16 %v6378, %v6377
      %v6474 = vpack.c.b16 %v6380, %v6379
      %v6475 = vpack.c.b16 %v6382, %v6381
      %v6476 = vpack.c.b16 %v6384, %v6383
      %v6477 = vpack.c.b16 %v6386, %v6385
      %v6478 = vpack.c.b16 %v6388, %v6387
      %v6479 = vpack.c.b16 %v6390, %v6389
      %v6480 = vpack.c.b16 %v6392, %v6391
      %v6481 = vpack.c.b16 %v6394, %v6393
      %v6482 = vpack.c.b16 %v6396, %v6395
      %v6483 = vpack.c.b16 %v6398, %v6397
      %v6484 = vpack.c.b16 %v6400, %v6399
      %v6485 = vpack.c.b16 %v6402, %v6401
      %v6486 = vpack.c.b16 %v6404, %v6403
      %v6487 = vpack.c.b16 %v6406, %v6405
      %v6488 = vpack.c.b16 %v6408, %v6407
      %v6489 = vpack.c.b16 %v6410, %v6409
      %v6490 = vpack.c.b16 %v6412, %v6411
      %v6491 = vpack.c.b16 %v6414, %v6413
      %v6492 = vpack.c.b16 %v6416, %v6415
      %v6493 = vpack.c.b16 %v6418, %v6417
      %v6494 = vpack.c.b16 %v6420, %v6419
      %v6495 = vpack.c.b16 %v6422, %v6421
      %v6496 = vpack.c.b16 %v6424, %v6423
      %v6497 = vpack.c.b16 %v6426, %v6425
      %v6498 = vpack.c.b16 %v6428, %v6427
      %v6499 = vpack.c.b16 %v6430, %v6429
      %v6500 = vpack.c.b16 %v6432, %v6431
      %v6501 = vpack.c.b16 %v6434, %v6433
      %v6502 = vpack.c.b16 %v6436, %v6435
      %v6503 = vpack.c.b16 %v6438, %v6437
      %v6504 = vpack.c.b16 %v6440, %v6439
      %6569 = vmatprep.subr.bf16.mxu0 0
      %6570 = vmatpush1.bf16.msra.mxu0 %v6441
      %6571 = vmatprep.subr.bf16.mxu0 0
      %6572 = vmatpush1.bf16.msra.mxu0 %v6442
      %6573 = vmatprep.subr.bf16.mxu0 0
      %6574 = vmatpush1.bf16.msra.mxu0 %v6443
      %6575 = vmatprep.subr.bf16.mxu0 0
      %6576 = vmatpush1.bf16.msra.mxu0 %v6444
      %6577 = vmatprep.subr.bf16.mxu0 0
      %6578 = vmatpush1.bf16.msra.mxu0 %v6445
      %6579 = vmatprep.subr.bf16.mxu0 0
      %6580 = vmatpush1.bf16.msra.mxu0 %v6446
      %6581 = vmatprep.subr.bf16.mxu0 0
      %6582 = vmatpush1.bf16.msra.mxu0 %v6447
      %6583 = vmatprep.subr.bf16.mxu0 0
      %6584 = vmatpush1.bf16.msra.mxu0 %v6448
      %6585 = vmatprep.subr.bf16.mxu0 0
      %6586 = vmatpush1.bf16.msra.mxu0 %v6449
      %6587 = vmatprep.subr.bf16.mxu0 0
      %6588 = vmatpush1.bf16.msra.mxu0 %v6450
      %6589 = vmatprep.subr.bf16.mxu0 0
      %6590 = vmatpush1.bf16.msra.mxu0 %v6451
      %6591 = vmatprep.subr.bf16.mxu0 0
      %6592 = vmatpush1.bf16.msra.mxu0 %v6452
      %6593 = vmatprep.subr.bf16.mxu0 0
      %6594 = vmatpush1.bf16.msra.mxu0 %v6453
      %6595 = vmatprep.subr.bf16.mxu0 0
      %6596 = vmatpush1.bf16.msra.mxu0 %v6454
      %6597 = vmatprep.subr.bf16.mxu0 0
      %6598 = vmatpush1.bf16.msra.mxu0 %v6455
      %6599 = vmatprep.subr.bf16.mxu0 0
      %6600 = vmatpush1.bf16.msra.mxu0 %v6456
      %6601 = vmatprep.mubr.bf16.mxu0 %v6043
      %6602 = vmatmul.mubr.bf16.gmra.mrb[0].mxu0 %v6042
      %v6603 = vpop.f32.mrb[0].mxu0
      %v6604 = vadd.f32 %v6183, %v6603
      %v6605 = vpop.f32.mrb[0].mxu0
      %v6606 = vpop.f32.mrb[0].mxu0
      %v6607 = vadd.f32 %v6183, %v6606
      %v6608 = vpop.f32.mrb[0].mxu0
      %6609 = vdwg.mxu0
      %6610 = vmatprep.subr.bf16.mxu0 0
      %6611 = vmatpush1.bf16.msra.mxu0 %v6457
      %6612 = vmatprep.subr.bf16.mxu0 0
      %6613 = vmatpush1.bf16.msra.mxu0 %v6458
      %6614 = vmatprep.subr.bf16.mxu0 0
      %6615 = vmatpush1.bf16.msra.mxu0 %v6459
      %6616 = vmatprep.subr.bf16.mxu0 0
      %6617 = vmatpush1.bf16.msra.mxu0 %v6460
      %6618 = vmatprep.subr.bf16.mxu0 0
      %6619 = vmatpush1.bf16.msra.mxu0 %v6461
      %6620 = vmatprep.subr.bf16.mxu0 0
      %6621 = vmatpush1.bf16.msra.mxu0 %v6462
      %6622 = vmatprep.subr.bf16.mxu0 0
      %6623 = vmatpush1.bf16.msra.mxu0 %v6463
      %6624 = vmatprep.subr.bf16.mxu0 0
      %6625 = vmatpush1.bf16.msra.mxu0 %v6464
      %6626 = vmatprep.subr.bf16.mxu0 0
      %6627 = vmatpush1.bf16.msra.mxu0 %v6465
      %6628 = vmatprep.subr.bf16.mxu0 0
      %6629 = vmatpush1.bf16.msra.mxu0 %v6466
      %6630 = vmatprep.subr.bf16.mxu0 0
      %6631 = vmatpush1.bf16.msra.mxu0 %v6467
      %6632 = vmatprep.subr.bf16.mxu0 0
      %6633 = vmatpush1.bf16.msra.mxu0 %v6468
      %6634 = vmatprep.subr.bf16.mxu0 0
      %6635 = vmatpush1.bf16.msra.mxu0 %v6469
      %6636 = vmatprep.subr.bf16.mxu0 0
      %6637 = vmatpush1.bf16.msra.mxu0 %v6470
      %6638 = vmatprep.subr.bf16.mxu0 0
      %6639 = vmatpush1.bf16.msra.mxu0 %v6471
      %6640 = vmatprep.subr.bf16.mxu0 0
      %6641 = vmatpush1.bf16.msra.mxu0 %v6472
      %6642 = vmatprep.mubr.bf16.mxu0 %v6045
      %6643 = vmatmul.mubr.bf16.gmra.mrb[0].mxu0 %v6044
      %v6644 = vpop.f32.mrb[0].mxu0
      %v6645 = vadd.f32 %v6604, %v6644
      %v6646 = vpop.f32.mrb[0].mxu0
      %v6647 = vpop.f32.mrb[0].mxu0
      %v6648 = vadd.f32 %v6607, %v6647
      %v6649 = vpop.f32.mrb[0].mxu0
      %6650 = vdwg.mxu0
      %6651 = vmatprep.subr.bf16.mxu0 0
      %6652 = vmatpush1.bf16.msra.mxu0 %v6473
      %6653 = vmatprep.subr.bf16.mxu0 0
      %6654 = vmatpush1.bf16.msra.mxu0 %v6474
      %6655 = vmatprep.subr.bf16.mxu0 0
      %6656 = vmatpush1.bf16.msra.mxu0 %v6475
      %6657 = vmatprep.subr.bf16.mxu0 0
      %6658 = vmatpush1.bf16.msra.mxu0 %v6476
      %6659 = vmatprep.subr.bf16.mxu0 0
      %6660 = vmatpush1.bf16.msra.mxu0 %v6477
      %6661 = vmatprep.subr.bf16.mxu0 0
      %6662 = vmatpush1.bf16.msra.mxu0 %v6478
      %6663 = vmatprep.subr.bf16.mxu0 0
      %6664 = vmatpush1.bf16.msra.mxu0 %v6479
      %6665 = vmatprep.subr.bf16.mxu0 0
      %6666 = vmatpush1.bf16.msra.mxu0 %v6480
      %6667 = vmatprep.subr.bf16.mxu0 0
      %6668 = vmatpush1.bf16.msra.mxu0 %v6481
      %6669 = vmatprep.subr.bf16.mxu0 0
      %6670 = vmatpush1.bf16.msra.mxu0 %v6482
      %6671 = vmatprep.subr.bf16.mxu0 0
      %6672 = vmatpush1.bf16.msra.mxu0 %v6483
      %6673 = vmatprep.subr.bf16.mxu0 0
      %6674 = vmatpush1.bf16.msra.mxu0 %v6484
      %6675 = vmatprep.subr.bf16.mxu0 0
      %6676 = vmatpush1.bf16.msra.mxu0 %v6485
      %6677 = vmatprep.subr.bf16.mxu0 0
      %6678 = vmatpush1.bf16.msra.mxu0 %v6486
      %6679 = vmatprep.subr.bf16.mxu0 0
      %6680 = vmatpush1.bf16.msra.mxu0 %v6487
      %6681 = vmatprep.subr.bf16.mxu0 0
      %6682 = vmatpush1.bf16.msra.mxu0 %v6488
      %6683 = vmatprep.mubr.bf16.mxu0 %v6047
      %6684 = vmatmul.mubr.bf16.gmra.mrb[0].mxu0 %v6046
      %v6685 = vpop.f32.mrb[0].mxu0
      %v6686 = vadd.f32 %v6645, %v6685
      %v6687 = vpop.f32.mrb[0].mxu0
      %v6688 = vpop.f32.mrb[0].mxu0
      %v6689 = vadd.f32 %v6648, %v6688
      %v6690 = vpop.f32.mrb[0].mxu0
      %6691 = vdwg.mxu0
      %6692 = vmatprep.subr.bf16.mxu0 0
      %6693 = vmatpush1.bf16.msra.mxu0 %v6489
      %6694 = vmatprep.subr.bf16.mxu0 0
      %6695 = vmatpush1.bf16.msra.mxu0 %v6490
      %6696 = vmatprep.subr.bf16.mxu0 0
      %6697 = vmatpush1.bf16.msra.mxu0 %v6491
      %6698 = vmatprep.subr.bf16.mxu0 0
      %6699 = vmatpush1.bf16.msra.mxu0 %v6492
      %6700 = vmatprep.subr.bf16.mxu0 0
      %6701 = vmatpush1.bf16.msra.mxu0 %v6493
      %6702 = vmatprep.subr.bf16.mxu0 0
      %6703 = vmatpush1.bf16.msra.mxu0 %v6494
      %6704 = vmatprep.subr.bf16.mxu0 0
      %6705 = vmatpush1.bf16.msra.mxu0 %v6495
      %6706 = vmatprep.subr.bf16.mxu0 0
      %6707 = vmatpush1.bf16.msra.mxu0 %v6496
      %6708 = vmatprep.subr.bf16.mxu0 0
      %6709 = vmatpush1.bf16.msra.mxu0 %v6497
      %6710 = vmatprep.subr.bf16.mxu0 0
      %6711 = vmatpush1.bf16.msra.mxu0 %v6498
      %6712 = vmatprep.subr.bf16.mxu0 0
      %6713 = vmatpush1.bf16.msra.mxu0 %v6499
      %6714 = vmatprep.subr.bf16.mxu0 0
      %6715 = vmatpush1.bf16.msra.mxu0 %v6500
      %6716 = vmatprep.subr.bf16.mxu0 0
      %6717 = vmatpush1.bf16.msra.mxu0 %v6501
      %6718 = vmatprep.subr.bf16.mxu0 0
      %6719 = vmatpush1.bf16.msra.mxu0 %v6502
      %6720 = vmatprep.subr.bf16.mxu0 0
      %6721 = vmatpush1.bf16.msra.mxu0 %v6503
      %6722 = vmatprep.subr.bf16.mxu0 0
      %6723 = vmatpush1.bf16.msra.mxu0 %v6504
      %6724 = vmatprep.mubr.bf16.mxu0 %v6049
      %6725 = vmatmul.mubr.bf16.gmra.mrb[0].mxu0 %v6048
      %v6726 = vpop.f32.mrb[0].mxu0
      %v6727 = vadd.f32 %v6686, %v6726
      %v6728 = vpop.f32.mrb[0].mxu0
      %v6729 = vpop.f32.mrb[0].mxu0
      %v6730 = vadd.f32 %v6689, %v6729
      %v6731 = vpop.f32.mrb[0].mxu0
      %6732 = vdwg.mxu0
      %v6733 = vtanh.pop %v6727
      %v6734 = vtanh.pop %v6730
      %v6735 = vpack.c.bf16 %v6734, %v6733
      %v6736 = vld [vmem:[#allocation15] sm:$0xf]
      %v6737 = vld [vmem:[#allocation15 + $0x4] sm:$0xf]
      %v6738 = vld [vmem:[#allocation15 + $0x8] sm:$0xf]
      %v6739 = vld [vmem:[#allocation15 + $0xc] sm:$0xf]
      %v6740 = vld [vmem:[#allocation15 + $0x10] sm:$0xf]
      %v6741 = vld [vmem:[#allocation15 + $0x14] sm:$0xf]
      %v6742 = vld [vmem:[#allocation15 + $0x18] sm:$0xf]
      %v6743 = vld [vmem:[#allocation15 + $0x1c] sm:$0xf]
      %v6744 = vld [vmem:[#allocation15 + $0x20] sm:$0xf]
      %v6745 = vld [vmem:[#allocation15 + $0x24] sm:$0xf]
      %v6746 = vld [vmem:[#allocation15 + $0x28] sm:$0xf]
      %v6747 = vld [vmem:[#allocation15 + $0x2c] sm:$0xf]
      %v6748 = vld [vmem:[#allocation15 + $0x30] sm:$0xf]
      %v6749 = vld [vmem:[#allocation15 + $0x34] sm:$0xf]
      %v6750 = vld [vmem:[#allocation15 + $0x38] sm:$0xf]
      %v6751 = vld [vmem:[#allocation15 + $0x3c] sm:$0xf]
      %v6752 = vld [vmem:[#allocation17] sm:$0x1]
      %v6754 = vlaneseq
      %v6755 = vshrl.u32 %v6754, 7
      %v6756 = vsub.s32 0, %v6755
      %v6757 = vrot.slane %v6752, %v6756
      %v6775 = vunpack.c.l.b16 %v6736
      %v6776 = vunpack.c.l.b16 %v6737
      %v6777 = vunpack.c.l.b16 %v6738
      %v6778 = vunpack.c.l.b16 %v6739
      %v6779 = vunpack.c.l.b16 %v6740
      %v6780 = vunpack.c.l.b16 %v6741
      %v6781 = vunpack.c.l.b16 %v6742
      %v6782 = vunpack.c.l.b16 %v6743
      %v6783 = vunpack.c.l.b16 %v6744
      %v6784 = vunpack.c.l.b16 %v6745
      %v6785 = vunpack.c.l.b16 %v6746
      %v6786 = vunpack.c.l.b16 %v6747
      %v6787 = vunpack.c.l.b16 %v6748
      %v6788 = vunpack.c.l.b16 %v6749
      %v6789 = vunpack.c.l.b16 %v6750
      %v6790 = vunpack.c.l.b16 %v6751
      %v6791 = vpack.c.b16 %v6776, %v6775
      %v6792 = vpack.c.b16 %v6778, %v6777
      %v6793 = vpack.c.b16 %v6780, %v6779
      %v6794 = vpack.c.b16 %v6782, %v6781
      %v6795 = vpack.c.b16 %v6784, %v6783
      %v6796 = vpack.c.b16 %v6786, %v6785
      %v6797 = vpack.c.b16 %v6788, %v6787
      %v6798 = vpack.c.b16 %v6790, %v6789
      %6807 = vmatprep.subr.bf16.mxu0 0
      %6808 = vmatpush1.bf16.msra.mxu0 %v6791
      %6809 = vmatprep.subr.bf16.mxu0 0
      %6810 = vmatpush1.bf16.msra.mxu0 %v6792
      %6811 = vmatprep.subr.bf16.mxu0 0
      %6812 = vmatpush1.bf16.msra.mxu0 %v6793
      %6813 = vmatprep.subr.bf16.mxu0 0
      %6814 = vmatpush1.bf16.msra.mxu0 %v6794
      %6815 = vmatprep.subr.bf16.mxu0 0
      %6816 = vmatpush1.bf16.msra.mxu0 %v6795
      %6817 = vmatprep.subr.bf16.mxu0 0
      %6818 = vmatpush1.bf16.msra.mxu0 %v6796
      %6819 = vmatprep.subr.bf16.mxu0 0
      %6820 = vmatpush1.bf16.msra.mxu0 %v6797
      %6821 = vmatprep.subr.bf16.mxu0 0
      %6822 = vmatpush1.bf16.msra.mxu0 %v6798
      %6823 = vmatprep.subr.bf16.mxu0 0
      %6824 = vmatpush1.bf16.msra.mxu0 0
      %6825 = vmatprep.subr.bf16.mxu0 0
      %6826 = vmatpush1.bf16.msra.mxu0 0
      %6827 = vmatprep.subr.bf16.mxu0 0
      %6828 = vmatpush1.bf16.msra.mxu0 0
      %6829 = vmatprep.subr.bf16.mxu0 0
      %6830 = vmatpush1.bf16.msra.mxu0 0
      %6831 = vmatprep.subr.bf16.mxu0 0
      %6832 = vmatpush1.bf16.msra.mxu0 0
      %6833 = vmatprep.subr.bf16.mxu0 0
      %6834 = vmatpush1.bf16.msra.mxu0 0
      %6835 = vmatprep.subr.bf16.mxu0 0
      %6836 = vmatpush1.bf16.msra.mxu0 0
      %6837 = vmatprep.subr.bf16.mxu0 0
      %6838 = vmatpush1.bf16.msra.mxu0 0
      %6839 = vmatprep.mubr.bf16.mxu0 0
      %6840 = vmatmul.mubr.bf16.gmra.mrb[0].mxu0 %v6735
      %v6841 = vpop.f32.mrb[0].mxu0
      %v6842 = vadd.f32 %v6757, %v6841
      %v6843 = vpop.f32.mrb[0].mxu0
      %v6844 = vpop.f32.mrb[0].mxu0
      %v6845 = vadd.f32 %v6757, %v6844
      %v6846 = vpop.f32.mrb[0].mxu0
      %6847 = vdwg.mxu0
      %v6848 = vtanh.pop %v6842
      %v6849 = vtanh.pop %v6845
      %6850 = vst [vmem:[#allocation18] sm:$0xff] %v6733
      %6851 = vst [vmem:[#allocation18 + $0x8] sm:$0xff] %v6734
      %6852 = vst [vmem:[#allocation19] sm:$0xff] %v6848
      %6853 = vst [vmem:[#allocation19 + $0x8] sm:$0xff] %v6849
    $region81: #{tpu_custom_call.1} parent=1 // pred_fallthru
      _
    // Predicated region
    $region82: #{tpu_custom_call.1} parent=1 // pred_check
      _
    $region83: #{tpu_custom_call.1} parent=1 // pred_check_branch
      %6855 = sbr.rel (0) target = $region85
    $region84: #{tpu_custom_call.1} parent=1 // pred_region
      %s6857 = ssub.s32 256, 256
      %6858 = vsyncadd [#allocation5], %s6857
      %s6859 = sshll.u32 [#allocation18], 4
      %s6860 = int_to_ptr.vmem [resolvable:$true] %s6859
      %6865 = dma.vmem_to_hbm [thread:$0]  %s6860, 256, %s9, [#allocation5], 128, 128, 8
    $region85: #{tpu_custom_call.1} parent=1 // pred_fallthru
      _
    // Predicated region
    $region86: #{tpu_custom_call.1} parent=1 // pred_check
      _
    $region87: #{tpu_custom_call.1} parent=1 // pred_check_branch
      %6867 = sbr.rel (0) target = $region89
    $region88: #{tpu_custom_call.1} parent=1 // pred_region
      %s6869 = ssub.s32 256, 256
      %6870 = vsyncadd [#allocation20], %s6869
      %s6871 = sshll.u32 [#allocation19], 4
      %s6872 = int_to_ptr.vmem [resolvable:$true] %s6871
      %6877 = dma.vmem_to_hbm [thread:$0]  %s6872, 256, %s10, [#allocation20], 128, 128, 8
    $region89: #{tpu_custom_call.1} parent=1 // pred_fallthru
      _
    // Predicated region
    $region90: #{tpu_custom_call.1} parent=1 // pred_check
      _
    $region91: #{tpu_custom_call.1} parent=1 // pred_check_branch
      %6879 = sbr.rel (0) target = $region93
    $region92: #{tpu_custom_call.1} parent=1 // pred_region
      %6880 = dma.done [#allocation5], 256
    $region93: #{tpu_custom_call.1} parent=1 // pred_fallthru
      _
    // Predicated region
    $region94: #{tpu_custom_call.1} parent=1 // pred_check
      _
    $region95: #{tpu_custom_call.1} parent=1 // pred_check_branch
      %6882 = sbr.rel (0) target = $region97
    $region96: #{tpu_custom_call.1} parent=1 // pred_region
      %6883 = dma.done [#allocation20], 256
    $region97: #{tpu_custom_call.1} parent=1 // pred_fallthru
      _
    %6884 = vsyncpa [#allocation4], 1
    %6885 = vsyncpa [#allocation7], 1
    %6886 = vsyncpa [#allocation10], 1
    %6887 = vsyncpa [#allocation13], 1
    %6888 = vsyncpa [#allocation16], 1
    %6889 = vsyncpa [#allocation5], 1
    %6890 = vsyncpa [#allocation20], 1

</llo_original>
